<compile_context>
chip_gen: v7x
topology: tpu7x:2x2x1
jax: 0.10.0
libtpu: 0.0.40
codegen_flags: <defaults>
</compile_context>

<pallas_src>
import jax
import jax.numpy as jnp
from jax import lax
from jax.experimental import pallas as pl
from jax.experimental.pallas import tpu as pltpu


def _layer2_kernel(x_ref, wv1_ref, s1_ref, b1_ref, wv2_ref, s2_ref, b2_ref,
                   o_ref, scr):
    # Block shapes:
    #   x_ref   : (NB, H, WC)          fused-lane input (conv1 input + skip)
    #   wv*_ref : (3*(4C-1), H, WC)    per-(ky, lane-shift) weight vectors,
    #                                  edge-aware, pre-broadcast over H
    #   s*/b*   : (H, WC)              folded BN scale / bias, pre-broadcast
    #   o_ref   : (NB, H, WC)
    #   scr     : (H+2, WC)            lane-aligned scratch, zero rows 0, H+1
    NB, H, WC = x_ref.shape
    NSH = wv1_ref.shape[0] // 3        # = 4*C - 1 lane shifts
    HALF = (NSH - 1) // 2              # = 2*C - 1

    # Zero only the two ky-halo rows, once per grid step (interior rows are
    # fully overwritten below).  Unconditional on purpose: v7x megacore gives
    # each core its own scratch instance.
    zrow = jnp.zeros((1, WC), jnp.float32)
    scr[0:1, :] = zrow
    scr[H + 1:H + 2, :] = zrow

    s1 = s1_ref[...]
    b1 = b1_ref[...]
    s2 = s2_ref[...]
    b2 = b2_ref[...]

    def conv3x3(wv_ref):
        # 3x3 "SAME" conv as VPU shift-and-FMA over the fused W*C lane axis.
        # Lane offset d = (kx-1)*C + ci - co; both the circular wrap of the
        # roll and the W image edges are zeroed by the edge-aware weights.
        acc = jnp.zeros((H, WC), jnp.float32)
        for ky in range(3):
            rows = scr[pl.ds(ky, H), :]                    # (H, WC)
            for j in range(NSH):
                d = j - HALF                               # static lane offset
                shift = (-d) % WC                          # non-negative
                shifted = rows if shift == 0 else pltpu.roll(rows, shift, axis=1)
                acc = acc + shifted * wv_ref[ky * NSH + j]
        return acc

    # Short unrolled loop over the images of this block (amortizes the
    # ~0.35 us per-grid-step overhead; NB is a small compile-time constant).
    for i in range(NB):
        x = x_ref[i]                                       # (H, WC)

        # ---- conv1 -> folded BN -> LeakyReLU(0.01) ----
        scr[pl.ds(1, H), :] = x
        y = conv3x3(wv1_ref)
        y = y * s1 + b1
        y = jnp.where(y > 0, y, 0.01 * y)

        # ---- conv2 -> folded BN -> residual add ----
        scr[pl.ds(1, H), :] = y
        z = conv3x3(wv2_ref)
        o_ref[i] = z * s2 + b2 + x


def _build_shift_weights(w_oihw, H, W):
    """OIHW 3x3 conv weight -> per-(ky, lane-shift) vectors for the fused layout.

    Returns wv of shape (3*(4C-1), H, W*C), pre-broadcast over H, with
      wv[ky*(4C-1)+j, :, l] = w[o, q mod C, ky, q//C + 1]
    where o = l % C, w_col = l // C, q = (j - (2C-1)) + o, and zero whenever
    q//C is outside {-1,0,1} (no such kernel tap) or the tap would read across
    the left/right image edge.  This folds both the "SAME" W-edge padding and
    the circular wrap of pltpu.roll into the weights, so
      out[h, l] = sum_{ky, j} roll(in, -(j-(2C-1)))[h+ky-1, l] * wv[ky, j, h, l]
    is exactly the padded 3x3 convolution.
    """
    C = w_oihw.shape[0]
    WC = W * C
    NSH = 4 * C - 1
    d = jnp.arange(NSH) - (2 * C - 1)                 # lane offsets, (NSH,)
    l = jnp.arange(WC)
    o = l % C                                         # output channel per lane
    wcol = l // C                                     # pixel column per lane
    q = d[:, None] + o[None, :]                       # (NSH, WC)
    kxm1 = jnp.floor_divide(q, C)                     # kx - 1
    ci = jnp.mod(q, C)                                # input channel
    valid = ((kxm1 >= -1) & (kxm1 <= 1)
             & (wcol[None, :] + kxm1 >= 0)
             & (wcol[None, :] + kxm1 <= W - 1))
    kx = jnp.clip(kxm1 + 1, 0, 2)
    wt = jnp.transpose(w_oihw, (2, 0, 1, 3))          # (ky, o, i, kx)
    vals = wt[:, o[None, :], ci, kx]                  # (3, NSH, WC)
    vals = jnp.where(valid[None, :, :], vals, 0.0)
    wv = jnp.broadcast_to(vals[:, :, None, :], (3, NSH, H, WC))
    return wv.reshape(3 * NSH, H, WC).astype(jnp.float32)


def _pick_images_per_block(n):
    """Largest divisor of n that still leaves >= 2 grid steps (v7x: 2 TCs)."""
    if n <= 2:
        return 1
    for nb in range(n // 2, 0, -1):
        if n % nb == 0:
            return nb
    return 1


@jax.jit
def layer2_forward(x_nchw, w1_oihw, s1, b1, w2_oihw, s2, b2):
    """x_nchw: (N, C, H, W) float32.  Returns (N, C, H, W) float32."""
    N, C, H, W = x_nchw.shape
    WC = W * C
    NSH = 4 * C - 1
    NB = _pick_images_per_block(N)

    # NCHW -> NHWC -> fuse (W, C) onto the lane axis (free reshape of NHWC).
    x_fused = jnp.transpose(x_nchw, (0, 2, 3, 1)).reshape(N, H, WC)

    wv1 = _build_shift_weights(w1_oihw, H, W)
    wv2 = _build_shift_weights(w2_oihw, H, W)
    s1v = jnp.broadcast_to(jnp.tile(s1, W)[None, :], (H, WC))
    b1v = jnp.broadcast_to(jnp.tile(b1, W)[None, :], (H, WC))
    s2v = jnp.broadcast_to(jnp.tile(s2, W)[None, :], (H, WC))
    b2v = jnp.broadcast_to(jnp.tile(b2, W)[None, :], (H, WC))

    out_fused = pl.pallas_call(
        _layer2_kernel,
        out_shape=jax.ShapeDtypeStruct((N, H, WC), jnp.float32),
        grid=(N // NB,),
        in_specs=[
            pl.BlockSpec((NB, H, WC), lambda n: (n, 0, 0)),
            pl.BlockSpec((3 * NSH, H, WC), lambda n: (0, 0, 0)),
            pl.BlockSpec((H, WC), lambda n: (0, 0)),
            pl.BlockSpec((H, WC), lambda n: (0, 0)),
            pl.BlockSpec((3 * NSH, H, WC), lambda n: (0, 0, 0)),
            pl.BlockSpec((H, WC), lambda n: (0, 0)),
            pl.BlockSpec((H, WC), lambda n: (0, 0)),
        ],
        out_specs=pl.BlockSpec((NB, H, WC), lambda n: (n, 0, 0)),
        scratch_shapes=[pltpu.VMEM((H + 2, WC), jnp.float32)],
        compiler_params=pltpu.CompilerParams(
            dimension_semantics=("parallel",)),
    )(x_fused, wv1, s1v, b1v, wv2, s2v, b2v)

    out_nhwc = out_fused.reshape(N, H, W, C)
    return jnp.transpose(out_nhwc, (0, 3, 1, 2))             # NHWC -> NCHW


def _reference(x_nchw, w1_oihw, s1, b1, w2_oihw, s2, b2):
    """Pure-JAX reference (mirrors the PyTorch forward, inference-mode BN)."""
    dn = ("NCHW", "OIHW", "NCHW")
    y = lax.conv_general_dilated(x_nchw, w1_oihw, (1, 1), "SAME",
                                 dimension_numbers=dn,
                                 precision=lax.Precision.HIGHEST)
    y = y * s1[None, :, None, None] + b1[None, :, None, None]
    y = jnp.where(y > 0, y, 0.01 * y)                        # leaky_relu(0.01)
    z = lax.conv_general_dilated(y, w2_oihw, (1, 1), "SAME",
                                 dimension_numbers=dn,
                                 precision=lax.Precision.HIGHEST)
    z = z * s2[None, :, None, None] + b2[None, :, None, None]
    return z + x_nchw


def _fold_bn(gamma, beta, mean, var, eps=1e-5):
    scale = gamma / jnp.sqrt(var + eps)
    bias = beta - mean * scale
    return scale, bias


if __name__ == "__main__":
    N, C, H, W = 2, 8, 16, 16                                # W*C = 128 lanes
    key = jax.random.PRNGKey(0)
    ks = jax.random.split(key, 11)

    x = jax.random.normal(ks[0], (N, C, H, W), jnp.float32)

    # conv weights (OIHW, kernel 3x3, no bias) — deterministic synthetic init
    w1 = 0.1 * jax.random.normal(ks[1], (C, C, 3, 3), jnp.float32)
    w2 = 0.1 * jax.random.normal(ks[2], (C, C, 3, 3), jnp.float32)

    # ABN (BatchNorm part) params for conv1
    g1 = 1.0 + 0.1 * jax.random.normal(ks[3], (C,), jnp.float32)
    be1 = 0.1 * jax.random.normal(ks[4], (C,), jnp.float32)
    m1 = 0.1 * jax.random.normal(ks[5], (C,), jnp.float32)
    v1 = 1.0 + 0.1 * jax.random.uniform(ks[6], (C,), jnp.float32)
    # BatchNorm2d params for conv2
    g2 = 1.0 + 0.1 * jax.random.normal(ks[7], (C,), jnp.float32)
    be2 = 0.1 * jax.random.normal(ks[8], (C,), jnp.float32)
    m2 = 0.1 * jax.random.normal(ks[9], (C,), jnp.float32)
    v2 = 1.0 + 0.1 * jax.random.uniform(ks[10], (C,), jnp.float32)

    s1, b1 = _fold_bn(g1, be1, m1, v1)
    s2, b2 = _fold_bn(g2, be2, m2, v2)

    out = jax.block_until_ready(layer2_forward(x, w1, s1, b1, w2, s2, b2))
    ref = jax.block_until_ready(_reference(x, w1, s1, b1, w2, s2, b2))

    assert out.shape == (N, C, H, W)
    assert jnp.max(jnp.abs(out - ref)) < 1e-4, "mismatch vs reference"

    print("KERNEL_OK")
</pallas_src>

<mosaic_0001>
module attributes {stable_mosaic.version = 11 : i64} {
  func.func @_layer2_kernel(%arg0: i32, %arg1: memref<1x16x128xf32, #tpu.memory_space<vmem>>, %arg2: memref<93x16x128xf32, #tpu.memory_space<vmem>>, %arg3: memref<16x128xf32, #tpu.memory_space<vmem>>, %arg4: memref<16x128xf32, #tpu.memory_space<vmem>>, %arg5: memref<93x16x128xf32, #tpu.memory_space<vmem>>, %arg6: memref<16x128xf32, #tpu.memory_space<vmem>>, %arg7: memref<16x128xf32, #tpu.memory_space<vmem>>, %arg8: memref<1x16x128xf32, #tpu.memory_space<vmem>>, %arg9: memref<18x128xf32, #tpu.memory_space<vmem>>) attributes {dimension_semantics = [#tpu.dimension_semantics<parallel>], iteration_bounds = array<i64: 2>, scalar_prefetch = 0 : i64, scratch_operands = 1 : i64, tpu.core_type = #tpu.core_type<tc>, window_params = [{transform_indices = @transform_0, window_bounds = array<i64: 1, 16, 128>}, {pipeline_mode = #tpu.pipeline_mode<synchronous>, transform_indices = @transform_1, window_bounds = array<i64: 93, 16, 128>}, {pipeline_mode = #tpu.pipeline_mode<synchronous>, transform_indices = @transform_2, window_bounds = array<i64: 16, 128>}, {pipeline_mode = #tpu.pipeline_mode<synchronous>, transform_indices = @transform_3, window_bounds = array<i64: 16, 128>}, {pipeline_mode = #tpu.pipeline_mode<synchronous>, transform_indices = @transform_4, window_bounds = array<i64: 93, 16, 128>}, {pipeline_mode = #tpu.pipeline_mode<synchronous>, transform_indices = @transform_5, window_bounds = array<i64: 16, 128>}, {pipeline_mode = #tpu.pipeline_mode<synchronous>, transform_indices = @transform_6, window_bounds = array<i64: 16, 128>}, {transform_indices = @transform_7, window_bounds = array<i64: 1, 16, 128>}]} {
    %cst = arith.constant 0.000000e+00 : f32
    %0 = vector.broadcast %cst : f32 to vector<1x128xf32>
    %c0 = arith.constant 0 : index
    %c0_0 = arith.constant 0 : index
    %1 = vector.load %arg9[%c0, %c0_0] : memref<18x128xf32, #tpu.memory_space<vmem>>, vector<1x128xf32>
    tpu.vector_store %arg9[%c0, %c0_0], %0 {strides = array<i32>} : memref<18x128xf32, #tpu.memory_space<vmem>>, vector<1x128xf32>,
    %c17 = arith.constant 17 : index
    %c0_1 = arith.constant 0 : index
    %2 = vector.load %arg9[%c17, %c0_1] : memref<18x128xf32, #tpu.memory_space<vmem>>, vector<1x128xf32>
    tpu.vector_store %arg9[%c17, %c0_1], %0 {strides = array<i32>} : memref<18x128xf32, #tpu.memory_space<vmem>>, vector<1x128xf32>,
    %c0_2 = arith.constant 0 : index
    %c0_3 = arith.constant 0 : index
    %3 = vector.load %arg3[%c0_2, %c0_3] : memref<16x128xf32, #tpu.memory_space<vmem>>, vector<16x128xf32>
    %c0_4 = arith.constant 0 : index
    %c0_5 = arith.constant 0 : index
    %4 = vector.load %arg4[%c0_4, %c0_5] : memref<16x128xf32, #tpu.memory_space<vmem>>, vector<16x128xf32>
    %c0_6 = arith.constant 0 : index
    %c0_7 = arith.constant 0 : index
    %5 = vector.load %arg6[%c0_6, %c0_7] : memref<16x128xf32, #tpu.memory_space<vmem>>, vector<16x128xf32>
    %c0_8 = arith.constant 0 : index
    %c0_9 = arith.constant 0 : index
    %6 = vector.load %arg7[%c0_8, %c0_9] : memref<16x128xf32, #tpu.memory_space<vmem>>, vector<16x128xf32>
    %c0_10 = arith.constant 0 : index
    %c0_11 = arith.constant 0 : index
    %c0_12 = arith.constant 0 : index
    %7 = vector.load %arg1[%c0_10, %c0_11, %c0_12] : memref<1x16x128xf32, #tpu.memory_space<vmem>>, vector<1x16x128xf32>
    %8 = vector.shape_cast %7 : vector<1x16x128xf32> to vector<16x128xf32>
    %c1 = arith.constant 1 : index
    %c0_13 = arith.constant 0 : index
    %9 = vector.load %arg9[%c1, %c0_13] : memref<18x128xf32, #tpu.memory_space<vmem>>, vector<16x128xf32>
    tpu.vector_store %arg9[%c1, %c0_13], %8 {strides = array<i32>} : memref<18x128xf32, #tpu.memory_space<vmem>>, vector<16x128xf32>,
    %cst_14 = arith.constant 0.000000e+00 : f32
    %10 = vector.broadcast %cst_14 : f32 to vector<16x128xf32>
    %c0_15 = arith.constant 0 : index
    %c0_16 = arith.constant 0 : index
    %11 = vector.load %arg9[%c0_15, %c0_16] : memref<18x128xf32, #tpu.memory_space<vmem>>, vector<16x128xf32>
    %c15_i32 = arith.constant 15 : i32
    %12 = tpu.dynamic_rotate %11 by %c15_i32 dim 1 : vector<16x128xf32>, i32 -> vector<16x128xf32>
    %c0_17 = arith.constant 0 : index
    %c0_18 = arith.constant 0 : index
    %c0_19 = arith.constant 0 : index
    %13 = vector.load %arg2[%c0_17, %c0_18, %c0_19] : memref<93x16x128xf32, #tpu.memory_space<vmem>>, vector<1x16x128xf32>
    %14 = vector.shape_cast %13 : vector<1x16x128xf32> to vector<16x128xf32>
    %15 = arith.mulf %12, %14 : vector<16x128xf32>
    %16 = arith.addf %10, %15 : vector<16x128xf32>
    %c14_i32 = arith.constant 14 : i32
    %17 = tpu.dynamic_rotate %11 by %c14_i32 dim 1 : vector<16x128xf32>, i32 -> vector<16x128xf32>
    %c1_20 = arith.constant 1 : index
    %c0_21 = arith.constant 0 : index
    %c0_22 = arith.constant 0 : index
    %18 = vector.load %arg2[%c1_20, %c0_21, %c0_22] : memref<93x16x128xf32, #tpu.memory_space<vmem>>, vector<1x16x128xf32>
    %19 = vector.shape_cast %18 : vector<1x16x128xf32> to vector<16x128xf32>
    %20 = arith.mulf %17, %19 : vector<16x128xf32>
    %21 = arith.addf %16, %20 : vector<16x128xf32>
    %c13_i32 = arith.constant 13 : i32
    %22 = tpu.dynamic_rotate %11 by %c13_i32 dim 1 : vector<16x128xf32>, i32 -> vector<16x128xf32>
    %c2 = arith.constant 2 : index
    %c0_23 = arith.constant 0 : index
    %c0_24 = arith.constant 0 : index
    %23 = vector.load %arg2[%c2, %c0_23, %c0_24] : memref<93x16x128xf32, #tpu.memory_space<vmem>>, vector<1x16x128xf32>
    %24 = vector.shape_cast %23 : vector<1x16x128xf32> to vector<16x128xf32>
    %25 = arith.mulf %22, %24 : vector<16x128xf32>
    %26 = arith.addf %21, %25 : vector<16x128xf32>
    %c12_i32 = arith.constant 12 : i32
    %27 = tpu.dynamic_rotate %11 by %c12_i32 dim 1 : vector<16x128xf32>, i32 -> vector<16x128xf32>
    %c3 = arith.constant 3 : index
    %c0_25 = arith.constant 0 : index
    %c0_26 = arith.constant 0 : index
    %28 = vector.load %arg2[%c3, %c0_25, %c0_26] : memref<93x16x128xf32, #tpu.memory_space<vmem>>, vector<1x16x128xf32>
    %29 = vector.shape_cast %28 : vector<1x16x128xf32> to vector<16x128xf32>
    %30 = arith.mulf %27, %29 : vector<16x128xf32>
    %31 = arith.addf %26, %30 : vector<16x128xf32>
    %c11_i32 = arith.constant 11 : i32
    %32 = tpu.dynamic_rotate %11 by %c11_i32 dim 1 : vector<16x128xf32>, i32 -> vector<16x128xf32>
    %c4 = arith.constant 4 : index
    %c0_27 = arith.constant 0 : index
    %c0_28 = arith.constant 0 : index
    %33 = vector.load %arg2[%c4, %c0_27, %c0_28] : memref<93x16x128xf32, #tpu.memory_space<vmem>>, vector<1x16x128xf32>
    %34 = vector.shape_cast %33 : vector<1x16x128xf32> to vector<16x128xf32>
    %35 = arith.mulf %32, %34 : vector<16x128xf32>
    %36 = arith.addf %31, %35 : vector<16x128xf32>
    %c10_i32 = arith.constant 10 : i32
    %37 = tpu.dynamic_rotate %11 by %c10_i32 dim 1 : vector<16x128xf32>, i32 -> vector<16x128xf32>
    %c5 = arith.constant 5 : index
    %c0_29 = arith.constant 0 : index
    %c0_30 = arith.constant 0 : index
    %38 = vector.load %arg2[%c5, %c0_29, %c0_30] : memref<93x16x128xf32, #tpu.memory_space<vmem>>, vector<1x16x128xf32>
    %39 = vector.shape_cast %38 : vector<1x16x128xf32> to vector<16x128xf32>
    %40 = arith.mulf %37, %39 : vector<16x128xf32>
    %41 = arith.addf %36, %40 : vector<16x128xf32>
    %c9_i32 = arith.constant 9 : i32
    %42 = tpu.dynamic_rotate %11 by %c9_i32 dim 1 : vector<16x128xf32>, i32 -> vector<16x128xf32>
    %c6 = arith.constant 6 : index
    %c0_31 = arith.constant 0 : index
    %c0_32 = arith.constant 0 : index
    %43 = vector.load %arg2[%c6, %c0_31, %c0_32] : memref<93x16x128xf32, #tpu.memory_space<vmem>>, vector<1x16x128xf32>
    %44 = vector.shape_cast %43 : vector<1x16x128xf32> to vector<16x128xf32>
    %45 = arith.mulf %42, %44 : vector<16x128xf32>
    %46 = arith.addf %41, %45 : vector<16x128xf32>
    %c8_i32 = arith.constant 8 : i32
    %47 = tpu.dynamic_rotate %11 by %c8_i32 dim 1 : vector<16x128xf32>, i32 -> vector<16x128xf32>
    %c7 = arith.constant 7 : index
    %c0_33 = arith.constant 0 : index
    %c0_34 = arith.constant 0 : index
    %48 = vector.load %arg2[%c7, %c0_33, %c0_34] : memref<93x16x128xf32, #tpu.memory_space<vmem>>, vector<1x16x128xf32>
    %49 = vector.shape_cast %48 : vector<1x16x128xf32> to vector<16x128xf32>
    %50 = arith.mulf %47, %49 : vector<16x128xf32>
    %51 = arith.addf %46, %50 : vector<16x128xf32>
    %c7_i32 = arith.constant 7 : i32
    %52 = tpu.dynamic_rotate %11 by %c7_i32 dim 1 : vector<16x128xf32>, i32 -> vector<16x128xf32>
    %c8 = arith.constant 8 : index
    %c0_35 = arith.constant 0 : index
    %c0_36 = arith.constant 0 : index
    %53 = vector.load %arg2[%c8, %c0_35, %c0_36] : memref<93x16x128xf32, #tpu.memory_space<vmem>>, vector<1x16x128xf32>
    %54 = vector.shape_cast %53 : vector<1x16x128xf32> to vector<16x128xf32>
    %55 = arith.mulf %52, %54 : vector<16x128xf32>
    %56 = arith.addf %51, %55 : vector<16x128xf32>
    %c6_i32 = arith.constant 6 : i32
    %57 = tpu.dynamic_rotate %11 by %c6_i32 dim 1 : vector<16x128xf32>, i32 -> vector<16x128xf32>
    %c9 = arith.constant 9 : index
    %c0_37 = arith.constant 0 : index
    %c0_38 = arith.constant 0 : index
    %58 = vector.load %arg2[%c9, %c0_37, %c0_38] : memref<93x16x128xf32, #tpu.memory_space<vmem>>, vector<1x16x128xf32>
    %59 = vector.shape_cast %58 : vector<1x16x128xf32> to vector<16x128xf32>
    %60 = arith.mulf %57, %59 : vector<16x128xf32>
    %61 = arith.addf %56, %60 : vector<16x128xf32>
    %c5_i32 = arith.constant 5 : i32
    %62 = tpu.dynamic_rotate %11 by %c5_i32 dim 1 : vector<16x128xf32>, i32 -> vector<16x128xf32>
    %c10 = arith.constant 10 : index
    %c0_39 = arith.constant 0 : index
    %c0_40 = arith.constant 0 : index
    %63 = vector.load %arg2[%c10, %c0_39, %c0_40] : memref<93x16x128xf32, #tpu.memory_space<vmem>>, vector<1x16x128xf32>
    %64 = vector.shape_cast %63 : vector<1x16x128xf32> to vector<16x128xf32>
    %65 = arith.mulf %62, %64 : vector<16x128xf32>
    %66 = arith.addf %61, %65 : vector<16x128xf32>
    %c4_i32 = arith.constant 4 : i32
    %67 = tpu.dynamic_rotate %11 by %c4_i32 dim 1 : vector<16x128xf32>, i32 -> vector<16x128xf32>
    %c11 = arith.constant 11 : index
    %c0_41 = arith.constant 0 : index
    %c0_42 = arith.constant 0 : index
    %68 = vector.load %arg2[%c11, %c0_41, %c0_42] : memref<93x16x128xf32, #tpu.memory_space<vmem>>, vector<1x16x128xf32>
    %69 = vector.shape_cast %68 : vector<1x16x128xf32> to vector<16x128xf32>
    %70 = arith.mulf %67, %69 : vector<16x128xf32>
    %71 = arith.addf %66, %70 : vector<16x128xf32>
    %c3_i32 = arith.constant 3 : i32
    %72 = tpu.dynamic_rotate %11 by %c3_i32 dim 1 : vector<16x128xf32>, i32 -> vector<16x128xf32>
    %c12 = arith.constant 12 : index
    %c0_43 = arith.constant 0 : index
    %c0_44 = arith.constant 0 : index
    %73 = vector.load %arg2[%c12, %c0_43, %c0_44] : memref<93x16x128xf32, #tpu.memory_space<vmem>>, vector<1x16x128xf32>
    %74 = vector.shape_cast %73 : vector<1x16x128xf32> to vector<16x128xf32>
    %75 = arith.mulf %72, %74 : vector<16x128xf32>
    %76 = arith.addf %71, %75 : vector<16x128xf32>
    %c2_i32 = arith.constant 2 : i32
    %77 = tpu.dynamic_rotate %11 by %c2_i32 dim 1 : vector<16x128xf32>, i32 -> vector<16x128xf32>
    %c13 = arith.constant 13 : index
    %c0_45 = arith.constant 0 : index
    %c0_46 = arith.constant 0 : index
    %78 = vector.load %arg2[%c13, %c0_45, %c0_46] : memref<93x16x128xf32, #tpu.memory_space<vmem>>, vector<1x16x128xf32>
    %79 = vector.shape_cast %78 : vector<1x16x128xf32> to vector<16x128xf32>
    %80 = arith.mulf %77, %79 : vector<16x128xf32>
    %81 = arith.addf %76, %80 : vector<16x128xf32>
    %c1_i32 = arith.constant 1 : i32
    %82 = tpu.dynamic_rotate %11 by %c1_i32 dim 1 : vector<16x128xf32>, i32 -> vector<16x128xf32>
    %c14 = arith.constant 14 : index
    %c0_47 = arith.constant 0 : index
    %c0_48 = arith.constant 0 : index
    %83 = vector.load %arg2[%c14, %c0_47, %c0_48] : memref<93x16x128xf32, #tpu.memory_space<vmem>>, vector<1x16x128xf32>
    %84 = vector.shape_cast %83 : vector<1x16x128xf32> to vector<16x128xf32>
    %85 = arith.mulf %82, %84 : vector<16x128xf32>
    %86 = arith.addf %81, %85 : vector<16x128xf32>
    %c15 = arith.constant 15 : index
    %c0_49 = arith.constant 0 : index
    %c0_50 = arith.constant 0 : index
    %87 = vector.load %arg2[%c15, %c0_49, %c0_50] : memref<93x16x128xf32, #tpu.memory_space<vmem>>, vector<1x16x128xf32>
    %88 = vector.shape_cast %87 : vector<1x16x128xf32> to vector<16x128xf32>
    %89 = arith.mulf %11, %88 : vector<16x128xf32>
    %90 = arith.addf %86, %89 : vector<16x128xf32>
    %c127_i32 = arith.constant 127 : i32
    %91 = tpu.dynamic_rotate %11 by %c127_i32 dim 1 : vector<16x128xf32>, i32 -> vector<16x128xf32>
    %c16 = arith.constant 16 : index
    %c0_51 = arith.constant 0 : index
    %c0_52 = arith.constant 0 : index
    %92 = vector.load %arg2[%c16, %c0_51, %c0_52] : memref<93x16x128xf32, #tpu.memory_space<vmem>>, vector<1x16x128xf32>
    %93 = vector.shape_cast %92 : vector<1x16x128xf32> to vector<16x128xf32>
    %94 = arith.mulf %91, %93 : vector<16x128xf32>
    %95 = arith.addf %90, %94 : vector<16x128xf32>
    %c126_i32 = arith.constant 126 : i32
    %96 = tpu.dynamic_rotate %11 by %c126_i32 dim 1 : vector<16x128xf32>, i32 -> vector<16x128xf32>
    %c17_53 = arith.constant 17 : index
    %c0_54 = arith.constant 0 : index
    %c0_55 = arith.constant 0 : index
    %97 = vector.load %arg2[%c17_53, %c0_54, %c0_55] : memref<93x16x128xf32, #tpu.memory_space<vmem>>, vector<1x16x128xf32>
    %98 = vector.shape_cast %97 : vector<1x16x128xf32> to vector<16x128xf32>
    %99 = arith.mulf %96, %98 : vector<16x128xf32>
    %100 = arith.addf %95, %99 : vector<16x128xf32>
    %c125_i32 = arith.constant 125 : i32
    %101 = tpu.dynamic_rotate %11 by %c125_i32 dim 1 : vector<16x128xf32>, i32 -> vector<16x128xf32>
    %c18 = arith.constant 18 : index
    %c0_56 = arith.constant 0 : index
    %c0_57 = arith.constant 0 : index
    %102 = vector.load %arg2[%c18, %c0_56, %c0_57] : memref<93x16x128xf32, #tpu.memory_space<vmem>>, vector<1x16x128xf32>
    %103 = vector.shape_cast %102 : vector<1x16x128xf32> to vector<16x128xf32>
    %104 = arith.mulf %101, %103 : vector<16x128xf32>
    %105 = arith.addf %100, %104 : vector<16x128xf32>
    %c124_i32 = arith.constant 124 : i32
    %106 = tpu.dynamic_rotate %11 by %c124_i32 dim 1 : vector<16x128xf32>, i32 -> vector<16x128xf32>
    %c19 = arith.constant 19 : index
    %c0_58 = arith.constant 0 : index
    %c0_59 = arith.constant 0 : index
    %107 = vector.load %arg2[%c19, %c0_58, %c0_59] : memref<93x16x128xf32, #tpu.memory_space<vmem>>, vector<1x16x128xf32>
    %108 = vector.shape_cast %107 : vector<1x16x128xf32> to vector<16x128xf32>
    %109 = arith.mulf %106, %108 : vector<16x128xf32>
    %110 = arith.addf %105, %109 : vector<16x128xf32>
    %c123_i32 = arith.constant 123 : i32
    %111 = tpu.dynamic_rotate %11 by %c123_i32 dim 1 : vector<16x128xf32>, i32 -> vector<16x128xf32>
    %c20 = arith.constant 20 : index
    %c0_60 = arith.constant 0 : index
    %c0_61 = arith.constant 0 : index
    %112 = vector.load %arg2[%c20, %c0_60, %c0_61] : memref<93x16x128xf32, #tpu.memory_space<vmem>>, vector<1x16x128xf32>
    %113 = vector.shape_cast %112 : vector<1x16x128xf32> to vector<16x128xf32>
    %114 = arith.mulf %111, %113 : vector<16x128xf32>
    %115 = arith.addf %110, %114 : vector<16x128xf32>
    %c122_i32 = arith.constant 122 : i32
    %116 = tpu.dynamic_rotate %11 by %c122_i32 dim 1 : vector<16x128xf32>, i32 -> vector<16x128xf32>
    %c21 = arith.constant 21 : index
    %c0_62 = arith.constant 0 : index
    %c0_63 = arith.constant 0 : index
    %117 = vector.load %arg2[%c21, %c0_62, %c0_63] : memref<93x16x128xf32, #tpu.memory_space<vmem>>, vector<1x16x128xf32>
    %118 = vector.shape_cast %117 : vector<1x16x128xf32> to vector<16x128xf32>
    %119 = arith.mulf %116, %118 : vector<16x128xf32>
    %120 = arith.addf %115, %119 : vector<16x128xf32>
    %c121_i32 = arith.constant 121 : i32
    %121 = tpu.dynamic_rotate %11 by %c121_i32 dim 1 : vector<16x128xf32>, i32 -> vector<16x128xf32>
    %c22 = arith.constant 22 : index
    %c0_64 = arith.constant 0 : index
    %c0_65 = arith.constant 0 : index
    %122 = vector.load %arg2[%c22, %c0_64, %c0_65] : memref<93x16x128xf32, #tpu.memory_space<vmem>>, vector<1x16x128xf32>
    %123 = vector.shape_cast %122 : vector<1x16x128xf32> to vector<16x128xf32>
    %124 = arith.mulf %121, %123 : vector<16x128xf32>
    %125 = arith.addf %120, %124 : vector<16x128xf32>
    %c120_i32 = arith.constant 120 : i32
    %126 = tpu.dynamic_rotate %11 by %c120_i32 dim 1 : vector<16x128xf32>, i32 -> vector<16x128xf32>
    %c23 = arith.constant 23 : index
    %c0_66 = arith.constant 0 : index
    %c0_67 = arith.constant 0 : index
    %127 = vector.load %arg2[%c23, %c0_66, %c0_67] : memref<93x16x128xf32, #tpu.memory_space<vmem>>, vector<1x16x128xf32>
    %128 = vector.shape_cast %127 : vector<1x16x128xf32> to vector<16x128xf32>
    %129 = arith.mulf %126, %128 : vector<16x128xf32>
    %130 = arith.addf %125, %129 : vector<16x128xf32>
    %c119_i32 = arith.constant 119 : i32
    %131 = tpu.dynamic_rotate %11 by %c119_i32 dim 1 : vector<16x128xf32>, i32 -> vector<16x128xf32>
    %c24 = arith.constant 24 : index
    %c0_68 = arith.constant 0 : index
    %c0_69 = arith.constant 0 : index
    %132 = vector.load %arg2[%c24, %c0_68, %c0_69] : memref<93x16x128xf32, #tpu.memory_space<vmem>>, vector<1x16x128xf32>
    %133 = vector.shape_cast %132 : vector<1x16x128xf32> to vector<16x128xf32>
    %134 = arith.mulf %131, %133 : vector<16x128xf32>
    %135 = arith.addf %130, %134 : vector<16x128xf32>
    %c118_i32 = arith.constant 118 : i32
    %136 = tpu.dynamic_rotate %11 by %c118_i32 dim 1 : vector<16x128xf32>, i32 -> vector<16x128xf32>
    %c25 = arith.constant 25 : index
    %c0_70 = arith.constant 0 : index
    %c0_71 = arith.constant 0 : index
    %137 = vector.load %arg2[%c25, %c0_70, %c0_71] : memref<93x16x128xf32, #tpu.memory_space<vmem>>, vector<1x16x128xf32>
    %138 = vector.shape_cast %137 : vector<1x16x128xf32> to vector<16x128xf32>
    %139 = arith.mulf %136, %138 : vector<16x128xf32>
    %140 = arith.addf %135, %139 : vector<16x128xf32>
    %c117_i32 = arith.constant 117 : i32
    %141 = tpu.dynamic_rotate %11 by %c117_i32 dim 1 : vector<16x128xf32>, i32 -> vector<16x128xf32>
    %c26 = arith.constant 26 : index
    %c0_72 = arith.constant 0 : index
    %c0_73 = arith.constant 0 : index
    %142 = vector.load %arg2[%c26, %c0_72, %c0_73] : memref<93x16x128xf32, #tpu.memory_space<vmem>>, vector<1x16x128xf32>
    %143 = vector.shape_cast %142 : vector<1x16x128xf32> to vector<16x128xf32>
    %144 = arith.mulf %141, %143 : vector<16x128xf32>
    %145 = arith.addf %140, %144 : vector<16x128xf32>
    %c116_i32 = arith.constant 116 : i32
    %146 = tpu.dynamic_rotate %11 by %c116_i32 dim 1 : vector<16x128xf32>, i32 -> vector<16x128xf32>
    %c27 = arith.constant 27 : index
    %c0_74 = arith.constant 0 : index
    %c0_75 = arith.constant 0 : index
    %147 = vector.load %arg2[%c27, %c0_74, %c0_75] : memref<93x16x128xf32, #tpu.memory_space<vmem>>, vector<1x16x128xf32>
    %148 = vector.shape_cast %147 : vector<1x16x128xf32> to vector<16x128xf32>
    %149 = arith.mulf %146, %148 : vector<16x128xf32>
    %150 = arith.addf %145, %149 : vector<16x128xf32>
    %c115_i32 = arith.constant 115 : i32
    %151 = tpu.dynamic_rotate %11 by %c115_i32 dim 1 : vector<16x128xf32>, i32 -> vector<16x128xf32>
    %c28 = arith.constant 28 : index
    %c0_76 = arith.constant 0 : index
    %c0_77 = arith.constant 0 : index
    %152 = vector.load %arg2[%c28, %c0_76, %c0_77] : memref<93x16x128xf32, #tpu.memory_space<vmem>>, vector<1x16x128xf32>
    %153 = vector.shape_cast %152 : vector<1x16x128xf32> to vector<16x128xf32>
    %154 = arith.mulf %151, %153 : vector<16x128xf32>
    %155 = arith.addf %150, %154 : vector<16x128xf32>
    %c114_i32 = arith.constant 114 : i32
    %156 = tpu.dynamic_rotate %11 by %c114_i32 dim 1 : vector<16x128xf32>, i32 -> vector<16x128xf32>
    %c29 = arith.constant 29 : index
    %c0_78 = arith.constant 0 : index
    %c0_79 = arith.constant 0 : index
    %157 = vector.load %arg2[%c29, %c0_78, %c0_79] : memref<93x16x128xf32, #tpu.memory_space<vmem>>, vector<1x16x128xf32>
    %158 = vector.shape_cast %157 : vector<1x16x128xf32> to vector<16x128xf32>
    %159 = arith.mulf %156, %158 : vector<16x128xf32>
    %160 = arith.addf %155, %159 : vector<16x128xf32>
    %c113_i32 = arith.constant 113 : i32
    %161 = tpu.dynamic_rotate %11 by %c113_i32 dim 1 : vector<16x128xf32>, i32 -> vector<16x128xf32>
    %c30 = arith.constant 30 : index
    %c0_80 = arith.constant 0 : index
    %c0_81 = arith.constant 0 : index
    %162 = vector.load %arg2[%c30, %c0_80, %c0_81] : memref<93x16x128xf32, #tpu.memory_space<vmem>>, vector<1x16x128xf32>
    %163 = vector.shape_cast %162 : vector<1x16x128xf32> to vector<16x128xf32>
    %164 = arith.mulf %161, %163 : vector<16x128xf32>
    %165 = arith.addf %160, %164 : vector<16x128xf32>
    %c1_82 = arith.constant 1 : index
    %c0_83 = arith.constant 0 : index
    %166 = vector.load %arg9[%c1_82, %c0_83] : memref<18x128xf32, #tpu.memory_space<vmem>>, vector<16x128xf32>
    %c15_i32_84 = arith.constant 15 : i32
    %167 = tpu.dynamic_rotate %166 by %c15_i32_84 dim 1 : vector<16x128xf32>, i32 -> vector<16x128xf32>
    %c31 = arith.constant 31 : index
    %c0_85 = arith.constant 0 : index
    %c0_86 = arith.constant 0 : index
    %168 = vector.load %arg2[%c31, %c0_85, %c0_86] : memref<93x16x128xf32, #tpu.memory_space<vmem>>, vector<1x16x128xf32>
    %169 = vector.shape_cast %168 : vector<1x16x128xf32> to vector<16x128xf32>
    %170 = arith.mulf %167, %169 : vector<16x128xf32>
    %171 = arith.addf %165, %170 : vector<16x128xf32>
    %c14_i32_87 = arith.constant 14 : i32
    %172 = tpu.dynamic_rotate %166 by %c14_i32_87 dim 1 : vector<16x128xf32>, i32 -> vector<16x128xf32>
    %c32 = arith.constant 32 : index
    %c0_88 = arith.constant 0 : index
    %c0_89 = arith.constant 0 : index
    %173 = vector.load %arg2[%c32, %c0_88, %c0_89] : memref<93x16x128xf32, #tpu.memory_space<vmem>>, vector<1x16x128xf32>
    %174 = vector.shape_cast %173 : vector<1x16x128xf32> to vector<16x128xf32>
    %175 = arith.mulf %172, %174 : vector<16x128xf32>
    %176 = arith.addf %171, %175 : vector<16x128xf32>
    %c13_i32_90 = arith.constant 13 : i32
    %177 = tpu.dynamic_rotate %166 by %c13_i32_90 dim 1 : vector<16x128xf32>, i32 -> vector<16x128xf32>
    %c33 = arith.constant 33 : index
    %c0_91 = arith.constant 0 : index
    %c0_92 = arith.constant 0 : index
    %178 = vector.load %arg2[%c33, %c0_91, %c0_92] : memref<93x16x128xf32, #tpu.memory_space<vmem>>, vector<1x16x128xf32>
    %179 = vector.shape_cast %178 : vector<1x16x128xf32> to vector<16x128xf32>
    %180 = arith.mulf %177, %179 : vector<16x128xf32>
    %181 = arith.addf %176, %180 : vector<16x128xf32>
    %c12_i32_93 = arith.constant 12 : i32
    %182 = tpu.dynamic_rotate %166 by %c12_i32_93 dim 1 : vector<16x128xf32>, i32 -> vector<16x128xf32>
    %c34 = arith.constant 34 : index
    %c0_94 = arith.constant 0 : index
    %c0_95 = arith.constant 0 : index
    %183 = vector.load %arg2[%c34, %c0_94, %c0_95] : memref<93x16x128xf32, #tpu.memory_space<vmem>>, vector<1x16x128xf32>
    %184 = vector.shape_cast %183 : vector<1x16x128xf32> to vector<16x128xf32>
    %185 = arith.mulf %182, %184 : vector<16x128xf32>
    %186 = arith.addf %181, %185 : vector<16x128xf32>
    %c11_i32_96 = arith.constant 11 : i32
    %187 = tpu.dynamic_rotate %166 by %c11_i32_96 dim 1 : vector<16x128xf32>, i32 -> vector<16x128xf32>
    %c35 = arith.constant 35 : index
    %c0_97 = arith.constant 0 : index
    %c0_98 = arith.constant 0 : index
    %188 = vector.load %arg2[%c35, %c0_97, %c0_98] : memref<93x16x128xf32, #tpu.memory_space<vmem>>, vector<1x16x128xf32>
    %189 = vector.shape_cast %188 : vector<1x16x128xf32> to vector<16x128xf32>
    %190 = arith.mulf %187, %189 : vector<16x128xf32>
    %191 = arith.addf %186, %190 : vector<16x128xf32>
    %c10_i32_99 = arith.constant 10 : i32
    %192 = tpu.dynamic_rotate %166 by %c10_i32_99 dim 1 : vector<16x128xf32>, i32 -> vector<16x128xf32>
    %c36 = arith.constant 36 : index
    %c0_100 = arith.constant 0 : index
    %c0_101 = arith.constant 0 : index
    %193 = vector.load %arg2[%c36, %c0_100, %c0_101] : memref<93x16x128xf32, #tpu.memory_space<vmem>>, vector<1x16x128xf32>
    %194 = vector.shape_cast %193 : vector<1x16x128xf32> to vector<16x128xf32>
    %195 = arith.mulf %192, %194 : vector<16x128xf32>
    %196 = arith.addf %191, %195 : vector<16x128xf32>
    %c9_i32_102 = arith.constant 9 : i32
    %197 = tpu.dynamic_rotate %166 by %c9_i32_102 dim 1 : vector<16x128xf32>, i32 -> vector<16x128xf32>
    %c37 = arith.constant 37 : index
    %c0_103 = arith.constant 0 : index
    %c0_104 = arith.constant 0 : index
    %198 = vector.load %arg2[%c37, %c0_103, %c0_104] : memref<93x16x128xf32, #tpu.memory_space<vmem>>, vector<1x16x128xf32>
    %199 = vector.shape_cast %198 : vector<1x16x128xf32> to vector<16x128xf32>
    %200 = arith.mulf %197, %199 : vector<16x128xf32>
    %201 = arith.addf %196, %200 : vector<16x128xf32>
    %c8_i32_105 = arith.constant 8 : i32
    %202 = tpu.dynamic_rotate %166 by %c8_i32_105 dim 1 : vector<16x128xf32>, i32 -> vector<16x128xf32>
    %c38 = arith.constant 38 : index
    %c0_106 = arith.constant 0 : index
    %c0_107 = arith.constant 0 : index
    %203 = vector.load %arg2[%c38, %c0_106, %c0_107] : memref<93x16x128xf32, #tpu.memory_space<vmem>>, vector<1x16x128xf32>
    %204 = vector.shape_cast %203 : vector<1x16x128xf32> to vector<16x128xf32>
    %205 = arith.mulf %202, %204 : vector<16x128xf32>
    %206 = arith.addf %201, %205 : vector<16x128xf32>
    %c7_i32_108 = arith.constant 7 : i32
    %207 = tpu.dynamic_rotate %166 by %c7_i32_108 dim 1 : vector<16x128xf32>, i32 -> vector<16x128xf32>
    %c39 = arith.constant 39 : index
    %c0_109 = arith.constant 0 : index
    %c0_110 = arith.constant 0 : index
    %208 = vector.load %arg2[%c39, %c0_109, %c0_110] : memref<93x16x128xf32, #tpu.memory_space<vmem>>, vector<1x16x128xf32>
    %209 = vector.shape_cast %208 : vector<1x16x128xf32> to vector<16x128xf32>
    %210 = arith.mulf %207, %209 : vector<16x128xf32>
    %211 = arith.addf %206, %210 : vector<16x128xf32>
    %c6_i32_111 = arith.constant 6 : i32
    %212 = tpu.dynamic_rotate %166 by %c6_i32_111 dim 1 : vector<16x128xf32>, i32 -> vector<16x128xf32>
    %c40 = arith.constant 40 : index
    %c0_112 = arith.constant 0 : index
    %c0_113 = arith.constant 0 : index
    %213 = vector.load %arg2[%c40, %c0_112, %c0_113] : memref<93x16x128xf32, #tpu.memory_space<vmem>>, vector<1x16x128xf32>
    %214 = vector.shape_cast %213 : vector<1x16x128xf32> to vector<16x128xf32>
    %215 = arith.mulf %212, %214 : vector<16x128xf32>
    %216 = arith.addf %211, %215 : vector<16x128xf32>
    %c5_i32_114 = arith.constant 5 : i32
    %217 = tpu.dynamic_rotate %166 by %c5_i32_114 dim 1 : vector<16x128xf32>, i32 -> vector<16x128xf32>
    %c41 = arith.constant 41 : index
    %c0_115 = arith.constant 0 : index
    %c0_116 = arith.constant 0 : index
    %218 = vector.load %arg2[%c41, %c0_115, %c0_116] : memref<93x16x128xf32, #tpu.memory_space<vmem>>, vector<1x16x128xf32>
    %219 = vector.shape_cast %218 : vector<1x16x128xf32> to vector<16x128xf32>
    %220 = arith.mulf %217, %219 : vector<16x128xf32>
    %221 = arith.addf %216, %220 : vector<16x128xf32>
    %c4_i32_117 = arith.constant 4 : i32
    %222 = tpu.dynamic_rotate %166 by %c4_i32_117 dim 1 : vector<16x128xf32>, i32 -> vector<16x128xf32>
    %c42 = arith.constant 42 : index
    %c0_118 = arith.constant 0 : index
    %c0_119 = arith.constant 0 : index
    %223 = vector.load %arg2[%c42, %c0_118, %c0_119] : memref<93x16x128xf32, #tpu.memory_space<vmem>>, vector<1x16x128xf32>
    %224 = vector.shape_cast %223 : vector<1x16x128xf32> to vector<16x128xf32>
    %225 = arith.mulf %222, %224 : vector<16x128xf32>
    %226 = arith.addf %221, %225 : vector<16x128xf32>
    %c3_i32_120 = arith.constant 3 : i32
    %227 = tpu.dynamic_rotate %166 by %c3_i32_120 dim 1 : vector<16x128xf32>, i32 -> vector<16x128xf32>
    %c43 = arith.constant 43 : index
    %c0_121 = arith.constant 0 : index
    %c0_122 = arith.constant 0 : index
    %228 = vector.load %arg2[%c43, %c0_121, %c0_122] : memref<93x16x128xf32, #tpu.memory_space<vmem>>, vector<1x16x128xf32>
    %229 = vector.shape_cast %228 : vector<1x16x128xf32> to vector<16x128xf32>
    %230 = arith.mulf %227, %229 : vector<16x128xf32>
    %231 = arith.addf %226, %230 : vector<16x128xf32>
    %c2_i32_123 = arith.constant 2 : i32
    %232 = tpu.dynamic_rotate %166 by %c2_i32_123 dim 1 : vector<16x128xf32>, i32 -> vector<16x128xf32>
    %c44 = arith.constant 44 : index
    %c0_124 = arith.constant 0 : index
    %c0_125 = arith.constant 0 : index
    %233 = vector.load %arg2[%c44, %c0_124, %c0_125] : memref<93x16x128xf32, #tpu.memory_space<vmem>>, vector<1x16x128xf32>
    %234 = vector.shape_cast %233 : vector<1x16x128xf32> to vector<16x128xf32>
    %235 = arith.mulf %232, %234 : vector<16x128xf32>
    %236 = arith.addf %231, %235 : vector<16x128xf32>
    %c1_i32_126 = arith.constant 1 : i32
    %237 = tpu.dynamic_rotate %166 by %c1_i32_126 dim 1 : vector<16x128xf32>, i32 -> vector<16x128xf32>
    %c45 = arith.constant 45 : index
    %c0_127 = arith.constant 0 : index
    %c0_128 = arith.constant 0 : index
    %238 = vector.load %arg2[%c45, %c0_127, %c0_128] : memref<93x16x128xf32, #tpu.memory_space<vmem>>, vector<1x16x128xf32>
    %239 = vector.shape_cast %238 : vector<1x16x128xf32> to vector<16x128xf32>
    %240 = arith.mulf %237, %239 : vector<16x128xf32>
    %241 = arith.addf %236, %240 : vector<16x128xf32>
    %c46 = arith.constant 46 : index
    %c0_129 = arith.constant 0 : index
    %c0_130 = arith.constant 0 : index
    %242 = vector.load %arg2[%c46, %c0_129, %c0_130] : memref<93x16x128xf32, #tpu.memory_space<vmem>>, vector<1x16x128xf32>
    %243 = vector.shape_cast %242 : vector<1x16x128xf32> to vector<16x128xf32>
    %244 = arith.mulf %166, %243 : vector<16x128xf32>
    %245 = arith.addf %241, %244 : vector<16x128xf32>
    %c127_i32_131 = arith.constant 127 : i32
    %246 = tpu.dynamic_rotate %166 by %c127_i32_131 dim 1 : vector<16x128xf32>, i32 -> vector<16x128xf32>
    %c47 = arith.constant 47 : index
    %c0_132 = arith.constant 0 : index
    %c0_133 = arith.constant 0 : index
    %247 = vector.load %arg2[%c47, %c0_132, %c0_133] : memref<93x16x128xf32, #tpu.memory_space<vmem>>, vector<1x16x128xf32>
    %248 = vector.shape_cast %247 : vector<1x16x128xf32> to vector<16x128xf32>
    %249 = arith.mulf %246, %248 : vector<16x128xf32>
    %250 = arith.addf %245, %249 : vector<16x128xf32>
    %c126_i32_134 = arith.constant 126 : i32
    %251 = tpu.dynamic_rotate %166 by %c126_i32_134 dim 1 : vector<16x128xf32>, i32 -> vector<16x128xf32>
    %c48 = arith.constant 48 : index
    %c0_135 = arith.constant 0 : index
    %c0_136 = arith.constant 0 : index
    %252 = vector.load %arg2[%c48, %c0_135, %c0_136] : memref<93x16x128xf32, #tpu.memory_space<vmem>>, vector<1x16x128xf32>
    %253 = vector.shape_cast %252 : vector<1x16x128xf32> to vector<16x128xf32>
    %254 = arith.mulf %251, %253 : vector<16x128xf32>
    %255 = arith.addf %250, %254 : vector<16x128xf32>
    %c125_i32_137 = arith.constant 125 : i32
    %256 = tpu.dynamic_rotate %166 by %c125_i32_137 dim 1 : vector<16x128xf32>, i32 -> vector<16x128xf32>
    %c49 = arith.constant 49 : index
    %c0_138 = arith.constant 0 : index
    %c0_139 = arith.constant 0 : index
    %257 = vector.load %arg2[%c49, %c0_138, %c0_139] : memref<93x16x128xf32, #tpu.memory_space<vmem>>, vector<1x16x128xf32>
    %258 = vector.shape_cast %257 : vector<1x16x128xf32> to vector<16x128xf32>
    %259 = arith.mulf %256, %258 : vector<16x128xf32>
    %260 = arith.addf %255, %259 : vector<16x128xf32>
    %c124_i32_140 = arith.constant 124 : i32
    %261 = tpu.dynamic_rotate %166 by %c124_i32_140 dim 1 : vector<16x128xf32>, i32 -> vector<16x128xf32>
    %c50 = arith.constant 50 : index
    %c0_141 = arith.constant 0 : index
    %c0_142 = arith.constant 0 : index
    %262 = vector.load %arg2[%c50, %c0_141, %c0_142] : memref<93x16x128xf32, #tpu.memory_space<vmem>>, vector<1x16x128xf32>
    %263 = vector.shape_cast %262 : vector<1x16x128xf32> to vector<16x128xf32>
    %264 = arith.mulf %261, %263 : vector<16x128xf32>
    %265 = arith.addf %260, %264 : vector<16x128xf32>
    %c123_i32_143 = arith.constant 123 : i32
    %266 = tpu.dynamic_rotate %166 by %c123_i32_143 dim 1 : vector<16x128xf32>, i32 -> vector<16x128xf32>
    %c51 = arith.constant 51 : index
    %c0_144 = arith.constant 0 : index
    %c0_145 = arith.constant 0 : index
    %267 = vector.load %arg2[%c51, %c0_144, %c0_145] : memref<93x16x128xf32, #tpu.memory_space<vmem>>, vector<1x16x128xf32>
    %268 = vector.shape_cast %267 : vector<1x16x128xf32> to vector<16x128xf32>
    %269 = arith.mulf %266, %268 : vector<16x128xf32>
    %270 = arith.addf %265, %269 : vector<16x128xf32>
    %c122_i32_146 = arith.constant 122 : i32
    %271 = tpu.dynamic_rotate %166 by %c122_i32_146 dim 1 : vector<16x128xf32>, i32 -> vector<16x128xf32>
    %c52 = arith.constant 52 : index
    %c0_147 = arith.constant 0 : index
    %c0_148 = arith.constant 0 : index
    %272 = vector.load %arg2[%c52, %c0_147, %c0_148] : memref<93x16x128xf32, #tpu.memory_space<vmem>>, vector<1x16x128xf32>
    %273 = vector.shape_cast %272 : vector<1x16x128xf32> to vector<16x128xf32>
    %274 = arith.mulf %271, %273 : vector<16x128xf32>
    %275 = arith.addf %270, %274 : vector<16x128xf32>
    %c121_i32_149 = arith.constant 121 : i32
    %276 = tpu.dynamic_rotate %166 by %c121_i32_149 dim 1 : vector<16x128xf32>, i32 -> vector<16x128xf32>
    %c53 = arith.constant 53 : index
    %c0_150 = arith.constant 0 : index
    %c0_151 = arith.constant 0 : index
    %277 = vector.load %arg2[%c53, %c0_150, %c0_151] : memref<93x16x128xf32, #tpu.memory_space<vmem>>, vector<1x16x128xf32>
    %278 = vector.shape_cast %277 : vector<1x16x128xf32> to vector<16x128xf32>
    %279 = arith.mulf %276, %278 : vector<16x128xf32>
    %280 = arith.addf %275, %279 : vector<16x128xf32>
    %c120_i32_152 = arith.constant 120 : i32
    %281 = tpu.dynamic_rotate %166 by %c120_i32_152 dim 1 : vector<16x128xf32>, i32 -> vector<16x128xf32>
    %c54 = arith.constant 54 : index
    %c0_153 = arith.constant 0 : index
    %c0_154 = arith.constant 0 : index
    %282 = vector.load %arg2[%c54, %c0_153, %c0_154] : memref<93x16x128xf32, #tpu.memory_space<vmem>>, vector<1x16x128xf32>
    %283 = vector.shape_cast %282 : vector<1x16x128xf32> to vector<16x128xf32>
    %284 = arith.mulf %281, %283 : vector<16x128xf32>
    %285 = arith.addf %280, %284 : vector<16x128xf32>
    %c119_i32_155 = arith.constant 119 : i32
    %286 = tpu.dynamic_rotate %166 by %c119_i32_155 dim 1 : vector<16x128xf32>, i32 -> vector<16x128xf32>
    %c55 = arith.constant 55 : index
    %c0_156 = arith.constant 0 : index
    %c0_157 = arith.constant 0 : index
    %287 = vector.load %arg2[%c55, %c0_156, %c0_157] : memref<93x16x128xf32, #tpu.memory_space<vmem>>, vector<1x16x128xf32>
    %288 = vector.shape_cast %287 : vector<1x16x128xf32> to vector<16x128xf32>
    %289 = arith.mulf %286, %288 : vector<16x128xf32>
    %290 = arith.addf %285, %289 : vector<16x128xf32>
    %c118_i32_158 = arith.constant 118 : i32
    %291 = tpu.dynamic_rotate %166 by %c118_i32_158 dim 1 : vector<16x128xf32>, i32 -> vector<16x128xf32>
    %c56 = arith.constant 56 : index
    %c0_159 = arith.constant 0 : index
    %c0_160 = arith.constant 0 : index
    %292 = vector.load %arg2[%c56, %c0_159, %c0_160] : memref<93x16x128xf32, #tpu.memory_space<vmem>>, vector<1x16x128xf32>
    %293 = vector.shape_cast %292 : vector<1x16x128xf32> to vector<16x128xf32>
    %294 = arith.mulf %291, %293 : vector<16x128xf32>
    %295 = arith.addf %290, %294 : vector<16x128xf32>
    %c117_i32_161 = arith.constant 117 : i32
    %296 = tpu.dynamic_rotate %166 by %c117_i32_161 dim 1 : vector<16x128xf32>, i32 -> vector<16x128xf32>
    %c57 = arith.constant 57 : index
    %c0_162 = arith.constant 0 : index
    %c0_163 = arith.constant 0 : index
    %297 = vector.load %arg2[%c57, %c0_162, %c0_163] : memref<93x16x128xf32, #tpu.memory_space<vmem>>, vector<1x16x128xf32>
    %298 = vector.shape_cast %297 : vector<1x16x128xf32> to vector<16x128xf32>
    %299 = arith.mulf %296, %298 : vector<16x128xf32>
    %300 = arith.addf %295, %299 : vector<16x128xf32>
    %c116_i32_164 = arith.constant 116 : i32
    %301 = tpu.dynamic_rotate %166 by %c116_i32_164 dim 1 : vector<16x128xf32>, i32 -> vector<16x128xf32>
    %c58 = arith.constant 58 : index
    %c0_165 = arith.constant 0 : index
    %c0_166 = arith.constant 0 : index
    %302 = vector.load %arg2[%c58, %c0_165, %c0_166] : memref<93x16x128xf32, #tpu.memory_space<vmem>>, vector<1x16x128xf32>
    %303 = vector.shape_cast %302 : vector<1x16x128xf32> to vector<16x128xf32>
    %304 = arith.mulf %301, %303 : vector<16x128xf32>
    %305 = arith.addf %300, %304 : vector<16x128xf32>
    %c115_i32_167 = arith.constant 115 : i32
    %306 = tpu.dynamic_rotate %166 by %c115_i32_167 dim 1 : vector<16x128xf32>, i32 -> vector<16x128xf32>
    %c59 = arith.constant 59 : index
    %c0_168 = arith.constant 0 : index
    %c0_169 = arith.constant 0 : index
    %307 = vector.load %arg2[%c59, %c0_168, %c0_169] : memref<93x16x128xf32, #tpu.memory_space<vmem>>, vector<1x16x128xf32>
    %308 = vector.shape_cast %307 : vector<1x16x128xf32> to vector<16x128xf32>
    %309 = arith.mulf %306, %308 : vector<16x128xf32>
    %310 = arith.addf %305, %309 : vector<16x128xf32>
    %c114_i32_170 = arith.constant 114 : i32
    %311 = tpu.dynamic_rotate %166 by %c114_i32_170 dim 1 : vector<16x128xf32>, i32 -> vector<16x128xf32>
    %c60 = arith.constant 60 : index
    %c0_171 = arith.constant 0 : index
    %c0_172 = arith.constant 0 : index
    %312 = vector.load %arg2[%c60, %c0_171, %c0_172] : memref<93x16x128xf32, #tpu.memory_space<vmem>>, vector<1x16x128xf32>
    %313 = vector.shape_cast %312 : vector<1x16x128xf32> to vector<16x128xf32>
    %314 = arith.mulf %311, %313 : vector<16x128xf32>
    %315 = arith.addf %310, %314 : vector<16x128xf32>
    %c113_i32_173 = arith.constant 113 : i32
    %316 = tpu.dynamic_rotate %166 by %c113_i32_173 dim 1 : vector<16x128xf32>, i32 -> vector<16x128xf32>
    %c61 = arith.constant 61 : index
    %c0_174 = arith.constant 0 : index
    %c0_175 = arith.constant 0 : index
    %317 = vector.load %arg2[%c61, %c0_174, %c0_175] : memref<93x16x128xf32, #tpu.memory_space<vmem>>, vector<1x16x128xf32>
    %318 = vector.shape_cast %317 : vector<1x16x128xf32> to vector<16x128xf32>
    %319 = arith.mulf %316, %318 : vector<16x128xf32>
    %320 = arith.addf %315, %319 : vector<16x128xf32>
    %c2_176 = arith.constant 2 : index
    %c0_177 = arith.constant 0 : index
    %321 = vector.load %arg9[%c2_176, %c0_177] : memref<18x128xf32, #tpu.memory_space<vmem>>, vector<16x128xf32>
    %c15_i32_178 = arith.constant 15 : i32
    %322 = tpu.dynamic_rotate %321 by %c15_i32_178 dim 1 : vector<16x128xf32>, i32 -> vector<16x128xf32>
    %c62 = arith.constant 62 : index
    %c0_179 = arith.constant 0 : index
    %c0_180 = arith.constant 0 : index
    %323 = vector.load %arg2[%c62, %c0_179, %c0_180] : memref<93x16x128xf32, #tpu.memory_space<vmem>>, vector<1x16x128xf32>
    %324 = vector.shape_cast %323 : vector<1x16x128xf32> to vector<16x128xf32>
    %325 = arith.mulf %322, %324 : vector<16x128xf32>
    %326 = arith.addf %320, %325 : vector<16x128xf32>
    %c14_i32_181 = arith.constant 14 : i32
    %327 = tpu.dynamic_rotate %321 by %c14_i32_181 dim 1 : vector<16x128xf32>, i32 -> vector<16x128xf32>
    %c63 = arith.constant 63 : index
    %c0_182 = arith.constant 0 : index
    %c0_183 = arith.constant 0 : index
    %328 = vector.load %arg2[%c63, %c0_182, %c0_183] : memref<93x16x128xf32, #tpu.memory_space<vmem>>, vector<1x16x128xf32>
    %329 = vector.shape_cast %328 : vector<1x16x128xf32> to vector<16x128xf32>
    %330 = arith.mulf %327, %329 : vector<16x128xf32>
    %331 = arith.addf %326, %330 : vector<16x128xf32>
    %c13_i32_184 = arith.constant 13 : i32
    %332 = tpu.dynamic_rotate %321 by %c13_i32_184 dim 1 : vector<16x128xf32>, i32 -> vector<16x128xf32>
    %c64 = arith.constant 64 : index
    %c0_185 = arith.constant 0 : index
    %c0_186 = arith.constant 0 : index
    %333 = vector.load %arg2[%c64, %c0_185, %c0_186] : memref<93x16x128xf32, #tpu.memory_space<vmem>>, vector<1x16x128xf32>
    %334 = vector.shape_cast %333 : vector<1x16x128xf32> to vector<16x128xf32>
    %335 = arith.mulf %332, %334 : vector<16x128xf32>
    %336 = arith.addf %331, %335 : vector<16x128xf32>
    %c12_i32_187 = arith.constant 12 : i32
    %337 = tpu.dynamic_rotate %321 by %c12_i32_187 dim 1 : vector<16x128xf32>, i32 -> vector<16x128xf32>
    %c65 = arith.constant 65 : index
    %c0_188 = arith.constant 0 : index
    %c0_189 = arith.constant 0 : index
    %338 = vector.load %arg2[%c65, %c0_188, %c0_189] : memref<93x16x128xf32, #tpu.memory_space<vmem>>, vector<1x16x128xf32>
    %339 = vector.shape_cast %338 : vector<1x16x128xf32> to vector<16x128xf32>
    %340 = arith.mulf %337, %339 : vector<16x128xf32>
    %341 = arith.addf %336, %340 : vector<16x128xf32>
    %c11_i32_190 = arith.constant 11 : i32
    %342 = tpu.dynamic_rotate %321 by %c11_i32_190 dim 1 : vector<16x128xf32>, i32 -> vector<16x128xf32>
    %c66 = arith.constant 66 : index
    %c0_191 = arith.constant 0 : index
    %c0_192 = arith.constant 0 : index
    %343 = vector.load %arg2[%c66, %c0_191, %c0_192] : memref<93x16x128xf32, #tpu.memory_space<vmem>>, vector<1x16x128xf32>
    %344 = vector.shape_cast %343 : vector<1x16x128xf32> to vector<16x128xf32>
    %345 = arith.mulf %342, %344 : vector<16x128xf32>
    %346 = arith.addf %341, %345 : vector<16x128xf32>
    %c10_i32_193 = arith.constant 10 : i32
    %347 = tpu.dynamic_rotate %321 by %c10_i32_193 dim 1 : vector<16x128xf32>, i32 -> vector<16x128xf32>
    %c67 = arith.constant 67 : index
    %c0_194 = arith.constant 0 : index
    %c0_195 = arith.constant 0 : index
    %348 = vector.load %arg2[%c67, %c0_194, %c0_195] : memref<93x16x128xf32, #tpu.memory_space<vmem>>, vector<1x16x128xf32>
    %349 = vector.shape_cast %348 : vector<1x16x128xf32> to vector<16x128xf32>
    %350 = arith.mulf %347, %349 : vector<16x128xf32>
    %351 = arith.addf %346, %350 : vector<16x128xf32>
    %c9_i32_196 = arith.constant 9 : i32
    %352 = tpu.dynamic_rotate %321 by %c9_i32_196 dim 1 : vector<16x128xf32>, i32 -> vector<16x128xf32>
    %c68 = arith.constant 68 : index
    %c0_197 = arith.constant 0 : index
    %c0_198 = arith.constant 0 : index
    %353 = vector.load %arg2[%c68, %c0_197, %c0_198] : memref<93x16x128xf32, #tpu.memory_space<vmem>>, vector<1x16x128xf32>
    %354 = vector.shape_cast %353 : vector<1x16x128xf32> to vector<16x128xf32>
    %355 = arith.mulf %352, %354 : vector<16x128xf32>
    %356 = arith.addf %351, %355 : vector<16x128xf32>
    %c8_i32_199 = arith.constant 8 : i32
    %357 = tpu.dynamic_rotate %321 by %c8_i32_199 dim 1 : vector<16x128xf32>, i32 -> vector<16x128xf32>
    %c69 = arith.constant 69 : index
    %c0_200 = arith.constant 0 : index
    %c0_201 = arith.constant 0 : index
    %358 = vector.load %arg2[%c69, %c0_200, %c0_201] : memref<93x16x128xf32, #tpu.memory_space<vmem>>, vector<1x16x128xf32>
    %359 = vector.shape_cast %358 : vector<1x16x128xf32> to vector<16x128xf32>
    %360 = arith.mulf %357, %359 : vector<16x128xf32>
    %361 = arith.addf %356, %360 : vector<16x128xf32>
    %c7_i32_202 = arith.constant 7 : i32
    %362 = tpu.dynamic_rotate %321 by %c7_i32_202 dim 1 : vector<16x128xf32>, i32 -> vector<16x128xf32>
    %c70 = arith.constant 70 : index
    %c0_203 = arith.constant 0 : index
    %c0_204 = arith.constant 0 : index
    %363 = vector.load %arg2[%c70, %c0_203, %c0_204] : memref<93x16x128xf32, #tpu.memory_space<vmem>>, vector<1x16x128xf32>
    %364 = vector.shape_cast %363 : vector<1x16x128xf32> to vector<16x128xf32>
    %365 = arith.mulf %362, %364 : vector<16x128xf32>
    %366 = arith.addf %361, %365 : vector<16x128xf32>
    %c6_i32_205 = arith.constant 6 : i32
    %367 = tpu.dynamic_rotate %321 by %c6_i32_205 dim 1 : vector<16x128xf32>, i32 -> vector<16x128xf32>
    %c71 = arith.constant 71 : index
    %c0_206 = arith.constant 0 : index
    %c0_207 = arith.constant 0 : index
    %368 = vector.load %arg2[%c71, %c0_206, %c0_207] : memref<93x16x128xf32, #tpu.memory_space<vmem>>, vector<1x16x128xf32>
    %369 = vector.shape_cast %368 : vector<1x16x128xf32> to vector<16x128xf32>
    %370 = arith.mulf %367, %369 : vector<16x128xf32>
    %371 = arith.addf %366, %370 : vector<16x128xf32>
    %c5_i32_208 = arith.constant 5 : i32
    %372 = tpu.dynamic_rotate %321 by %c5_i32_208 dim 1 : vector<16x128xf32>, i32 -> vector<16x128xf32>
    %c72 = arith.constant 72 : index
    %c0_209 = arith.constant 0 : index
    %c0_210 = arith.constant 0 : index
    %373 = vector.load %arg2[%c72, %c0_209, %c0_210] : memref<93x16x128xf32, #tpu.memory_space<vmem>>, vector<1x16x128xf32>
    %374 = vector.shape_cast %373 : vector<1x16x128xf32> to vector<16x128xf32>
    %375 = arith.mulf %372, %374 : vector<16x128xf32>
    %376 = arith.addf %371, %375 : vector<16x128xf32>
    %c4_i32_211 = arith.constant 4 : i32
    %377 = tpu.dynamic_rotate %321 by %c4_i32_211 dim 1 : vector<16x128xf32>, i32 -> vector<16x128xf32>
    %c73 = arith.constant 73 : index
    %c0_212 = arith.constant 0 : index
    %c0_213 = arith.constant 0 : index
    %378 = vector.load %arg2[%c73, %c0_212, %c0_213] : memref<93x16x128xf32, #tpu.memory_space<vmem>>, vector<1x16x128xf32>
    %379 = vector.shape_cast %378 : vector<1x16x128xf32> to vector<16x128xf32>
    %380 = arith.mulf %377, %379 : vector<16x128xf32>
    %381 = arith.addf %376, %380 : vector<16x128xf32>
    %c3_i32_214 = arith.constant 3 : i32
    %382 = tpu.dynamic_rotate %321 by %c3_i32_214 dim 1 : vector<16x128xf32>, i32 -> vector<16x128xf32>
    %c74 = arith.constant 74 : index
    %c0_215 = arith.constant 0 : index
    %c0_216 = arith.constant 0 : index
    %383 = vector.load %arg2[%c74, %c0_215, %c0_216] : memref<93x16x128xf32, #tpu.memory_space<vmem>>, vector<1x16x128xf32>
    %384 = vector.shape_cast %383 : vector<1x16x128xf32> to vector<16x128xf32>
    %385 = arith.mulf %382, %384 : vector<16x128xf32>
    %386 = arith.addf %381, %385 : vector<16x128xf32>
    %c2_i32_217 = arith.constant 2 : i32
    %387 = tpu.dynamic_rotate %321 by %c2_i32_217 dim 1 : vector<16x128xf32>, i32 -> vector<16x128xf32>
    %c75 = arith.constant 75 : index
    %c0_218 = arith.constant 0 : index
    %c0_219 = arith.constant 0 : index
    %388 = vector.load %arg2[%c75, %c0_218, %c0_219] : memref<93x16x128xf32, #tpu.memory_space<vmem>>, vector<1x16x128xf32>
    %389 = vector.shape_cast %388 : vector<1x16x128xf32> to vector<16x128xf32>
    %390 = arith.mulf %387, %389 : vector<16x128xf32>
    %391 = arith.addf %386, %390 : vector<16x128xf32>
    %c1_i32_220 = arith.constant 1 : i32
    %392 = tpu.dynamic_rotate %321 by %c1_i32_220 dim 1 : vector<16x128xf32>, i32 -> vector<16x128xf32>
    %c76 = arith.constant 76 : index
    %c0_221 = arith.constant 0 : index
    %c0_222 = arith.constant 0 : index
    %393 = vector.load %arg2[%c76, %c0_221, %c0_222] : memref<93x16x128xf32, #tpu.memory_space<vmem>>, vector<1x16x128xf32>
    %394 = vector.shape_cast %393 : vector<1x16x128xf32> to vector<16x128xf32>
    %395 = arith.mulf %392, %394 : vector<16x128xf32>
    %396 = arith.addf %391, %395 : vector<16x128xf32>
    %c77 = arith.constant 77 : index
    %c0_223 = arith.constant 0 : index
    %c0_224 = arith.constant 0 : index
    %397 = vector.load %arg2[%c77, %c0_223, %c0_224] : memref<93x16x128xf32, #tpu.memory_space<vmem>>, vector<1x16x128xf32>
    %398 = vector.shape_cast %397 : vector<1x16x128xf32> to vector<16x128xf32>
    %399 = arith.mulf %321, %398 : vector<16x128xf32>
    %400 = arith.addf %396, %399 : vector<16x128xf32>
    %c127_i32_225 = arith.constant 127 : i32
    %401 = tpu.dynamic_rotate %321 by %c127_i32_225 dim 1 : vector<16x128xf32>, i32 -> vector<16x128xf32>
    %c78 = arith.constant 78 : index
    %c0_226 = arith.constant 0 : index
    %c0_227 = arith.constant 0 : index
    %402 = vector.load %arg2[%c78, %c0_226, %c0_227] : memref<93x16x128xf32, #tpu.memory_space<vmem>>, vector<1x16x128xf32>
    %403 = vector.shape_cast %402 : vector<1x16x128xf32> to vector<16x128xf32>
    %404 = arith.mulf %401, %403 : vector<16x128xf32>
    %405 = arith.addf %400, %404 : vector<16x128xf32>
    %c126_i32_228 = arith.constant 126 : i32
    %406 = tpu.dynamic_rotate %321 by %c126_i32_228 dim 1 : vector<16x128xf32>, i32 -> vector<16x128xf32>
    %c79 = arith.constant 79 : index
    %c0_229 = arith.constant 0 : index
    %c0_230 = arith.constant 0 : index
    %407 = vector.load %arg2[%c79, %c0_229, %c0_230] : memref<93x16x128xf32, #tpu.memory_space<vmem>>, vector<1x16x128xf32>
    %408 = vector.shape_cast %407 : vector<1x16x128xf32> to vector<16x128xf32>
    %409 = arith.mulf %406, %408 : vector<16x128xf32>
    %410 = arith.addf %405, %409 : vector<16x128xf32>
    %c125_i32_231 = arith.constant 125 : i32
    %411 = tpu.dynamic_rotate %321 by %c125_i32_231 dim 1 : vector<16x128xf32>, i32 -> vector<16x128xf32>
    %c80 = arith.constant 80 : index
    %c0_232 = arith.constant 0 : index
    %c0_233 = arith.constant 0 : index
    %412 = vector.load %arg2[%c80, %c0_232, %c0_233] : memref<93x16x128xf32, #tpu.memory_space<vmem>>, vector<1x16x128xf32>
    %413 = vector.shape_cast %412 : vector<1x16x128xf32> to vector<16x128xf32>
    %414 = arith.mulf %411, %413 : vector<16x128xf32>
    %415 = arith.addf %410, %414 : vector<16x128xf32>
    %c124_i32_234 = arith.constant 124 : i32
    %416 = tpu.dynamic_rotate %321 by %c124_i32_234 dim 1 : vector<16x128xf32>, i32 -> vector<16x128xf32>
    %c81 = arith.constant 81 : index
    %c0_235 = arith.constant 0 : index
    %c0_236 = arith.constant 0 : index
    %417 = vector.load %arg2[%c81, %c0_235, %c0_236] : memref<93x16x128xf32, #tpu.memory_space<vmem>>, vector<1x16x128xf32>
    %418 = vector.shape_cast %417 : vector<1x16x128xf32> to vector<16x128xf32>
    %419 = arith.mulf %416, %418 : vector<16x128xf32>
    %420 = arith.addf %415, %419 : vector<16x128xf32>
    %c123_i32_237 = arith.constant 123 : i32
    %421 = tpu.dynamic_rotate %321 by %c123_i32_237 dim 1 : vector<16x128xf32>, i32 -> vector<16x128xf32>
    %c82 = arith.constant 82 : index
    %c0_238 = arith.constant 0 : index
    %c0_239 = arith.constant 0 : index
    %422 = vector.load %arg2[%c82, %c0_238, %c0_239] : memref<93x16x128xf32, #tpu.memory_space<vmem>>, vector<1x16x128xf32>
    %423 = vector.shape_cast %422 : vector<1x16x128xf32> to vector<16x128xf32>
    %424 = arith.mulf %421, %423 : vector<16x128xf32>
    %425 = arith.addf %420, %424 : vector<16x128xf32>
    %c122_i32_240 = arith.constant 122 : i32
    %426 = tpu.dynamic_rotate %321 by %c122_i32_240 dim 1 : vector<16x128xf32>, i32 -> vector<16x128xf32>
    %c83 = arith.constant 83 : index
    %c0_241 = arith.constant 0 : index
    %c0_242 = arith.constant 0 : index
    %427 = vector.load %arg2[%c83, %c0_241, %c0_242] : memref<93x16x128xf32, #tpu.memory_space<vmem>>, vector<1x16x128xf32>
    %428 = vector.shape_cast %427 : vector<1x16x128xf32> to vector<16x128xf32>
    %429 = arith.mulf %426, %428 : vector<16x128xf32>
    %430 = arith.addf %425, %429 : vector<16x128xf32>
    %c121_i32_243 = arith.constant 121 : i32
    %431 = tpu.dynamic_rotate %321 by %c121_i32_243 dim 1 : vector<16x128xf32>, i32 -> vector<16x128xf32>
    %c84 = arith.constant 84 : index
    %c0_244 = arith.constant 0 : index
    %c0_245 = arith.constant 0 : index
    %432 = vector.load %arg2[%c84, %c0_244, %c0_245] : memref<93x16x128xf32, #tpu.memory_space<vmem>>, vector<1x16x128xf32>
    %433 = vector.shape_cast %432 : vector<1x16x128xf32> to vector<16x128xf32>
    %434 = arith.mulf %431, %433 : vector<16x128xf32>
    %435 = arith.addf %430, %434 : vector<16x128xf32>
    %c120_i32_246 = arith.constant 120 : i32
    %436 = tpu.dynamic_rotate %321 by %c120_i32_246 dim 1 : vector<16x128xf32>, i32 -> vector<16x128xf32>
    %c85 = arith.constant 85 : index
    %c0_247 = arith.constant 0 : index
    %c0_248 = arith.constant 0 : index
    %437 = vector.load %arg2[%c85, %c0_247, %c0_248] : memref<93x16x128xf32, #tpu.memory_space<vmem>>, vector<1x16x128xf32>
    %438 = vector.shape_cast %437 : vector<1x16x128xf32> to vector<16x128xf32>
    %439 = arith.mulf %436, %438 : vector<16x128xf32>
    %440 = arith.addf %435, %439 : vector<16x128xf32>
    %c119_i32_249 = arith.constant 119 : i32
    %441 = tpu.dynamic_rotate %321 by %c119_i32_249 dim 1 : vector<16x128xf32>, i32 -> vector<16x128xf32>
    %c86 = arith.constant 86 : index
    %c0_250 = arith.constant 0 : index
    %c0_251 = arith.constant 0 : index
    %442 = vector.load %arg2[%c86, %c0_250, %c0_251] : memref<93x16x128xf32, #tpu.memory_space<vmem>>, vector<1x16x128xf32>
    %443 = vector.shape_cast %442 : vector<1x16x128xf32> to vector<16x128xf32>
    %444 = arith.mulf %441, %443 : vector<16x128xf32>
    %445 = arith.addf %440, %444 : vector<16x128xf32>
    %c118_i32_252 = arith.constant 118 : i32
    %446 = tpu.dynamic_rotate %321 by %c118_i32_252 dim 1 : vector<16x128xf32>, i32 -> vector<16x128xf32>
    %c87 = arith.constant 87 : index
    %c0_253 = arith.constant 0 : index
    %c0_254 = arith.constant 0 : index
    %447 = vector.load %arg2[%c87, %c0_253, %c0_254] : memref<93x16x128xf32, #tpu.memory_space<vmem>>, vector<1x16x128xf32>
    %448 = vector.shape_cast %447 : vector<1x16x128xf32> to vector<16x128xf32>
    %449 = arith.mulf %446, %448 : vector<16x128xf32>
    %450 = arith.addf %445, %449 : vector<16x128xf32>
    %c117_i32_255 = arith.constant 117 : i32
    %451 = tpu.dynamic_rotate %321 by %c117_i32_255 dim 1 : vector<16x128xf32>, i32 -> vector<16x128xf32>
    %c88 = arith.constant 88 : index
    %c0_256 = arith.constant 0 : index
    %c0_257 = arith.constant 0 : index
    %452 = vector.load %arg2[%c88, %c0_256, %c0_257] : memref<93x16x128xf32, #tpu.memory_space<vmem>>, vector<1x16x128xf32>
    %453 = vector.shape_cast %452 : vector<1x16x128xf32> to vector<16x128xf32>
    %454 = arith.mulf %451, %453 : vector<16x128xf32>
    %455 = arith.addf %450, %454 : vector<16x128xf32>
    %c116_i32_258 = arith.constant 116 : i32
    %456 = tpu.dynamic_rotate %321 by %c116_i32_258 dim 1 : vector<16x128xf32>, i32 -> vector<16x128xf32>
    %c89 = arith.constant 89 : index
    %c0_259 = arith.constant 0 : index
    %c0_260 = arith.constant 0 : index
    %457 = vector.load %arg2[%c89, %c0_259, %c0_260] : memref<93x16x128xf32, #tpu.memory_space<vmem>>, vector<1x16x128xf32>
    %458 = vector.shape_cast %457 : vector<1x16x128xf32> to vector<16x128xf32>
    %459 = arith.mulf %456, %458 : vector<16x128xf32>
    %460 = arith.addf %455, %459 : vector<16x128xf32>
    %c115_i32_261 = arith.constant 115 : i32
    %461 = tpu.dynamic_rotate %321 by %c115_i32_261 dim 1 : vector<16x128xf32>, i32 -> vector<16x128xf32>
    %c90 = arith.constant 90 : index
    %c0_262 = arith.constant 0 : index
    %c0_263 = arith.constant 0 : index
    %462 = vector.load %arg2[%c90, %c0_262, %c0_263] : memref<93x16x128xf32, #tpu.memory_space<vmem>>, vector<1x16x128xf32>
    %463 = vector.shape_cast %462 : vector<1x16x128xf32> to vector<16x128xf32>
    %464 = arith.mulf %461, %463 : vector<16x128xf32>
    %465 = arith.addf %460, %464 : vector<16x128xf32>
    %c114_i32_264 = arith.constant 114 : i32
    %466 = tpu.dynamic_rotate %321 by %c114_i32_264 dim 1 : vector<16x128xf32>, i32 -> vector<16x128xf32>
    %c91 = arith.constant 91 : index
    %c0_265 = arith.constant 0 : index
    %c0_266 = arith.constant 0 : index
    %467 = vector.load %arg2[%c91, %c0_265, %c0_266] : memref<93x16x128xf32, #tpu.memory_space<vmem>>, vector<1x16x128xf32>
    %468 = vector.shape_cast %467 : vector<1x16x128xf32> to vector<16x128xf32>
    %469 = arith.mulf %466, %468 : vector<16x128xf32>
    %470 = arith.addf %465, %469 : vector<16x128xf32>
    %c113_i32_267 = arith.constant 113 : i32
    %471 = tpu.dynamic_rotate %321 by %c113_i32_267 dim 1 : vector<16x128xf32>, i32 -> vector<16x128xf32>
    %c92 = arith.constant 92 : index
    %c0_268 = arith.constant 0 : index
    %c0_269 = arith.constant 0 : index
    %472 = vector.load %arg2[%c92, %c0_268, %c0_269] : memref<93x16x128xf32, #tpu.memory_space<vmem>>, vector<1x16x128xf32>
    %473 = vector.shape_cast %472 : vector<1x16x128xf32> to vector<16x128xf32>
    %474 = arith.mulf %471, %473 : vector<16x128xf32>
    %475 = arith.addf %470, %474 : vector<16x128xf32>
    %476 = arith.mulf %475, %3 : vector<16x128xf32>
    %477 = arith.addf %476, %4 : vector<16x128xf32>
    %cst_270 = arith.constant 0.000000e+00 : f32
    %478 = vector.broadcast %cst_270 : f32 to vector<16x128xf32>
    %479 = arith.cmpf ogt, %477, %478 : vector<16x128xf32>
    %cst_271 = arith.constant 0.00999999977 : f32
    %480 = vector.broadcast %cst_271 : f32 to vector<16x128xf32>
    %481 = arith.mulf %480, %477 : vector<16x128xf32>
    %482 = arith.select %479, %477, %481 : vector<16x128xi1>, vector<16x128xf32>
    %c1_272 = arith.constant 1 : index
    %c0_273 = arith.constant 0 : index
    %483 = vector.load %arg9[%c1_272, %c0_273] : memref<18x128xf32, #tpu.memory_space<vmem>>, vector<16x128xf32>
    tpu.vector_store %arg9[%c1_272, %c0_273], %482 {strides = array<i32>} : memref<18x128xf32, #tpu.memory_space<vmem>>, vector<16x128xf32>,
    %cst_274 = arith.constant 0.000000e+00 : f32
    %484 = vector.broadcast %cst_274 : f32 to vector<16x128xf32>
    %c0_275 = arith.constant 0 : index
    %c0_276 = arith.constant 0 : index
    %485 = vector.load %arg9[%c0_275, %c0_276] : memref<18x128xf32, #tpu.memory_space<vmem>>, vector<16x128xf32>
    %c15_i32_277 = arith.constant 15 : i32
    %486 = tpu.dynamic_rotate %485 by %c15_i32_277 dim 1 : vector<16x128xf32>, i32 -> vector<16x128xf32>
    %c0_278 = arith.constant 0 : index
    %c0_279 = arith.constant 0 : index
    %c0_280 = arith.constant 0 : index
    %487 = vector.load %arg5[%c0_278, %c0_279, %c0_280] : memref<93x16x128xf32, #tpu.memory_space<vmem>>, vector<1x16x128xf32>
    %488 = vector.shape_cast %487 : vector<1x16x128xf32> to vector<16x128xf32>
    %489 = arith.mulf %486, %488 : vector<16x128xf32>
    %490 = arith.addf %484, %489 : vector<16x128xf32>
    %c14_i32_281 = arith.constant 14 : i32
    %491 = tpu.dynamic_rotate %485 by %c14_i32_281 dim 1 : vector<16x128xf32>, i32 -> vector<16x128xf32>
    %c1_282 = arith.constant 1 : index
    %c0_283 = arith.constant 0 : index
    %c0_284 = arith.constant 0 : index
    %492 = vector.load %arg5[%c1_282, %c0_283, %c0_284] : memref<93x16x128xf32, #tpu.memory_space<vmem>>, vector<1x16x128xf32>
    %493 = vector.shape_cast %492 : vector<1x16x128xf32> to vector<16x128xf32>
    %494 = arith.mulf %491, %493 : vector<16x128xf32>
    %495 = arith.addf %490, %494 : vector<16x128xf32>
    %c13_i32_285 = arith.constant 13 : i32
    %496 = tpu.dynamic_rotate %485 by %c13_i32_285 dim 1 : vector<16x128xf32>, i32 -> vector<16x128xf32>
    %c2_286 = arith.constant 2 : index
    %c0_287 = arith.constant 0 : index
    %c0_288 = arith.constant 0 : index
    %497 = vector.load %arg5[%c2_286, %c0_287, %c0_288] : memref<93x16x128xf32, #tpu.memory_space<vmem>>, vector<1x16x128xf32>
    %498 = vector.shape_cast %497 : vector<1x16x128xf32> to vector<16x128xf32>
    %499 = arith.mulf %496, %498 : vector<16x128xf32>
    %500 = arith.addf %495, %499 : vector<16x128xf32>
    %c12_i32_289 = arith.constant 12 : i32
    %501 = tpu.dynamic_rotate %485 by %c12_i32_289 dim 1 : vector<16x128xf32>, i32 -> vector<16x128xf32>
    %c3_290 = arith.constant 3 : index
    %c0_291 = arith.constant 0 : index
    %c0_292 = arith.constant 0 : index
    %502 = vector.load %arg5[%c3_290, %c0_291, %c0_292] : memref<93x16x128xf32, #tpu.memory_space<vmem>>, vector<1x16x128xf32>
    %503 = vector.shape_cast %502 : vector<1x16x128xf32> to vector<16x128xf32>
    %504 = arith.mulf %501, %503 : vector<16x128xf32>
    %505 = arith.addf %500, %504 : vector<16x128xf32>
    %c11_i32_293 = arith.constant 11 : i32
    %506 = tpu.dynamic_rotate %485 by %c11_i32_293 dim 1 : vector<16x128xf32>, i32 -> vector<16x128xf32>
    %c4_294 = arith.constant 4 : index
    %c0_295 = arith.constant 0 : index
    %c0_296 = arith.constant 0 : index
    %507 = vector.load %arg5[%c4_294, %c0_295, %c0_296] : memref<93x16x128xf32, #tpu.memory_space<vmem>>, vector<1x16x128xf32>
    %508 = vector.shape_cast %507 : vector<1x16x128xf32> to vector<16x128xf32>
    %509 = arith.mulf %506, %508 : vector<16x128xf32>
    %510 = arith.addf %505, %509 : vector<16x128xf32>
    %c10_i32_297 = arith.constant 10 : i32
    %511 = tpu.dynamic_rotate %485 by %c10_i32_297 dim 1 : vector<16x128xf32>, i32 -> vector<16x128xf32>
    %c5_298 = arith.constant 5 : index
    %c0_299 = arith.constant 0 : index
    %c0_300 = arith.constant 0 : index
    %512 = vector.load %arg5[%c5_298, %c0_299, %c0_300] : memref<93x16x128xf32, #tpu.memory_space<vmem>>, vector<1x16x128xf32>
    %513 = vector.shape_cast %512 : vector<1x16x128xf32> to vector<16x128xf32>
    %514 = arith.mulf %511, %513 : vector<16x128xf32>
    %515 = arith.addf %510, %514 : vector<16x128xf32>
    %c9_i32_301 = arith.constant 9 : i32
    %516 = tpu.dynamic_rotate %485 by %c9_i32_301 dim 1 : vector<16x128xf32>, i32 -> vector<16x128xf32>
    %c6_302 = arith.constant 6 : index
    %c0_303 = arith.constant 0 : index
    %c0_304 = arith.constant 0 : index
    %517 = vector.load %arg5[%c6_302, %c0_303, %c0_304] : memref<93x16x128xf32, #tpu.memory_space<vmem>>, vector<1x16x128xf32>
    %518 = vector.shape_cast %517 : vector<1x16x128xf32> to vector<16x128xf32>
    %519 = arith.mulf %516, %518 : vector<16x128xf32>
    %520 = arith.addf %515, %519 : vector<16x128xf32>
    %c8_i32_305 = arith.constant 8 : i32
    %521 = tpu.dynamic_rotate %485 by %c8_i32_305 dim 1 : vector<16x128xf32>, i32 -> vector<16x128xf32>
    %c7_306 = arith.constant 7 : index
    %c0_307 = arith.constant 0 : index
    %c0_308 = arith.constant 0 : index
    %522 = vector.load %arg5[%c7_306, %c0_307, %c0_308] : memref<93x16x128xf32, #tpu.memory_space<vmem>>, vector<1x16x128xf32>
    %523 = vector.shape_cast %522 : vector<1x16x128xf32> to vector<16x128xf32>
    %524 = arith.mulf %521, %523 : vector<16x128xf32>
    %525 = arith.addf %520, %524 : vector<16x128xf32>
    %c7_i32_309 = arith.constant 7 : i32
    %526 = tpu.dynamic_rotate %485 by %c7_i32_309 dim 1 : vector<16x128xf32>, i32 -> vector<16x128xf32>
    %c8_310 = arith.constant 8 : index
    %c0_311 = arith.constant 0 : index
    %c0_312 = arith.constant 0 : index
    %527 = vector.load %arg5[%c8_310, %c0_311, %c0_312] : memref<93x16x128xf32, #tpu.memory_space<vmem>>, vector<1x16x128xf32>
    %528 = vector.shape_cast %527 : vector<1x16x128xf32> to vector<16x128xf32>
    %529 = arith.mulf %526, %528 : vector<16x128xf32>
    %530 = arith.addf %525, %529 : vector<16x128xf32>
    %c6_i32_313 = arith.constant 6 : i32
    %531 = tpu.dynamic_rotate %485 by %c6_i32_313 dim 1 : vector<16x128xf32>, i32 -> vector<16x128xf32>
    %c9_314 = arith.constant 9 : index
    %c0_315 = arith.constant 0 : index
    %c0_316 = arith.constant 0 : index
    %532 = vector.load %arg5[%c9_314, %c0_315, %c0_316] : memref<93x16x128xf32, #tpu.memory_space<vmem>>, vector<1x16x128xf32>
    %533 = vector.shape_cast %532 : vector<1x16x128xf32> to vector<16x128xf32>
    %534 = arith.mulf %531, %533 : vector<16x128xf32>
    %535 = arith.addf %530, %534 : vector<16x128xf32>
    %c5_i32_317 = arith.constant 5 : i32
    %536 = tpu.dynamic_rotate %485 by %c5_i32_317 dim 1 : vector<16x128xf32>, i32 -> vector<16x128xf32>
    %c10_318 = arith.constant 10 : index
    %c0_319 = arith.constant 0 : index
    %c0_320 = arith.constant 0 : index
    %537 = vector.load %arg5[%c10_318, %c0_319, %c0_320] : memref<93x16x128xf32, #tpu.memory_space<vmem>>, vector<1x16x128xf32>
    %538 = vector.shape_cast %537 : vector<1x16x128xf32> to vector<16x128xf32>
    %539 = arith.mulf %536, %538 : vector<16x128xf32>
    %540 = arith.addf %535, %539 : vector<16x128xf32>
    %c4_i32_321 = arith.constant 4 : i32
    %541 = tpu.dynamic_rotate %485 by %c4_i32_321 dim 1 : vector<16x128xf32>, i32 -> vector<16x128xf32>
    %c11_322 = arith.constant 11 : index
    %c0_323 = arith.constant 0 : index
    %c0_324 = arith.constant 0 : index
    %542 = vector.load %arg5[%c11_322, %c0_323, %c0_324] : memref<93x16x128xf32, #tpu.memory_space<vmem>>, vector<1x16x128xf32>
    %543 = vector.shape_cast %542 : vector<1x16x128xf32> to vector<16x128xf32>
    %544 = arith.mulf %541, %543 : vector<16x128xf32>
    %545 = arith.addf %540, %544 : vector<16x128xf32>
    %c3_i32_325 = arith.constant 3 : i32
    %546 = tpu.dynamic_rotate %485 by %c3_i32_325 dim 1 : vector<16x128xf32>, i32 -> vector<16x128xf32>
    %c12_326 = arith.constant 12 : index
    %c0_327 = arith.constant 0 : index
    %c0_328 = arith.constant 0 : index
    %547 = vector.load %arg5[%c12_326, %c0_327, %c0_328] : memref<93x16x128xf32, #tpu.memory_space<vmem>>, vector<1x16x128xf32>
    %548 = vector.shape_cast %547 : vector<1x16x128xf32> to vector<16x128xf32>
    %549 = arith.mulf %546, %548 : vector<16x128xf32>
    %550 = arith.addf %545, %549 : vector<16x128xf32>
    %c2_i32_329 = arith.constant 2 : i32
    %551 = tpu.dynamic_rotate %485 by %c2_i32_329 dim 1 : vector<16x128xf32>, i32 -> vector<16x128xf32>
    %c13_330 = arith.constant 13 : index
    %c0_331 = arith.constant 0 : index
    %c0_332 = arith.constant 0 : index
    %552 = vector.load %arg5[%c13_330, %c0_331, %c0_332] : memref<93x16x128xf32, #tpu.memory_space<vmem>>, vector<1x16x128xf32>
    %553 = vector.shape_cast %552 : vector<1x16x128xf32> to vector<16x128xf32>
    %554 = arith.mulf %551, %553 : vector<16x128xf32>
    %555 = arith.addf %550, %554 : vector<16x128xf32>
    %c1_i32_333 = arith.constant 1 : i32
    %556 = tpu.dynamic_rotate %485 by %c1_i32_333 dim 1 : vector<16x128xf32>, i32 -> vector<16x128xf32>
    %c14_334 = arith.constant 14 : index
    %c0_335 = arith.constant 0 : index
    %c0_336 = arith.constant 0 : index
    %557 = vector.load %arg5[%c14_334, %c0_335, %c0_336] : memref<93x16x128xf32, #tpu.memory_space<vmem>>, vector<1x16x128xf32>
    %558 = vector.shape_cast %557 : vector<1x16x128xf32> to vector<16x128xf32>
    %559 = arith.mulf %556, %558 : vector<16x128xf32>
    %560 = arith.addf %555, %559 : vector<16x128xf32>
    %c15_337 = arith.constant 15 : index
    %c0_338 = arith.constant 0 : index
    %c0_339 = arith.constant 0 : index
    %561 = vector.load %arg5[%c15_337, %c0_338, %c0_339] : memref<93x16x128xf32, #tpu.memory_space<vmem>>, vector<1x16x128xf32>
    %562 = vector.shape_cast %561 : vector<1x16x128xf32> to vector<16x128xf32>
    %563 = arith.mulf %485, %562 : vector<16x128xf32>
    %564 = arith.addf %560, %563 : vector<16x128xf32>
    %c127_i32_340 = arith.constant 127 : i32
    %565 = tpu.dynamic_rotate %485 by %c127_i32_340 dim 1 : vector<16x128xf32>, i32 -> vector<16x128xf32>
    %c16_341 = arith.constant 16 : index
    %c0_342 = arith.constant 0 : index
    %c0_343 = arith.constant 0 : index
    %566 = vector.load %arg5[%c16_341, %c0_342, %c0_343] : memref<93x16x128xf32, #tpu.memory_space<vmem>>, vector<1x16x128xf32>
    %567 = vector.shape_cast %566 : vector<1x16x128xf32> to vector<16x128xf32>
    %568 = arith.mulf %565, %567 : vector<16x128xf32>
    %569 = arith.addf %564, %568 : vector<16x128xf32>
    %c126_i32_344 = arith.constant 126 : i32
    %570 = tpu.dynamic_rotate %485 by %c126_i32_344 dim 1 : vector<16x128xf32>, i32 -> vector<16x128xf32>
    %c17_345 = arith.constant 17 : index
    %c0_346 = arith.constant 0 : index
    %c0_347 = arith.constant 0 : index
    %571 = vector.load %arg5[%c17_345, %c0_346, %c0_347] : memref<93x16x128xf32, #tpu.memory_space<vmem>>, vector<1x16x128xf32>
    %572 = vector.shape_cast %571 : vector<1x16x128xf32> to vector<16x128xf32>
    %573 = arith.mulf %570, %572 : vector<16x128xf32>
    %574 = arith.addf %569, %573 : vector<16x128xf32>
    %c125_i32_348 = arith.constant 125 : i32
    %575 = tpu.dynamic_rotate %485 by %c125_i32_348 dim 1 : vector<16x128xf32>, i32 -> vector<16x128xf32>
    %c18_349 = arith.constant 18 : index
    %c0_350 = arith.constant 0 : index
    %c0_351 = arith.constant 0 : index
    %576 = vector.load %arg5[%c18_349, %c0_350, %c0_351] : memref<93x16x128xf32, #tpu.memory_space<vmem>>, vector<1x16x128xf32>
    %577 = vector.shape_cast %576 : vector<1x16x128xf32> to vector<16x128xf32>
    %578 = arith.mulf %575, %577 : vector<16x128xf32>
    %579 = arith.addf %574, %578 : vector<16x128xf32>
    %c124_i32_352 = arith.constant 124 : i32
    %580 = tpu.dynamic_rotate %485 by %c124_i32_352 dim 1 : vector<16x128xf32>, i32 -> vector<16x128xf32>
    %c19_353 = arith.constant 19 : index
    %c0_354 = arith.constant 0 : index
    %c0_355 = arith.constant 0 : index
    %581 = vector.load %arg5[%c19_353, %c0_354, %c0_355] : memref<93x16x128xf32, #tpu.memory_space<vmem>>, vector<1x16x128xf32>
    %582 = vector.shape_cast %581 : vector<1x16x128xf32> to vector<16x128xf32>
    %583 = arith.mulf %580, %582 : vector<16x128xf32>
    %584 = arith.addf %579, %583 : vector<16x128xf32>
    %c123_i32_356 = arith.constant 123 : i32
    %585 = tpu.dynamic_rotate %485 by %c123_i32_356 dim 1 : vector<16x128xf32>, i32 -> vector<16x128xf32>
    %c20_357 = arith.constant 20 : index
    %c0_358 = arith.constant 0 : index
    %c0_359 = arith.constant 0 : index
    %586 = vector.load %arg5[%c20_357, %c0_358, %c0_359] : memref<93x16x128xf32, #tpu.memory_space<vmem>>, vector<1x16x128xf32>
    %587 = vector.shape_cast %586 : vector<1x16x128xf32> to vector<16x128xf32>
    %588 = arith.mulf %585, %587 : vector<16x128xf32>
    %589 = arith.addf %584, %588 : vector<16x128xf32>
    %c122_i32_360 = arith.constant 122 : i32
    %590 = tpu.dynamic_rotate %485 by %c122_i32_360 dim 1 : vector<16x128xf32>, i32 -> vector<16x128xf32>
    %c21_361 = arith.constant 21 : index
    %c0_362 = arith.constant 0 : index
    %c0_363 = arith.constant 0 : index
    %591 = vector.load %arg5[%c21_361, %c0_362, %c0_363] : memref<93x16x128xf32, #tpu.memory_space<vmem>>, vector<1x16x128xf32>
    %592 = vector.shape_cast %591 : vector<1x16x128xf32> to vector<16x128xf32>
    %593 = arith.mulf %590, %592 : vector<16x128xf32>
    %594 = arith.addf %589, %593 : vector<16x128xf32>
    %c121_i32_364 = arith.constant 121 : i32
    %595 = tpu.dynamic_rotate %485 by %c121_i32_364 dim 1 : vector<16x128xf32>, i32 -> vector<16x128xf32>
    %c22_365 = arith.constant 22 : index
    %c0_366 = arith.constant 0 : index
    %c0_367 = arith.constant 0 : index
    %596 = vector.load %arg5[%c22_365, %c0_366, %c0_367] : memref<93x16x128xf32, #tpu.memory_space<vmem>>, vector<1x16x128xf32>
    %597 = vector.shape_cast %596 : vector<1x16x128xf32> to vector<16x128xf32>
    %598 = arith.mulf %595, %597 : vector<16x128xf32>
    %599 = arith.addf %594, %598 : vector<16x128xf32>
    %c120_i32_368 = arith.constant 120 : i32
    %600 = tpu.dynamic_rotate %485 by %c120_i32_368 dim 1 : vector<16x128xf32>, i32 -> vector<16x128xf32>
    %c23_369 = arith.constant 23 : index
    %c0_370 = arith.constant 0 : index
    %c0_371 = arith.constant 0 : index
    %601 = vector.load %arg5[%c23_369, %c0_370, %c0_371] : memref<93x16x128xf32, #tpu.memory_space<vmem>>, vector<1x16x128xf32>
    %602 = vector.shape_cast %601 : vector<1x16x128xf32> to vector<16x128xf32>
    %603 = arith.mulf %600, %602 : vector<16x128xf32>
    %604 = arith.addf %599, %603 : vector<16x128xf32>
    %c119_i32_372 = arith.constant 119 : i32
    %605 = tpu.dynamic_rotate %485 by %c119_i32_372 dim 1 : vector<16x128xf32>, i32 -> vector<16x128xf32>
    %c24_373 = arith.constant 24 : index
    %c0_374 = arith.constant 0 : index
    %c0_375 = arith.constant 0 : index
    %606 = vector.load %arg5[%c24_373, %c0_374, %c0_375] : memref<93x16x128xf32, #tpu.memory_space<vmem>>, vector<1x16x128xf32>
    %607 = vector.shape_cast %606 : vector<1x16x128xf32> to vector<16x128xf32>
    %608 = arith.mulf %605, %607 : vector<16x128xf32>
    %609 = arith.addf %604, %608 : vector<16x128xf32>
    %c118_i32_376 = arith.constant 118 : i32
    %610 = tpu.dynamic_rotate %485 by %c118_i32_376 dim 1 : vector<16x128xf32>, i32 -> vector<16x128xf32>
    %c25_377 = arith.constant 25 : index
    %c0_378 = arith.constant 0 : index
    %c0_379 = arith.constant 0 : index
    %611 = vector.load %arg5[%c25_377, %c0_378, %c0_379] : memref<93x16x128xf32, #tpu.memory_space<vmem>>, vector<1x16x128xf32>
    %612 = vector.shape_cast %611 : vector<1x16x128xf32> to vector<16x128xf32>
    %613 = arith.mulf %610, %612 : vector<16x128xf32>
    %614 = arith.addf %609, %613 : vector<16x128xf32>
    %c117_i32_380 = arith.constant 117 : i32
    %615 = tpu.dynamic_rotate %485 by %c117_i32_380 dim 1 : vector<16x128xf32>, i32 -> vector<16x128xf32>
    %c26_381 = arith.constant 26 : index
    %c0_382 = arith.constant 0 : index
    %c0_383 = arith.constant 0 : index
    %616 = vector.load %arg5[%c26_381, %c0_382, %c0_383] : memref<93x16x128xf32, #tpu.memory_space<vmem>>, vector<1x16x128xf32>
    %617 = vector.shape_cast %616 : vector<1x16x128xf32> to vector<16x128xf32>
    %618 = arith.mulf %615, %617 : vector<16x128xf32>
    %619 = arith.addf %614, %618 : vector<16x128xf32>
    %c116_i32_384 = arith.constant 116 : i32
    %620 = tpu.dynamic_rotate %485 by %c116_i32_384 dim 1 : vector<16x128xf32>, i32 -> vector<16x128xf32>
    %c27_385 = arith.constant 27 : index
    %c0_386 = arith.constant 0 : index
    %c0_387 = arith.constant 0 : index
    %621 = vector.load %arg5[%c27_385, %c0_386, %c0_387] : memref<93x16x128xf32, #tpu.memory_space<vmem>>, vector<1x16x128xf32>
    %622 = vector.shape_cast %621 : vector<1x16x128xf32> to vector<16x128xf32>
    %623 = arith.mulf %620, %622 : vector<16x128xf32>
    %624 = arith.addf %619, %623 : vector<16x128xf32>
    %c115_i32_388 = arith.constant 115 : i32
    %625 = tpu.dynamic_rotate %485 by %c115_i32_388 dim 1 : vector<16x128xf32>, i32 -> vector<16x128xf32>
    %c28_389 = arith.constant 28 : index
    %c0_390 = arith.constant 0 : index
    %c0_391 = arith.constant 0 : index
    %626 = vector.load %arg5[%c28_389, %c0_390, %c0_391] : memref<93x16x128xf32, #tpu.memory_space<vmem>>, vector<1x16x128xf32>
    %627 = vector.shape_cast %626 : vector<1x16x128xf32> to vector<16x128xf32>
    %628 = arith.mulf %625, %627 : vector<16x128xf32>
    %629 = arith.addf %624, %628 : vector<16x128xf32>
    %c114_i32_392 = arith.constant 114 : i32
    %630 = tpu.dynamic_rotate %485 by %c114_i32_392 dim 1 : vector<16x128xf32>, i32 -> vector<16x128xf32>
    %c29_393 = arith.constant 29 : index
    %c0_394 = arith.constant 0 : index
    %c0_395 = arith.constant 0 : index
    %631 = vector.load %arg5[%c29_393, %c0_394, %c0_395] : memref<93x16x128xf32, #tpu.memory_space<vmem>>, vector<1x16x128xf32>
    %632 = vector.shape_cast %631 : vector<1x16x128xf32> to vector<16x128xf32>
    %633 = arith.mulf %630, %632 : vector<16x128xf32>
    %634 = arith.addf %629, %633 : vector<16x128xf32>
    %c113_i32_396 = arith.constant 113 : i32
    %635 = tpu.dynamic_rotate %485 by %c113_i32_396 dim 1 : vector<16x128xf32>, i32 -> vector<16x128xf32>
    %c30_397 = arith.constant 30 : index
    %c0_398 = arith.constant 0 : index
    %c0_399 = arith.constant 0 : index
    %636 = vector.load %arg5[%c30_397, %c0_398, %c0_399] : memref<93x16x128xf32, #tpu.memory_space<vmem>>, vector<1x16x128xf32>
    %637 = vector.shape_cast %636 : vector<1x16x128xf32> to vector<16x128xf32>
    %638 = arith.mulf %635, %637 : vector<16x128xf32>
    %639 = arith.addf %634, %638 : vector<16x128xf32>
    %c1_400 = arith.constant 1 : index
    %c0_401 = arith.constant 0 : index
    %640 = vector.load %arg9[%c1_400, %c0_401] : memref<18x128xf32, #tpu.memory_space<vmem>>, vector<16x128xf32>
    %c15_i32_402 = arith.constant 15 : i32
    %641 = tpu.dynamic_rotate %640 by %c15_i32_402 dim 1 : vector<16x128xf32>, i32 -> vector<16x128xf32>
    %c31_403 = arith.constant 31 : index
    %c0_404 = arith.constant 0 : index
    %c0_405 = arith.constant 0 : index
    %642 = vector.load %arg5[%c31_403, %c0_404, %c0_405] : memref<93x16x128xf32, #tpu.memory_space<vmem>>, vector<1x16x128xf32>
    %643 = vector.shape_cast %642 : vector<1x16x128xf32> to vector<16x128xf32>
    %644 = arith.mulf %641, %643 : vector<16x128xf32>
    %645 = arith.addf %639, %644 : vector<16x128xf32>
    %c14_i32_406 = arith.constant 14 : i32
    %646 = tpu.dynamic_rotate %640 by %c14_i32_406 dim 1 : vector<16x128xf32>, i32 -> vector<16x128xf32>
    %c32_407 = arith.constant 32 : index
    %c0_408 = arith.constant 0 : index
    %c0_409 = arith.constant 0 : index
    %647 = vector.load %arg5[%c32_407, %c0_408, %c0_409] : memref<93x16x128xf32, #tpu.memory_space<vmem>>, vector<1x16x128xf32>
    %648 = vector.shape_cast %647 : vector<1x16x128xf32> to vector<16x128xf32>
    %649 = arith.mulf %646, %648 : vector<16x128xf32>
    %650 = arith.addf %645, %649 : vector<16x128xf32>
    %c13_i32_410 = arith.constant 13 : i32
    %651 = tpu.dynamic_rotate %640 by %c13_i32_410 dim 1 : vector<16x128xf32>, i32 -> vector<16x128xf32>
    %c33_411 = arith.constant 33 : index
    %c0_412 = arith.constant 0 : index
    %c0_413 = arith.constant 0 : index
    %652 = vector.load %arg5[%c33_411, %c0_412, %c0_413] : memref<93x16x128xf32, #tpu.memory_space<vmem>>, vector<1x16x128xf32>
    %653 = vector.shape_cast %652 : vector<1x16x128xf32> to vector<16x128xf32>
    %654 = arith.mulf %651, %653 : vector<16x128xf32>
    %655 = arith.addf %650, %654 : vector<16x128xf32>
    %c12_i32_414 = arith.constant 12 : i32
    %656 = tpu.dynamic_rotate %640 by %c12_i32_414 dim 1 : vector<16x128xf32>, i32 -> vector<16x128xf32>
    %c34_415 = arith.constant 34 : index
    %c0_416 = arith.constant 0 : index
    %c0_417 = arith.constant 0 : index
    %657 = vector.load %arg5[%c34_415, %c0_416, %c0_417] : memref<93x16x128xf32, #tpu.memory_space<vmem>>, vector<1x16x128xf32>
    %658 = vector.shape_cast %657 : vector<1x16x128xf32> to vector<16x128xf32>
    %659 = arith.mulf %656, %658 : vector<16x128xf32>
    %660 = arith.addf %655, %659 : vector<16x128xf32>
    %c11_i32_418 = arith.constant 11 : i32
    %661 = tpu.dynamic_rotate %640 by %c11_i32_418 dim 1 : vector<16x128xf32>, i32 -> vector<16x128xf32>
    %c35_419 = arith.constant 35 : index
    %c0_420 = arith.constant 0 : index
    %c0_421 = arith.constant 0 : index
    %662 = vector.load %arg5[%c35_419, %c0_420, %c0_421] : memref<93x16x128xf32, #tpu.memory_space<vmem>>, vector<1x16x128xf32>
    %663 = vector.shape_cast %662 : vector<1x16x128xf32> to vector<16x128xf32>
    %664 = arith.mulf %661, %663 : vector<16x128xf32>
    %665 = arith.addf %660, %664 : vector<16x128xf32>
    %c10_i32_422 = arith.constant 10 : i32
    %666 = tpu.dynamic_rotate %640 by %c10_i32_422 dim 1 : vector<16x128xf32>, i32 -> vector<16x128xf32>
    %c36_423 = arith.constant 36 : index
    %c0_424 = arith.constant 0 : index
    %c0_425 = arith.constant 0 : index
    %667 = vector.load %arg5[%c36_423, %c0_424, %c0_425] : memref<93x16x128xf32, #tpu.memory_space<vmem>>, vector<1x16x128xf32>
    %668 = vector.shape_cast %667 : vector<1x16x128xf32> to vector<16x128xf32>
    %669 = arith.mulf %666, %668 : vector<16x128xf32>
    %670 = arith.addf %665, %669 : vector<16x128xf32>
    %c9_i32_426 = arith.constant 9 : i32
    %671 = tpu.dynamic_rotate %640 by %c9_i32_426 dim 1 : vector<16x128xf32>, i32 -> vector<16x128xf32>
    %c37_427 = arith.constant 37 : index
    %c0_428 = arith.constant 0 : index
    %c0_429 = arith.constant 0 : index
    %672 = vector.load %arg5[%c37_427, %c0_428, %c0_429] : memref<93x16x128xf32, #tpu.memory_space<vmem>>, vector<1x16x128xf32>
    %673 = vector.shape_cast %672 : vector<1x16x128xf32> to vector<16x128xf32>
    %674 = arith.mulf %671, %673 : vector<16x128xf32>
    %675 = arith.addf %670, %674 : vector<16x128xf32>
    %c8_i32_430 = arith.constant 8 : i32
    %676 = tpu.dynamic_rotate %640 by %c8_i32_430 dim 1 : vector<16x128xf32>, i32 -> vector<16x128xf32>
    %c38_431 = arith.constant 38 : index
    %c0_432 = arith.constant 0 : index
    %c0_433 = arith.constant 0 : index
    %677 = vector.load %arg5[%c38_431, %c0_432, %c0_433] : memref<93x16x128xf32, #tpu.memory_space<vmem>>, vector<1x16x128xf32>
    %678 = vector.shape_cast %677 : vector<1x16x128xf32> to vector<16x128xf32>
    %679 = arith.mulf %676, %678 : vector<16x128xf32>
    %680 = arith.addf %675, %679 : vector<16x128xf32>
    %c7_i32_434 = arith.constant 7 : i32
    %681 = tpu.dynamic_rotate %640 by %c7_i32_434 dim 1 : vector<16x128xf32>, i32 -> vector<16x128xf32>
    %c39_435 = arith.constant 39 : index
    %c0_436 = arith.constant 0 : index
    %c0_437 = arith.constant 0 : index
    %682 = vector.load %arg5[%c39_435, %c0_436, %c0_437] : memref<93x16x128xf32, #tpu.memory_space<vmem>>, vector<1x16x128xf32>
    %683 = vector.shape_cast %682 : vector<1x16x128xf32> to vector<16x128xf32>
    %684 = arith.mulf %681, %683 : vector<16x128xf32>
    %685 = arith.addf %680, %684 : vector<16x128xf32>
    %c6_i32_438 = arith.constant 6 : i32
    %686 = tpu.dynamic_rotate %640 by %c6_i32_438 dim 1 : vector<16x128xf32>, i32 -> vector<16x128xf32>
    %c40_439 = arith.constant 40 : index
    %c0_440 = arith.constant 0 : index
    %c0_441 = arith.constant 0 : index
    %687 = vector.load %arg5[%c40_439, %c0_440, %c0_441] : memref<93x16x128xf32, #tpu.memory_space<vmem>>, vector<1x16x128xf32>
    %688 = vector.shape_cast %687 : vector<1x16x128xf32> to vector<16x128xf32>
    %689 = arith.mulf %686, %688 : vector<16x128xf32>
    %690 = arith.addf %685, %689 : vector<16x128xf32>
    %c5_i32_442 = arith.constant 5 : i32
    %691 = tpu.dynamic_rotate %640 by %c5_i32_442 dim 1 : vector<16x128xf32>, i32 -> vector<16x128xf32>
    %c41_443 = arith.constant 41 : index
    %c0_444 = arith.constant 0 : index
    %c0_445 = arith.constant 0 : index
    %692 = vector.load %arg5[%c41_443, %c0_444, %c0_445] : memref<93x16x128xf32, #tpu.memory_space<vmem>>, vector<1x16x128xf32>
    %693 = vector.shape_cast %692 : vector<1x16x128xf32> to vector<16x128xf32>
    %694 = arith.mulf %691, %693 : vector<16x128xf32>
    %695 = arith.addf %690, %694 : vector<16x128xf32>
    %c4_i32_446 = arith.constant 4 : i32
    %696 = tpu.dynamic_rotate %640 by %c4_i32_446 dim 1 : vector<16x128xf32>, i32 -> vector<16x128xf32>
    %c42_447 = arith.constant 42 : index
    %c0_448 = arith.constant 0 : index
    %c0_449 = arith.constant 0 : index
    %697 = vector.load %arg5[%c42_447, %c0_448, %c0_449] : memref<93x16x128xf32, #tpu.memory_space<vmem>>, vector<1x16x128xf32>
    %698 = vector.shape_cast %697 : vector<1x16x128xf32> to vector<16x128xf32>
    %699 = arith.mulf %696, %698 : vector<16x128xf32>
    %700 = arith.addf %695, %699 : vector<16x128xf32>
    %c3_i32_450 = arith.constant 3 : i32
    %701 = tpu.dynamic_rotate %640 by %c3_i32_450 dim 1 : vector<16x128xf32>, i32 -> vector<16x128xf32>
    %c43_451 = arith.constant 43 : index
    %c0_452 = arith.constant 0 : index
    %c0_453 = arith.constant 0 : index
    %702 = vector.load %arg5[%c43_451, %c0_452, %c0_453] : memref<93x16x128xf32, #tpu.memory_space<vmem>>, vector<1x16x128xf32>
    %703 = vector.shape_cast %702 : vector<1x16x128xf32> to vector<16x128xf32>
    %704 = arith.mulf %701, %703 : vector<16x128xf32>
    %705 = arith.addf %700, %704 : vector<16x128xf32>
    %c2_i32_454 = arith.constant 2 : i32
    %706 = tpu.dynamic_rotate %640 by %c2_i32_454 dim 1 : vector<16x128xf32>, i32 -> vector<16x128xf32>
    %c44_455 = arith.constant 44 : index
    %c0_456 = arith.constant 0 : index
    %c0_457 = arith.constant 0 : index
    %707 = vector.load %arg5[%c44_455, %c0_456, %c0_457] : memref<93x16x128xf32, #tpu.memory_space<vmem>>, vector<1x16x128xf32>
    %708 = vector.shape_cast %707 : vector<1x16x128xf32> to vector<16x128xf32>
    %709 = arith.mulf %706, %708 : vector<16x128xf32>
    %710 = arith.addf %705, %709 : vector<16x128xf32>
    %c1_i32_458 = arith.constant 1 : i32
    %711 = tpu.dynamic_rotate %640 by %c1_i32_458 dim 1 : vector<16x128xf32>, i32 -> vector<16x128xf32>
    %c45_459 = arith.constant 45 : index
    %c0_460 = arith.constant 0 : index
    %c0_461 = arith.constant 0 : index
    %712 = vector.load %arg5[%c45_459, %c0_460, %c0_461] : memref<93x16x128xf32, #tpu.memory_space<vmem>>, vector<1x16x128xf32>
    %713 = vector.shape_cast %712 : vector<1x16x128xf32> to vector<16x128xf32>
    %714 = arith.mulf %711, %713 : vector<16x128xf32>
    %715 = arith.addf %710, %714 : vector<16x128xf32>
    %c46_462 = arith.constant 46 : index
    %c0_463 = arith.constant 0 : index
    %c0_464 = arith.constant 0 : index
    %716 = vector.load %arg5[%c46_462, %c0_463, %c0_464] : memref<93x16x128xf32, #tpu.memory_space<vmem>>, vector<1x16x128xf32>
    %717 = vector.shape_cast %716 : vector<1x16x128xf32> to vector<16x128xf32>
    %718 = arith.mulf %640, %717 : vector<16x128xf32>
    %719 = arith.addf %715, %718 : vector<16x128xf32>
    %c127_i32_465 = arith.constant 127 : i32
    %720 = tpu.dynamic_rotate %640 by %c127_i32_465 dim 1 : vector<16x128xf32>, i32 -> vector<16x128xf32>
    %c47_466 = arith.constant 47 : index
    %c0_467 = arith.constant 0 : index
    %c0_468 = arith.constant 0 : index
    %721 = vector.load %arg5[%c47_466, %c0_467, %c0_468] : memref<93x16x128xf32, #tpu.memory_space<vmem>>, vector<1x16x128xf32>
    %722 = vector.shape_cast %721 : vector<1x16x128xf32> to vector<16x128xf32>
    %723 = arith.mulf %720, %722 : vector<16x128xf32>
    %724 = arith.addf %719, %723 : vector<16x128xf32>
    %c126_i32_469 = arith.constant 126 : i32
    %725 = tpu.dynamic_rotate %640 by %c126_i32_469 dim 1 : vector<16x128xf32>, i32 -> vector<16x128xf32>
    %c48_470 = arith.constant 48 : index
    %c0_471 = arith.constant 0 : index
    %c0_472 = arith.constant 0 : index
    %726 = vector.load %arg5[%c48_470, %c0_471, %c0_472] : memref<93x16x128xf32, #tpu.memory_space<vmem>>, vector<1x16x128xf32>
    %727 = vector.shape_cast %726 : vector<1x16x128xf32> to vector<16x128xf32>
    %728 = arith.mulf %725, %727 : vector<16x128xf32>
    %729 = arith.addf %724, %728 : vector<16x128xf32>
    %c125_i32_473 = arith.constant 125 : i32
    %730 = tpu.dynamic_rotate %640 by %c125_i32_473 dim 1 : vector<16x128xf32>, i32 -> vector<16x128xf32>
    %c49_474 = arith.constant 49 : index
    %c0_475 = arith.constant 0 : index
    %c0_476 = arith.constant 0 : index
    %731 = vector.load %arg5[%c49_474, %c0_475, %c0_476] : memref<93x16x128xf32, #tpu.memory_space<vmem>>, vector<1x16x128xf32>
    %732 = vector.shape_cast %731 : vector<1x16x128xf32> to vector<16x128xf32>
    %733 = arith.mulf %730, %732 : vector<16x128xf32>
    %734 = arith.addf %729, %733 : vector<16x128xf32>
    %c124_i32_477 = arith.constant 124 : i32
    %735 = tpu.dynamic_rotate %640 by %c124_i32_477 dim 1 : vector<16x128xf32>, i32 -> vector<16x128xf32>
    %c50_478 = arith.constant 50 : index
    %c0_479 = arith.constant 0 : index
    %c0_480 = arith.constant 0 : index
    %736 = vector.load %arg5[%c50_478, %c0_479, %c0_480] : memref<93x16x128xf32, #tpu.memory_space<vmem>>, vector<1x16x128xf32>
    %737 = vector.shape_cast %736 : vector<1x16x128xf32> to vector<16x128xf32>
    %738 = arith.mulf %735, %737 : vector<16x128xf32>
    %739 = arith.addf %734, %738 : vector<16x128xf32>
    %c123_i32_481 = arith.constant 123 : i32
    %740 = tpu.dynamic_rotate %640 by %c123_i32_481 dim 1 : vector<16x128xf32>, i32 -> vector<16x128xf32>
    %c51_482 = arith.constant 51 : index
    %c0_483 = arith.constant 0 : index
    %c0_484 = arith.constant 0 : index
    %741 = vector.load %arg5[%c51_482, %c0_483, %c0_484] : memref<93x16x128xf32, #tpu.memory_space<vmem>>, vector<1x16x128xf32>
    %742 = vector.shape_cast %741 : vector<1x16x128xf32> to vector<16x128xf32>
    %743 = arith.mulf %740, %742 : vector<16x128xf32>
    %744 = arith.addf %739, %743 : vector<16x128xf32>
    %c122_i32_485 = arith.constant 122 : i32
    %745 = tpu.dynamic_rotate %640 by %c122_i32_485 dim 1 : vector<16x128xf32>, i32 -> vector<16x128xf32>
    %c52_486 = arith.constant 52 : index
    %c0_487 = arith.constant 0 : index
    %c0_488 = arith.constant 0 : index
    %746 = vector.load %arg5[%c52_486, %c0_487, %c0_488] : memref<93x16x128xf32, #tpu.memory_space<vmem>>, vector<1x16x128xf32>
    %747 = vector.shape_cast %746 : vector<1x16x128xf32> to vector<16x128xf32>
    %748 = arith.mulf %745, %747 : vector<16x128xf32>
    %749 = arith.addf %744, %748 : vector<16x128xf32>
    %c121_i32_489 = arith.constant 121 : i32
    %750 = tpu.dynamic_rotate %640 by %c121_i32_489 dim 1 : vector<16x128xf32>, i32 -> vector<16x128xf32>
    %c53_490 = arith.constant 53 : index
    %c0_491 = arith.constant 0 : index
    %c0_492 = arith.constant 0 : index
    %751 = vector.load %arg5[%c53_490, %c0_491, %c0_492] : memref<93x16x128xf32, #tpu.memory_space<vmem>>, vector<1x16x128xf32>
    %752 = vector.shape_cast %751 : vector<1x16x128xf32> to vector<16x128xf32>
    %753 = arith.mulf %750, %752 : vector<16x128xf32>
    %754 = arith.addf %749, %753 : vector<16x128xf32>
    %c120_i32_493 = arith.constant 120 : i32
    %755 = tpu.dynamic_rotate %640 by %c120_i32_493 dim 1 : vector<16x128xf32>, i32 -> vector<16x128xf32>
    %c54_494 = arith.constant 54 : index
    %c0_495 = arith.constant 0 : index
    %c0_496 = arith.constant 0 : index
    %756 = vector.load %arg5[%c54_494, %c0_495, %c0_496] : memref<93x16x128xf32, #tpu.memory_space<vmem>>, vector<1x16x128xf32>
    %757 = vector.shape_cast %756 : vector<1x16x128xf32> to vector<16x128xf32>
    %758 = arith.mulf %755, %757 : vector<16x128xf32>
    %759 = arith.addf %754, %758 : vector<16x128xf32>
    %c119_i32_497 = arith.constant 119 : i32
    %760 = tpu.dynamic_rotate %640 by %c119_i32_497 dim 1 : vector<16x128xf32>, i32 -> vector<16x128xf32>
    %c55_498 = arith.constant 55 : index
    %c0_499 = arith.constant 0 : index
    %c0_500 = arith.constant 0 : index
    %761 = vector.load %arg5[%c55_498, %c0_499, %c0_500] : memref<93x16x128xf32, #tpu.memory_space<vmem>>, vector<1x16x128xf32>
    %762 = vector.shape_cast %761 : vector<1x16x128xf32> to vector<16x128xf32>
    %763 = arith.mulf %760, %762 : vector<16x128xf32>
    %764 = arith.addf %759, %763 : vector<16x128xf32>
    %c118_i32_501 = arith.constant 118 : i32
    %765 = tpu.dynamic_rotate %640 by %c118_i32_501 dim 1 : vector<16x128xf32>, i32 -> vector<16x128xf32>
    %c56_502 = arith.constant 56 : index
    %c0_503 = arith.constant 0 : index
    %c0_504 = arith.constant 0 : index
    %766 = vector.load %arg5[%c56_502, %c0_503, %c0_504] : memref<93x16x128xf32, #tpu.memory_space<vmem>>, vector<1x16x128xf32>
    %767 = vector.shape_cast %766 : vector<1x16x128xf32> to vector<16x128xf32>
    %768 = arith.mulf %765, %767 : vector<16x128xf32>
    %769 = arith.addf %764, %768 : vector<16x128xf32>
    %c117_i32_505 = arith.constant 117 : i32
    %770 = tpu.dynamic_rotate %640 by %c117_i32_505 dim 1 : vector<16x128xf32>, i32 -> vector<16x128xf32>
    %c57_506 = arith.constant 57 : index
    %c0_507 = arith.constant 0 : index
    %c0_508 = arith.constant 0 : index
    %771 = vector.load %arg5[%c57_506, %c0_507, %c0_508] : memref<93x16x128xf32, #tpu.memory_space<vmem>>, vector<1x16x128xf32>
    %772 = vector.shape_cast %771 : vector<1x16x128xf32> to vector<16x128xf32>
    %773 = arith.mulf %770, %772 : vector<16x128xf32>
    %774 = arith.addf %769, %773 : vector<16x128xf32>
    %c116_i32_509 = arith.constant 116 : i32
    %775 = tpu.dynamic_rotate %640 by %c116_i32_509 dim 1 : vector<16x128xf32>, i32 -> vector<16x128xf32>
    %c58_510 = arith.constant 58 : index
    %c0_511 = arith.constant 0 : index
    %c0_512 = arith.constant 0 : index
    %776 = vector.load %arg5[%c58_510, %c0_511, %c0_512] : memref<93x16x128xf32, #tpu.memory_space<vmem>>, vector<1x16x128xf32>
    %777 = vector.shape_cast %776 : vector<1x16x128xf32> to vector<16x128xf32>
    %778 = arith.mulf %775, %777 : vector<16x128xf32>
    %779 = arith.addf %774, %778 : vector<16x128xf32>
    %c115_i32_513 = arith.constant 115 : i32
    %780 = tpu.dynamic_rotate %640 by %c115_i32_513 dim 1 : vector<16x128xf32>, i32 -> vector<16x128xf32>
    %c59_514 = arith.constant 59 : index
    %c0_515 = arith.constant 0 : index
    %c0_516 = arith.constant 0 : index
    %781 = vector.load %arg5[%c59_514, %c0_515, %c0_516] : memref<93x16x128xf32, #tpu.memory_space<vmem>>, vector<1x16x128xf32>
    %782 = vector.shape_cast %781 : vector<1x16x128xf32> to vector<16x128xf32>
    %783 = arith.mulf %780, %782 : vector<16x128xf32>
    %784 = arith.addf %779, %783 : vector<16x128xf32>
    %c114_i32_517 = arith.constant 114 : i32
    %785 = tpu.dynamic_rotate %640 by %c114_i32_517 dim 1 : vector<16x128xf32>, i32 -> vector<16x128xf32>
    %c60_518 = arith.constant 60 : index
    %c0_519 = arith.constant 0 : index
    %c0_520 = arith.constant 0 : index
    %786 = vector.load %arg5[%c60_518, %c0_519, %c0_520] : memref<93x16x128xf32, #tpu.memory_space<vmem>>, vector<1x16x128xf32>
    %787 = vector.shape_cast %786 : vector<1x16x128xf32> to vector<16x128xf32>
    %788 = arith.mulf %785, %787 : vector<16x128xf32>
    %789 = arith.addf %784, %788 : vector<16x128xf32>
    %c113_i32_521 = arith.constant 113 : i32
    %790 = tpu.dynamic_rotate %640 by %c113_i32_521 dim 1 : vector<16x128xf32>, i32 -> vector<16x128xf32>
    %c61_522 = arith.constant 61 : index
    %c0_523 = arith.constant 0 : index
    %c0_524 = arith.constant 0 : index
    %791 = vector.load %arg5[%c61_522, %c0_523, %c0_524] : memref<93x16x128xf32, #tpu.memory_space<vmem>>, vector<1x16x128xf32>
    %792 = vector.shape_cast %791 : vector<1x16x128xf32> to vector<16x128xf32>
    %793 = arith.mulf %790, %792 : vector<16x128xf32>
    %794 = arith.addf %789, %793 : vector<16x128xf32>
    %c2_525 = arith.constant 2 : index
    %c0_526 = arith.constant 0 : index
    %795 = vector.load %arg9[%c2_525, %c0_526] : memref<18x128xf32, #tpu.memory_space<vmem>>, vector<16x128xf32>
    %c15_i32_527 = arith.constant 15 : i32
    %796 = tpu.dynamic_rotate %795 by %c15_i32_527 dim 1 : vector<16x128xf32>, i32 -> vector<16x128xf32>
    %c62_528 = arith.constant 62 : index
    %c0_529 = arith.constant 0 : index
    %c0_530 = arith.constant 0 : index
    %797 = vector.load %arg5[%c62_528, %c0_529, %c0_530] : memref<93x16x128xf32, #tpu.memory_space<vmem>>, vector<1x16x128xf32>
    %798 = vector.shape_cast %797 : vector<1x16x128xf32> to vector<16x128xf32>
    %799 = arith.mulf %796, %798 : vector<16x128xf32>
    %800 = arith.addf %794, %799 : vector<16x128xf32>
    %c14_i32_531 = arith.constant 14 : i32
    %801 = tpu.dynamic_rotate %795 by %c14_i32_531 dim 1 : vector<16x128xf32>, i32 -> vector<16x128xf32>
    %c63_532 = arith.constant 63 : index
    %c0_533 = arith.constant 0 : index
    %c0_534 = arith.constant 0 : index
    %802 = vector.load %arg5[%c63_532, %c0_533, %c0_534] : memref<93x16x128xf32, #tpu.memory_space<vmem>>, vector<1x16x128xf32>
    %803 = vector.shape_cast %802 : vector<1x16x128xf32> to vector<16x128xf32>
    %804 = arith.mulf %801, %803 : vector<16x128xf32>
    %805 = arith.addf %800, %804 : vector<16x128xf32>
    %c13_i32_535 = arith.constant 13 : i32
    %806 = tpu.dynamic_rotate %795 by %c13_i32_535 dim 1 : vector<16x128xf32>, i32 -> vector<16x128xf32>
    %c64_536 = arith.constant 64 : index
    %c0_537 = arith.constant 0 : index
    %c0_538 = arith.constant 0 : index
    %807 = vector.load %arg5[%c64_536, %c0_537, %c0_538] : memref<93x16x128xf32, #tpu.memory_space<vmem>>, vector<1x16x128xf32>
    %808 = vector.shape_cast %807 : vector<1x16x128xf32> to vector<16x128xf32>
    %809 = arith.mulf %806, %808 : vector<16x128xf32>
    %810 = arith.addf %805, %809 : vector<16x128xf32>
    %c12_i32_539 = arith.constant 12 : i32
    %811 = tpu.dynamic_rotate %795 by %c12_i32_539 dim 1 : vector<16x128xf32>, i32 -> vector<16x128xf32>
    %c65_540 = arith.constant 65 : index
    %c0_541 = arith.constant 0 : index
    %c0_542 = arith.constant 0 : index
    %812 = vector.load %arg5[%c65_540, %c0_541, %c0_542] : memref<93x16x128xf32, #tpu.memory_space<vmem>>, vector<1x16x128xf32>
    %813 = vector.shape_cast %812 : vector<1x16x128xf32> to vector<16x128xf32>
    %814 = arith.mulf %811, %813 : vector<16x128xf32>
    %815 = arith.addf %810, %814 : vector<16x128xf32>
    %c11_i32_543 = arith.constant 11 : i32
    %816 = tpu.dynamic_rotate %795 by %c11_i32_543 dim 1 : vector<16x128xf32>, i32 -> vector<16x128xf32>
    %c66_544 = arith.constant 66 : index
    %c0_545 = arith.constant 0 : index
    %c0_546 = arith.constant 0 : index
    %817 = vector.load %arg5[%c66_544, %c0_545, %c0_546] : memref<93x16x128xf32, #tpu.memory_space<vmem>>, vector<1x16x128xf32>
    %818 = vector.shape_cast %817 : vector<1x16x128xf32> to vector<16x128xf32>
    %819 = arith.mulf %816, %818 : vector<16x128xf32>
    %820 = arith.addf %815, %819 : vector<16x128xf32>
    %c10_i32_547 = arith.constant 10 : i32
    %821 = tpu.dynamic_rotate %795 by %c10_i32_547 dim 1 : vector<16x128xf32>, i32 -> vector<16x128xf32>
    %c67_548 = arith.constant 67 : index
    %c0_549 = arith.constant 0 : index
    %c0_550 = arith.constant 0 : index
    %822 = vector.load %arg5[%c67_548, %c0_549, %c0_550] : memref<93x16x128xf32, #tpu.memory_space<vmem>>, vector<1x16x128xf32>
    %823 = vector.shape_cast %822 : vector<1x16x128xf32> to vector<16x128xf32>
    %824 = arith.mulf %821, %823 : vector<16x128xf32>
    %825 = arith.addf %820, %824 : vector<16x128xf32>
    %c9_i32_551 = arith.constant 9 : i32
    %826 = tpu.dynamic_rotate %795 by %c9_i32_551 dim 1 : vector<16x128xf32>, i32 -> vector<16x128xf32>
    %c68_552 = arith.constant 68 : index
    %c0_553 = arith.constant 0 : index
    %c0_554 = arith.constant 0 : index
    %827 = vector.load %arg5[%c68_552, %c0_553, %c0_554] : memref<93x16x128xf32, #tpu.memory_space<vmem>>, vector<1x16x128xf32>
    %828 = vector.shape_cast %827 : vector<1x16x128xf32> to vector<16x128xf32>
    %829 = arith.mulf %826, %828 : vector<16x128xf32>
    %830 = arith.addf %825, %829 : vector<16x128xf32>
    %c8_i32_555 = arith.constant 8 : i32
    %831 = tpu.dynamic_rotate %795 by %c8_i32_555 dim 1 : vector<16x128xf32>, i32 -> vector<16x128xf32>
    %c69_556 = arith.constant 69 : index
    %c0_557 = arith.constant 0 : index
    %c0_558 = arith.constant 0 : index
    %832 = vector.load %arg5[%c69_556, %c0_557, %c0_558] : memref<93x16x128xf32, #tpu.memory_space<vmem>>, vector<1x16x128xf32>
    %833 = vector.shape_cast %832 : vector<1x16x128xf32> to vector<16x128xf32>
    %834 = arith.mulf %831, %833 : vector<16x128xf32>
    %835 = arith.addf %830, %834 : vector<16x128xf32>
    %c7_i32_559 = arith.constant 7 : i32
    %836 = tpu.dynamic_rotate %795 by %c7_i32_559 dim 1 : vector<16x128xf32>, i32 -> vector<16x128xf32>
    %c70_560 = arith.constant 70 : index
    %c0_561 = arith.constant 0 : index
    %c0_562 = arith.constant 0 : index
    %837 = vector.load %arg5[%c70_560, %c0_561, %c0_562] : memref<93x16x128xf32, #tpu.memory_space<vmem>>, vector<1x16x128xf32>
    %838 = vector.shape_cast %837 : vector<1x16x128xf32> to vector<16x128xf32>
    %839 = arith.mulf %836, %838 : vector<16x128xf32>
    %840 = arith.addf %835, %839 : vector<16x128xf32>
    %c6_i32_563 = arith.constant 6 : i32
    %841 = tpu.dynamic_rotate %795 by %c6_i32_563 dim 1 : vector<16x128xf32>, i32 -> vector<16x128xf32>
    %c71_564 = arith.constant 71 : index
    %c0_565 = arith.constant 0 : index
    %c0_566 = arith.constant 0 : index
    %842 = vector.load %arg5[%c71_564, %c0_565, %c0_566] : memref<93x16x128xf32, #tpu.memory_space<vmem>>, vector<1x16x128xf32>
    %843 = vector.shape_cast %842 : vector<1x16x128xf32> to vector<16x128xf32>
    %844 = arith.mulf %841, %843 : vector<16x128xf32>
    %845 = arith.addf %840, %844 : vector<16x128xf32>
    %c5_i32_567 = arith.constant 5 : i32
    %846 = tpu.dynamic_rotate %795 by %c5_i32_567 dim 1 : vector<16x128xf32>, i32 -> vector<16x128xf32>
    %c72_568 = arith.constant 72 : index
    %c0_569 = arith.constant 0 : index
    %c0_570 = arith.constant 0 : index
    %847 = vector.load %arg5[%c72_568, %c0_569, %c0_570] : memref<93x16x128xf32, #tpu.memory_space<vmem>>, vector<1x16x128xf32>
    %848 = vector.shape_cast %847 : vector<1x16x128xf32> to vector<16x128xf32>
    %849 = arith.mulf %846, %848 : vector<16x128xf32>
    %850 = arith.addf %845, %849 : vector<16x128xf32>
    %c4_i32_571 = arith.constant 4 : i32
    %851 = tpu.dynamic_rotate %795 by %c4_i32_571 dim 1 : vector<16x128xf32>, i32 -> vector<16x128xf32>
    %c73_572 = arith.constant 73 : index
    %c0_573 = arith.constant 0 : index
    %c0_574 = arith.constant 0 : index
    %852 = vector.load %arg5[%c73_572, %c0_573, %c0_574] : memref<93x16x128xf32, #tpu.memory_space<vmem>>, vector<1x16x128xf32>
    %853 = vector.shape_cast %852 : vector<1x16x128xf32> to vector<16x128xf32>
    %854 = arith.mulf %851, %853 : vector<16x128xf32>
    %855 = arith.addf %850, %854 : vector<16x128xf32>
    %c3_i32_575 = arith.constant 3 : i32
    %856 = tpu.dynamic_rotate %795 by %c3_i32_575 dim 1 : vector<16x128xf32>, i32 -> vector<16x128xf32>
    %c74_576 = arith.constant 74 : index
    %c0_577 = arith.constant 0 : index
    %c0_578 = arith.constant 0 : index
    %857 = vector.load %arg5[%c74_576, %c0_577, %c0_578] : memref<93x16x128xf32, #tpu.memory_space<vmem>>, vector<1x16x128xf32>
    %858 = vector.shape_cast %857 : vector<1x16x128xf32> to vector<16x128xf32>
    %859 = arith.mulf %856, %858 : vector<16x128xf32>
    %860 = arith.addf %855, %859 : vector<16x128xf32>
    %c2_i32_579 = arith.constant 2 : i32
    %861 = tpu.dynamic_rotate %795 by %c2_i32_579 dim 1 : vector<16x128xf32>, i32 -> vector<16x128xf32>
    %c75_580 = arith.constant 75 : index
    %c0_581 = arith.constant 0 : index
    %c0_582 = arith.constant 0 : index
    %862 = vector.load %arg5[%c75_580, %c0_581, %c0_582] : memref<93x16x128xf32, #tpu.memory_space<vmem>>, vector<1x16x128xf32>
    %863 = vector.shape_cast %862 : vector<1x16x128xf32> to vector<16x128xf32>
    %864 = arith.mulf %861, %863 : vector<16x128xf32>
    %865 = arith.addf %860, %864 : vector<16x128xf32>
    %c1_i32_583 = arith.constant 1 : i32
    %866 = tpu.dynamic_rotate %795 by %c1_i32_583 dim 1 : vector<16x128xf32>, i32 -> vector<16x128xf32>
    %c76_584 = arith.constant 76 : index
    %c0_585 = arith.constant 0 : index
    %c0_586 = arith.constant 0 : index
    %867 = vector.load %arg5[%c76_584, %c0_585, %c0_586] : memref<93x16x128xf32, #tpu.memory_space<vmem>>, vector<1x16x128xf32>
    %868 = vector.shape_cast %867 : vector<1x16x128xf32> to vector<16x128xf32>
    %869 = arith.mulf %866, %868 : vector<16x128xf32>
    %870 = arith.addf %865, %869 : vector<16x128xf32>
    %c77_587 = arith.constant 77 : index
    %c0_588 = arith.constant 0 : index
    %c0_589 = arith.constant 0 : index
    %871 = vector.load %arg5[%c77_587, %c0_588, %c0_589] : memref<93x16x128xf32, #tpu.memory_space<vmem>>, vector<1x16x128xf32>
    %872 = vector.shape_cast %871 : vector<1x16x128xf32> to vector<16x128xf32>
    %873 = arith.mulf %795, %872 : vector<16x128xf32>
    %874 = arith.addf %870, %873 : vector<16x128xf32>
    %c127_i32_590 = arith.constant 127 : i32
    %875 = tpu.dynamic_rotate %795 by %c127_i32_590 dim 1 : vector<16x128xf32>, i32 -> vector<16x128xf32>
    %c78_591 = arith.constant 78 : index
    %c0_592 = arith.constant 0 : index
    %c0_593 = arith.constant 0 : index
    %876 = vector.load %arg5[%c78_591, %c0_592, %c0_593] : memref<93x16x128xf32, #tpu.memory_space<vmem>>, vector<1x16x128xf32>
    %877 = vector.shape_cast %876 : vector<1x16x128xf32> to vector<16x128xf32>
    %878 = arith.mulf %875, %877 : vector<16x128xf32>
    %879 = arith.addf %874, %878 : vector<16x128xf32>
    %c126_i32_594 = arith.constant 126 : i32
    %880 = tpu.dynamic_rotate %795 by %c126_i32_594 dim 1 : vector<16x128xf32>, i32 -> vector<16x128xf32>
    %c79_595 = arith.constant 79 : index
    %c0_596 = arith.constant 0 : index
    %c0_597 = arith.constant 0 : index
    %881 = vector.load %arg5[%c79_595, %c0_596, %c0_597] : memref<93x16x128xf32, #tpu.memory_space<vmem>>, vector<1x16x128xf32>
    %882 = vector.shape_cast %881 : vector<1x16x128xf32> to vector<16x128xf32>
    %883 = arith.mulf %880, %882 : vector<16x128xf32>
    %884 = arith.addf %879, %883 : vector<16x128xf32>
    %c125_i32_598 = arith.constant 125 : i32
    %885 = tpu.dynamic_rotate %795 by %c125_i32_598 dim 1 : vector<16x128xf32>, i32 -> vector<16x128xf32>
    %c80_599 = arith.constant 80 : index
    %c0_600 = arith.constant 0 : index
    %c0_601 = arith.constant 0 : index
    %886 = vector.load %arg5[%c80_599, %c0_600, %c0_601] : memref<93x16x128xf32, #tpu.memory_space<vmem>>, vector<1x16x128xf32>
    %887 = vector.shape_cast %886 : vector<1x16x128xf32> to vector<16x128xf32>
    %888 = arith.mulf %885, %887 : vector<16x128xf32>
    %889 = arith.addf %884, %888 : vector<16x128xf32>
    %c124_i32_602 = arith.constant 124 : i32
    %890 = tpu.dynamic_rotate %795 by %c124_i32_602 dim 1 : vector<16x128xf32>, i32 -> vector<16x128xf32>
    %c81_603 = arith.constant 81 : index
    %c0_604 = arith.constant 0 : index
    %c0_605 = arith.constant 0 : index
    %891 = vector.load %arg5[%c81_603, %c0_604, %c0_605] : memref<93x16x128xf32, #tpu.memory_space<vmem>>, vector<1x16x128xf32>
    %892 = vector.shape_cast %891 : vector<1x16x128xf32> to vector<16x128xf32>
    %893 = arith.mulf %890, %892 : vector<16x128xf32>
    %894 = arith.addf %889, %893 : vector<16x128xf32>
    %c123_i32_606 = arith.constant 123 : i32
    %895 = tpu.dynamic_rotate %795 by %c123_i32_606 dim 1 : vector<16x128xf32>, i32 -> vector<16x128xf32>
    %c82_607 = arith.constant 82 : index
    %c0_608 = arith.constant 0 : index
    %c0_609 = arith.constant 0 : index
    %896 = vector.load %arg5[%c82_607, %c0_608, %c0_609] : memref<93x16x128xf32, #tpu.memory_space<vmem>>, vector<1x16x128xf32>
    %897 = vector.shape_cast %896 : vector<1x16x128xf32> to vector<16x128xf32>
    %898 = arith.mulf %895, %897 : vector<16x128xf32>
    %899 = arith.addf %894, %898 : vector<16x128xf32>
    %c122_i32_610 = arith.constant 122 : i32
    %900 = tpu.dynamic_rotate %795 by %c122_i32_610 dim 1 : vector<16x128xf32>, i32 -> vector<16x128xf32>
    %c83_611 = arith.constant 83 : index
    %c0_612 = arith.constant 0 : index
    %c0_613 = arith.constant 0 : index
    %901 = vector.load %arg5[%c83_611, %c0_612, %c0_613] : memref<93x16x128xf32, #tpu.memory_space<vmem>>, vector<1x16x128xf32>
    %902 = vector.shape_cast %901 : vector<1x16x128xf32> to vector<16x128xf32>
    %903 = arith.mulf %900, %902 : vector<16x128xf32>
    %904 = arith.addf %899, %903 : vector<16x128xf32>
    %c121_i32_614 = arith.constant 121 : i32
    %905 = tpu.dynamic_rotate %795 by %c121_i32_614 dim 1 : vector<16x128xf32>, i32 -> vector<16x128xf32>
    %c84_615 = arith.constant 84 : index
    %c0_616 = arith.constant 0 : index
    %c0_617 = arith.constant 0 : index
    %906 = vector.load %arg5[%c84_615, %c0_616, %c0_617] : memref<93x16x128xf32, #tpu.memory_space<vmem>>, vector<1x16x128xf32>
    %907 = vector.shape_cast %906 : vector<1x16x128xf32> to vector<16x128xf32>
    %908 = arith.mulf %905, %907 : vector<16x128xf32>
    %909 = arith.addf %904, %908 : vector<16x128xf32>
    %c120_i32_618 = arith.constant 120 : i32
    %910 = tpu.dynamic_rotate %795 by %c120_i32_618 dim 1 : vector<16x128xf32>, i32 -> vector<16x128xf32>
    %c85_619 = arith.constant 85 : index
    %c0_620 = arith.constant 0 : index
    %c0_621 = arith.constant 0 : index
    %911 = vector.load %arg5[%c85_619, %c0_620, %c0_621] : memref<93x16x128xf32, #tpu.memory_space<vmem>>, vector<1x16x128xf32>
    %912 = vector.shape_cast %911 : vector<1x16x128xf32> to vector<16x128xf32>
    %913 = arith.mulf %910, %912 : vector<16x128xf32>
    %914 = arith.addf %909, %913 : vector<16x128xf32>
    %c119_i32_622 = arith.constant 119 : i32
    %915 = tpu.dynamic_rotate %795 by %c119_i32_622 dim 1 : vector<16x128xf32>, i32 -> vector<16x128xf32>
    %c86_623 = arith.constant 86 : index
    %c0_624 = arith.constant 0 : index
    %c0_625 = arith.constant 0 : index
    %916 = vector.load %arg5[%c86_623, %c0_624, %c0_625] : memref<93x16x128xf32, #tpu.memory_space<vmem>>, vector<1x16x128xf32>
    %917 = vector.shape_cast %916 : vector<1x16x128xf32> to vector<16x128xf32>
    %918 = arith.mulf %915, %917 : vector<16x128xf32>
    %919 = arith.addf %914, %918 : vector<16x128xf32>
    %c118_i32_626 = arith.constant 118 : i32
    %920 = tpu.dynamic_rotate %795 by %c118_i32_626 dim 1 : vector<16x128xf32>, i32 -> vector<16x128xf32>
    %c87_627 = arith.constant 87 : index
    %c0_628 = arith.constant 0 : index
    %c0_629 = arith.constant 0 : index
    %921 = vector.load %arg5[%c87_627, %c0_628, %c0_629] : memref<93x16x128xf32, #tpu.memory_space<vmem>>, vector<1x16x128xf32>
    %922 = vector.shape_cast %921 : vector<1x16x128xf32> to vector<16x128xf32>
    %923 = arith.mulf %920, %922 : vector<16x128xf32>
    %924 = arith.addf %919, %923 : vector<16x128xf32>
    %c117_i32_630 = arith.constant 117 : i32
    %925 = tpu.dynamic_rotate %795 by %c117_i32_630 dim 1 : vector<16x128xf32>, i32 -> vector<16x128xf32>
    %c88_631 = arith.constant 88 : index
    %c0_632 = arith.constant 0 : index
    %c0_633 = arith.constant 0 : index
    %926 = vector.load %arg5[%c88_631, %c0_632, %c0_633] : memref<93x16x128xf32, #tpu.memory_space<vmem>>, vector<1x16x128xf32>
    %927 = vector.shape_cast %926 : vector<1x16x128xf32> to vector<16x128xf32>
    %928 = arith.mulf %925, %927 : vector<16x128xf32>
    %929 = arith.addf %924, %928 : vector<16x128xf32>
    %c116_i32_634 = arith.constant 116 : i32
    %930 = tpu.dynamic_rotate %795 by %c116_i32_634 dim 1 : vector<16x128xf32>, i32 -> vector<16x128xf32>
    %c89_635 = arith.constant 89 : index
    %c0_636 = arith.constant 0 : index
    %c0_637 = arith.constant 0 : index
    %931 = vector.load %arg5[%c89_635, %c0_636, %c0_637] : memref<93x16x128xf32, #tpu.memory_space<vmem>>, vector<1x16x128xf32>
    %932 = vector.shape_cast %931 : vector<1x16x128xf32> to vector<16x128xf32>
    %933 = arith.mulf %930, %932 : vector<16x128xf32>
    %934 = arith.addf %929, %933 : vector<16x128xf32>
    %c115_i32_638 = arith.constant 115 : i32
    %935 = tpu.dynamic_rotate %795 by %c115_i32_638 dim 1 : vector<16x128xf32>, i32 -> vector<16x128xf32>
    %c90_639 = arith.constant 90 : index
    %c0_640 = arith.constant 0 : index
    %c0_641 = arith.constant 0 : index
    %936 = vector.load %arg5[%c90_639, %c0_640, %c0_641] : memref<93x16x128xf32, #tpu.memory_space<vmem>>, vector<1x16x128xf32>
    %937 = vector.shape_cast %936 : vector<1x16x128xf32> to vector<16x128xf32>
    %938 = arith.mulf %935, %937 : vector<16x128xf32>
    %939 = arith.addf %934, %938 : vector<16x128xf32>
    %c114_i32_642 = arith.constant 114 : i32
    %940 = tpu.dynamic_rotate %795 by %c114_i32_642 dim 1 : vector<16x128xf32>, i32 -> vector<16x128xf32>
    %c91_643 = arith.constant 91 : index
    %c0_644 = arith.constant 0 : index
    %c0_645 = arith.constant 0 : index
    %941 = vector.load %arg5[%c91_643, %c0_644, %c0_645] : memref<93x16x128xf32, #tpu.memory_space<vmem>>, vector<1x16x128xf32>
    %942 = vector.shape_cast %941 : vector<1x16x128xf32> to vector<16x128xf32>
    %943 = arith.mulf %940, %942 : vector<16x128xf32>
    %944 = arith.addf %939, %943 : vector<16x128xf32>
    %c113_i32_646 = arith.constant 113 : i32
    %945 = tpu.dynamic_rotate %795 by %c113_i32_646 dim 1 : vector<16x128xf32>, i32 -> vector<16x128xf32>
    %c92_647 = arith.constant 92 : index
    %c0_648 = arith.constant 0 : index
    %c0_649 = arith.constant 0 : index
    %946 = vector.load %arg5[%c92_647, %c0_648, %c0_649] : memref<93x16x128xf32, #tpu.memory_space<vmem>>, vector<1x16x128xf32>
    %947 = vector.shape_cast %946 : vector<1x16x128xf32> to vector<16x128xf32>
    %948 = arith.mulf %945, %947 : vector<16x128xf32>
    %949 = arith.addf %944, %948 : vector<16x128xf32>
    %950 = arith.mulf %949, %5 : vector<16x128xf32>
    %951 = arith.addf %950, %6 : vector<16x128xf32>
    %952 = arith.addf %951, %8 : vector<16x128xf32>
    %c0_650 = arith.constant 0 : index
    %c0_651 = arith.constant 0 : index
    %c0_652 = arith.constant 0 : index
    %953 = vector.load %arg8[%c0_650, %c0_651, %c0_652] : memref<1x16x128xf32, #tpu.memory_space<vmem>>, vector<1x16x128xf32>
    %954 = vector.shape_cast %953 : vector<1x16x128xf32> to vector<16x128xf32>
    %955 = vector.shape_cast %952 : vector<16x128xf32> to vector<1x16x128xf32>
    tpu.vector_store %arg8[%c0_650, %c0_651, %c0_652], %955 {strides = array<i32>} : memref<1x16x128xf32, #tpu.memory_space<vmem>>, vector<1x16x128xf32>,
    return
  }
  func.func @transform_0(%arg0: i32) -> (i32, i32, i32) {
    %c0_i32 = arith.constant 0 : i32
    %c0_i32_0 = arith.constant 0 : i32
    %c0_i32_1 = arith.constant 0 : i32
    return %arg0, %c0_i32, %c0_i32_0 : i32, i32, i32
  }
  func.func @transform_1(%arg0: i32) -> (i32, i32, i32) {
    %c0_i32 = arith.constant 0 : i32
    %c0_i32_0 = arith.constant 0 : i32
    %c0_i32_1 = arith.constant 0 : i32
    %c0_i32_2 = arith.constant 0 : i32
    return %c0_i32, %c0_i32_0, %c0_i32_1 : i32, i32, i32
  }
  func.func @transform_2(%arg0: i32) -> (i32, i32) {
    %c0_i32 = arith.constant 0 : i32
    %c0_i32_0 = arith.constant 0 : i32
    %c0_i32_1 = arith.constant 0 : i32
    return %c0_i32, %c0_i32_0 : i32, i32
  }
  func.func @transform_3(%arg0: i32) -> (i32, i32) {
    %c0_i32 = arith.constant 0 : i32
    %c0_i32_0 = arith.constant 0 : i32
    %c0_i32_1 = arith.constant 0 : i32
    return %c0_i32, %c0_i32_0 : i32, i32
  }
  func.func @transform_4(%arg0: i32) -> (i32, i32, i32) {
    %c0_i32 = arith.constant 0 : i32
    %c0_i32_0 = arith.constant 0 : i32
    %c0_i32_1 = arith.constant 0 : i32
    %c0_i32_2 = arith.constant 0 : i32
    return %c0_i32, %c0_i32_0, %c0_i32_1 : i32, i32, i32
  }
  func.func @transform_5(%arg0: i32) -> (i32, i32) {
    %c0_i32 = arith.constant 0 : i32
    %c0_i32_0 = arith.constant 0 : i32
    %c0_i32_1 = arith.constant 0 : i32
    return %c0_i32, %c0_i32_0 : i32, i32
  }
  func.func @transform_6(%arg0: i32) -> (i32, i32) {
    %c0_i32 = arith.constant 0 : i32
    %c0_i32_0 = arith.constant 0 : i32
    %c0_i32_1 = arith.constant 0 : i32
    return %c0_i32, %c0_i32_0 : i32, i32
  }
  func.func @transform_7(%arg0: i32) -> (i32, i32, i32) {
    %c0_i32 = arith.constant 0 : i32
    %c0_i32_0 = arith.constant 0 : i32
    %c0_i32_1 = arith.constant 0 : i32
    return %arg0, %c0_i32, %c0_i32_0 : i32, i32, i32
  }
}

</mosaic_0001>

<llo_original>
// kernel: tile.23
$region0: #{tile.23}
  #allocation0 [shape = 's32[1]{0}', space=sflag, size = 0x4, scoped, tag = 'scoped memory for tile.23']
  %s0 = inlined_call_operand.vmem [shape: f32[8], index: 0, kind: input, shape index: {}]
  %s1 = inlined_call_operand.vmem [shape: f32[16,8], index: 1, kind: output, shape index: {}]
  // Predicated region
  $region2: #{tile.23} parent=0 // pred_check
    _
  $region3: #{tile.23} parent=0 // pred_check_branch
    %3 = sbr.rel (0) target = $region5
  $region4: #{tile.23} parent=0 // pred_region
    _
  $region5: #{tile.23} parent=0 // pred_fallthru
    _
  %v4 = vld [vmem:[%s0] ss:$0 sm:$0xff]
  %5 = vst [vmem:[%s1] sm:$0xff] %v4
  %s6 = scalar_lea.vmem %s1, 8
  %7 = vst [vmem:[%s6] sm:$0xff] %v4

// kernel: layer2_forward.1
$region0: #{layer2_forward.1}
  #allocation0 [shape = 'u32[]', space=smem, size = 0x4, offset = 0x4, fixed_abs, tag = 'smem constant byte address 0x4 - core index']
  #allocation1 [shape = 'u32[144,128]{1,0:T(1,128)}', space=vmem, size = 0x12000, scoped, tag = 'internal scratch']
  #allocation2 [shape = 'f32[18,128]{1,0:T(8,128)}', space=vmem, size = 0x3000, scoped, tag = 'scratch operand']
  %s0 = inlined_call_operand.vmem [shape: f32[2,16,128], index: 0, kind: input, shape index: {}]
  %s1 = inlined_call_operand.vmem [shape: f32[93,16,128], index: 1, kind: input, shape index: {}]
  %s2 = inlined_call_operand.vmem [shape: f32[16,128], index: 2, kind: input, shape index: {}]
  %s3 = inlined_call_operand.vmem [shape: f32[16,128], index: 3, kind: input, shape index: {}]
  %s4 = inlined_call_operand.vmem [shape: f32[93,16,128], index: 4, kind: input, shape index: {}]
  %s5 = inlined_call_operand.vmem [shape: f32[16,128], index: 5, kind: input, shape index: {}]
  %s6 = inlined_call_operand.vmem [shape: f32[16,128], index: 6, kind: input, shape index: {}]
  %s7 = inlined_call_operand.vmem [shape: f32[2,16,128], index: 7, kind: output, shape index: {}]
  %s8 = sld [smem:[#allocation0]]
  $region61: #{layer2_forward.1} parent=0
    _
  %s10 = ssub.s32 1, %s8
  %s11 = scalar_select 0, %s10, %s8
  loop: start=0, step=1, limit=4
  $region2: #{layer2_forward.1} parent=0 // loop_pre_header
    _
  $region3: #{layer2_forward.1} parent=0 // loop_header
    %s13 = sphi 0, %s17
    %p14 = scmp.ge.s32.totalorder %s13, 4
    %s23 = sphi 0, %s25
    %s26 = sphi 0, %s23
    %s27 = sphi 0, %s26
    %s43 = sphi 0, %s27
    %s47 = sphi 0, %s47
    %s49 = sphi 0, %s47
    %s50 = sphi 0, %s49
    %s64 = sphi 0, %s50
    %s68 = sphi 0, %s68
    %s70 = sphi 0, %s68
    %s71 = sphi 0, %s70
    %s85 = sphi 0, %s71
    %s89 = sphi 0, %s89
    %s91 = sphi 0, %s89
    %s92 = sphi 0, %s91
    %s106 = sphi 0, %s92
    %s110 = sphi 0, %s110
    %s112 = sphi 0, %s110
    %s113 = sphi 0, %s112
    %s127 = sphi 0, %s113
    %s131 = sphi 0, %s131
    %s133 = sphi 0, %s131
    %s134 = sphi 0, %s133
    %s148 = sphi 0, %s134
    %s152 = sphi 0, %s152
    %s154 = sphi 0, %s152
    %s155 = sphi 0, %s154
    %s169 = sphi 0, %s155
    %s175 = sphi 0, %s177
    %s178 = sphi 0, %s175
    %s179 = sphi 0, %s178
    %s195 = sphi 0, %s179
  $region4: #{layer2_forward.1} parent=0 // loop_header_branch
    %16 = sbr.rel (%p14) target = $region8
  $region5: #{layer2_forward.1} parent=0 // loop_body
    %s18 = ssub.s32 %s13, 1
    %s19 = ssub.s32 %s13, 2
    %s20 = sadd.s32 %s13, 1
    %s21 = ssub.s32 %s13, %s20
    %p22 = scmp.eq.s32.totalorder %s21, 0
    %s24 = sadd.s32 %s23, 1
    %s25 = scalar_select %p22, %s23, %s24
    %p28 = pneg %p22
    %p29 = scmp.eq.s32.totalorder %s13, 1
    %p30 = por %p28, %p29
    %p31 = scmp.ne.s32.totalorder %s23, %s26
    %p32 = scmp.eq.s32.totalorder %s13, 0
    %p33 = por %p31, %p32
    %p34 = scmp.ne.s32.totalorder %s23, %s26
    %p35 = scmp.eq.s32.totalorder %s18, 1
    %p36 = por %p34, %p35
    %p37 = scmp.ne.s32.totalorder %s26, %s27
    %p38 = scmp.eq.s32.totalorder %s18, 0
    %p39 = por %p37, %p38
    %p40 = scmp.ne.s32.totalorder %s26, %s27
    %p41 = scmp.eq.s32.totalorder %s19, 1
    %p42 = por %p40, %p41
    %p44 = scmp.ne.s32.totalorder %s27, %s43
    %p45 = scmp.eq.s32.totalorder %s19, 0
    %p46 = por %p44, %p45
    %s48 = sadd.s32 %s47, 1
    %p51 = scmp.eq.s32.totalorder %s13, 1
    %p52 = scmp.ne.s32.totalorder %s47, %s49
    %p53 = scmp.eq.s32.totalorder %s13, 0
    %p54 = por %p52, %p53
    %p55 = scmp.ne.s32.totalorder %s47, %s49
    %p56 = scmp.eq.s32.totalorder %s18, 1
    %p57 = por %p55, %p56
    %p58 = scmp.ne.s32.totalorder %s49, %s50
    %p59 = scmp.eq.s32.totalorder %s18, 0
    %p60 = por %p58, %p59
    %p61 = scmp.ne.s32.totalorder %s49, %s50
    %p62 = scmp.eq.s32.totalorder %s19, 1
    %p63 = por %p61, %p62
    %p65 = scmp.ne.s32.totalorder %s50, %s64
    %p66 = scmp.eq.s32.totalorder %s19, 0
    %p67 = por %p65, %p66
    %s69 = sadd.s32 %s68, 1
    %p72 = scmp.eq.s32.totalorder %s13, 1
    %p73 = scmp.ne.s32.totalorder %s68, %s70
    %p74 = scmp.eq.s32.totalorder %s13, 0
    %p75 = por %p73, %p74
    %p76 = scmp.ne.s32.totalorder %s68, %s70
    %p77 = scmp.eq.s32.totalorder %s18, 1
    %p78 = por %p76, %p77
    %p79 = scmp.ne.s32.totalorder %s70, %s71
    %p80 = scmp.eq.s32.totalorder %s18, 0
    %p81 = por %p79, %p80
    %p82 = scmp.ne.s32.totalorder %s70, %s71
    %p83 = scmp.eq.s32.totalorder %s19, 1
    %p84 = por %p82, %p83
    %p86 = scmp.ne.s32.totalorder %s71, %s85
    %p87 = scmp.eq.s32.totalorder %s19, 0
    %p88 = por %p86, %p87
    %s90 = sadd.s32 %s89, 1
    %p93 = scmp.eq.s32.totalorder %s13, 1
    %p94 = scmp.ne.s32.totalorder %s89, %s91
    %p95 = scmp.eq.s32.totalorder %s13, 0
    %p96 = por %p94, %p95
    %p97 = scmp.ne.s32.totalorder %s89, %s91
    %p98 = scmp.eq.s32.totalorder %s18, 1
    %p99 = por %p97, %p98
    %p100 = scmp.ne.s32.totalorder %s91, %s92
    %p101 = scmp.eq.s32.totalorder %s18, 0
    %p102 = por %p100, %p101
    %p103 = scmp.ne.s32.totalorder %s91, %s92
    %p104 = scmp.eq.s32.totalorder %s19, 1
    %p105 = por %p103, %p104
    %p107 = scmp.ne.s32.totalorder %s92, %s106
    %p108 = scmp.eq.s32.totalorder %s19, 0
    %p109 = por %p107, %p108
    %s111 = sadd.s32 %s110, 1
    %p114 = scmp.eq.s32.totalorder %s13, 1
    %p115 = scmp.ne.s32.totalorder %s110, %s112
    %p116 = scmp.eq.s32.totalorder %s13, 0
    %p117 = por %p115, %p116
    %p118 = scmp.ne.s32.totalorder %s110, %s112
    %p119 = scmp.eq.s32.totalorder %s18, 1
    %p120 = por %p118, %p119
    %p121 = scmp.ne.s32.totalorder %s112, %s113
    %p122 = scmp.eq.s32.totalorder %s18, 0
    %p123 = por %p121, %p122
    %p124 = scmp.ne.s32.totalorder %s112, %s113
    %p125 = scmp.eq.s32.totalorder %s19, 1
    %p126 = por %p124, %p125
    %p128 = scmp.ne.s32.totalorder %s113, %s127
    %p129 = scmp.eq.s32.totalorder %s19, 0
    %p130 = por %p128, %p129
    %s132 = sadd.s32 %s131, 1
    %p135 = scmp.eq.s32.totalorder %s13, 1
    %p136 = scmp.ne.s32.totalorder %s131, %s133
    %p137 = scmp.eq.s32.totalorder %s13, 0
    %p138 = por %p136, %p137
    %p139 = scmp.ne.s32.totalorder %s131, %s133
    %p140 = scmp.eq.s32.totalorder %s18, 1
    %p141 = por %p139, %p140
    %p142 = scmp.ne.s32.totalorder %s133, %s134
    %p143 = scmp.eq.s32.totalorder %s18, 0
    %p144 = por %p142, %p143
    %p145 = scmp.ne.s32.totalorder %s133, %s134
    %p146 = scmp.eq.s32.totalorder %s19, 1
    %p147 = por %p145, %p146
    %p149 = scmp.ne.s32.totalorder %s134, %s148
    %p150 = scmp.eq.s32.totalorder %s19, 0
    %p151 = por %p149, %p150
    %s153 = sadd.s32 %s152, 1
    %p156 = scmp.eq.s32.totalorder %s13, 1
    %p157 = scmp.ne.s32.totalorder %s152, %s154
    %p158 = scmp.eq.s32.totalorder %s13, 0
    %p159 = por %p157, %p158
    %p160 = scmp.ne.s32.totalorder %s152, %s154
    %p161 = scmp.eq.s32.totalorder %s18, 1
    %p162 = por %p160, %p161
    %p163 = scmp.ne.s32.totalorder %s154, %s155
    %p164 = scmp.eq.s32.totalorder %s18, 0
    %p165 = por %p163, %p164
    %p166 = scmp.ne.s32.totalorder %s154, %s155
    %p167 = scmp.eq.s32.totalorder %s19, 1
    %p168 = por %p166, %p167
    %p170 = scmp.ne.s32.totalorder %s155, %s169
    %p171 = scmp.eq.s32.totalorder %s19, 0
    %p172 = por %p170, %p171
    %s173 = ssub.s32 %s13, %s20
    %p174 = scmp.eq.s32.totalorder %s173, 0
    %s176 = sadd.s32 %s175, 1
    %s177 = scalar_select %p174, %s175, %s176
    %p180 = pneg %p174
    %p181 = scmp.eq.s32.totalorder %s13, 1
    %p182 = por %p180, %p181
    %p183 = scmp.ne.s32.totalorder %s175, %s178
    %p184 = scmp.eq.s32.totalorder %s13, 0
    %p185 = por %p183, %p184
    %p186 = scmp.ne.s32.totalorder %s175, %s178
    %p187 = scmp.eq.s32.totalorder %s18, 1
    %p188 = por %p186, %p187
    %p189 = scmp.ne.s32.totalorder %s178, %s179
    %p190 = scmp.eq.s32.totalorder %s18, 0
    %p191 = por %p189, %p190
    %p192 = scmp.ne.s32.totalorder %s178, %s179
    %p193 = scmp.eq.s32.totalorder %s19, 1
    %p194 = por %p192, %p193
    %p196 = scmp.ne.s32.totalorder %s179, %s195
    %p197 = scmp.eq.s32.totalorder %s19, 0
    %p198 = por %p196, %p197
    %p199 = scmp.le.s32.totalorder 1, %s13
    %p200 = scmp.lt.s32.totalorder %s13, 3
    %p201 = pnand %p199, %p200
    %p202 = pneg %p201
    // Predicated region
    $region9: #{layer2_forward.1} parent=5 // pred_check
      _
    $region10: #{layer2_forward.1} parent=5 // pred_check_branch
      %204 = sbr.rel (%p201) target = $region12
    $region11: #{layer2_forward.1} parent=5 // pred_region
      %s205 = ssub.s32 %s13, 1
      // Predicated region
      $region13: #{layer2_forward.1} parent=11 // pred_check
        %p206 = pneg %p60
      $region14: #{layer2_forward.1} parent=11 // pred_check_branch
        %208 = sbr.rel (%p206) target = $region16
      $region15: #{layer2_forward.1} parent=11 // pred_region
        _
      $region16: #{layer2_forward.1} parent=11 // pred_fallthru
        _
      // Predicated region
      $region17: #{layer2_forward.1} parent=11 // pred_check
        %p209 = pneg %p81
      $region18: #{layer2_forward.1} parent=11 // pred_check_branch
        %211 = sbr.rel (%p209) target = $region20
      $region19: #{layer2_forward.1} parent=11 // pred_region
        _
      $region20: #{layer2_forward.1} parent=11 // pred_fallthru
        _
      // Predicated region
      $region21: #{layer2_forward.1} parent=11 // pred_check
        %p212 = pneg %p102
      $region22: #{layer2_forward.1} parent=11 // pred_check_branch
        %214 = sbr.rel (%p212) target = $region24
      $region23: #{layer2_forward.1} parent=11 // pred_region
        _
      $region24: #{layer2_forward.1} parent=11 // pred_fallthru
        _
      // Predicated region
      $region25: #{layer2_forward.1} parent=11 // pred_check
        %p215 = pneg %p123
      $region26: #{layer2_forward.1} parent=11 // pred_check_branch
        %217 = sbr.rel (%p215) target = $region28
      $region27: #{layer2_forward.1} parent=11 // pred_region
        _
      $region28: #{layer2_forward.1} parent=11 // pred_fallthru
        _
      // Predicated region
      $region29: #{layer2_forward.1} parent=11 // pred_check
        %p218 = pneg %p144
      $region30: #{layer2_forward.1} parent=11 // pred_check_branch
        %220 = sbr.rel (%p218) target = $region32
      $region31: #{layer2_forward.1} parent=11 // pred_region
        _
      $region32: #{layer2_forward.1} parent=11 // pred_fallthru
        _
      // Predicated region
      $region33: #{layer2_forward.1} parent=11 // pred_check
        %p221 = pneg %p165
      $region34: #{layer2_forward.1} parent=11 // pred_check_branch
        %223 = sbr.rel (%p221) target = $region36
      $region35: #{layer2_forward.1} parent=11 // pred_region
        _
      $region36: #{layer2_forward.1} parent=11 // pred_fallthru
        _
    $region12: #{layer2_forward.1} parent=5 // pred_fallthru
      _
    %p224 = scmp.lt.s32.totalorder %s13, 2
    // Predicated region
    $region37: #{layer2_forward.1} parent=5 // pred_check
      %p225 = pneg %p224
    $region38: #{layer2_forward.1} parent=5 // pred_check_branch
      %227 = sbr.rel (%p225) target = $region40
    $region39: #{layer2_forward.1} parent=5 // pred_region
      // Predicated region
      $region41: #{layer2_forward.1} parent=39 // pred_check
        %p228 = pneg %p33
      $region42: #{layer2_forward.1} parent=39 // pred_check_branch
        %230 = sbr.rel (%p228) target = $region44
      $region43: #{layer2_forward.1} parent=39 // pred_region
        %p231 = scmp.lt.s32.totalorder %s13, 1
        %s232 = scalar_select %p231, %s13, 1
        %s233 = smul.addr %s232, 2
        %s234 = smul.addr %s233, 8
        %s235 = scalar_lea.vmem %s0, %s234
      $region44: #{layer2_forward.1} parent=39 // pred_fallthru
        _
    $region40: #{layer2_forward.1} parent=5 // pred_fallthru
      _
    %p236 = scmp.le.s32.totalorder 1, %s13
    %p237 = scmp.lt.s32.totalorder %s13, 3
    %p238 = pnand %p236, %p237
    %p239 = pneg %p238
    // Predicated region
    $region45: #{layer2_forward.1} parent=5 // pred_check
      _
    $region46: #{layer2_forward.1} parent=5 // pred_check_branch
      %241 = sbr.rel (%p238) target = $region48
    $region47: #{layer2_forward.1} parent=5 // pred_region
      %s242 = ssub.s32 %s13, 1
      %p243 = scmp.lt.s32.totalorder %s18, 1
      %s244 = scalar_select %p243, %s18, 1
      %s245 = smul.addr %s244, 2
      %s246 = smul.addr %s245, 8
      %s247 = scalar_lea.vmem %s0, %s246
      %p248 = pneg %p39
      %p249 = pneg %p36
      %p250 = pneg %p60
      %p251 = pneg %p57
      %p252 = pneg %p81
      %p253 = pneg %p78
      %p254 = pneg %p102
      %p255 = pneg %p99
      %p256 = pneg %p123
      %p257 = pneg %p120
      %p258 = pneg %p144
      %p259 = pneg %p141
      %p260 = pneg %p165
      %p261 = pneg %p162
      %p262 = pneg %p191
      %p263 = pneg %p188
      %p264 = scmp.lt.s32.totalorder %s18, 1
      %s265 = scalar_select %p264, %s18, 1
      %s266 = smul.addr %s265, 2
      %s267 = smul.addr %s266, 8
      %s268 = scalar_lea.vmem %s7, %s267
      %p269 = scmp.lt.s32.totalorder %s18, 1
      %s270 = scalar_select %p269, %s18, 1
      %s271 = smul.addr %s270, 2
      %s272 = smul.addr %s271, 8
      %s273 = scalar_lea.vmem %s0, %s272
      %p274 = scmp.lt.s32.totalorder %s18, 1
      %s275 = scalar_select %p274, %s18, 1
      %s276 = smul.addr %s275, 2
      %s277 = smul.addr %s276, 8
      %s278 = scalar_lea.vmem %s7, %s277
      %279 = vst [vmem:[#allocation2] sm:$0x1] 0.0
      %280 = vst [vmem:[#allocation2 + $0x11] sm:$0x1] 0.0
      %v281 = vld [vmem:[%s2] sm:$0xff]
      %v282 = vld [vmem:[%s2 + $0x8] sm:$0xff]
      %v283 = vld [vmem:[%s3] sm:$0xff]
      %v284 = vld [vmem:[%s3 + $0x8] sm:$0xff]
      %v285 = vld [vmem:[%s5] sm:$0xff]
      %v286 = vld [vmem:[%s5 + $0x8] sm:$0xff]
      %v287 = vld [vmem:[%s6] sm:$0xff]
      %v288 = vld [vmem:[%s6 + $0x8] sm:$0xff]
      %v289 = vld [vmem:[%s273] sm:$0xff]
      %v290 = vld [vmem:[%s273 + $0x8] sm:$0xff]
      %291 = vst [vmem:[#allocation2 + $0x1] sm:$0xff] %v289
      %292 = vst [vmem:[#allocation2 + $0x9] sm:$0xff] %v290
      %v293 = vld [vmem:[#allocation2] sm:$0xff]
      %v294 = vld [vmem:[#allocation2 + $0x8] sm:$0xff]
      %295 = vrot.lane.b32.xlu0 %v293, 15
      %v296 = vpop.permute.xlu0 %295
      %297 = vrot.lane.b32.xlu0 %v294, 15
      %v298 = vpop.permute.xlu0 %297
      %v299 = vld [vmem:[%s1] sm:$0xff]
      %v300 = vld [vmem:[%s1 + $0x8] sm:$0xff]
      %v301 = vmul.f32 %v296, %v299
      %v302 = vmul.f32 %v298, %v300
      %v303 = vadd.f32 %v301, 0.0
      %v304 = vadd.f32 %v302, 0.0
      %305 = vrot.lane.b32.xlu0 %v293, 14
      %v306 = vpop.permute.xlu0 %305
      %307 = vrot.lane.b32.xlu0 %v294, 14
      %v308 = vpop.permute.xlu0 %307
      %s309 = scalar_lea.vmem %s1, 16
      %v310 = vld [vmem:[%s309] sm:$0xff]
      %v311 = vld [vmem:[%s309 + $0x8] sm:$0xff]
      %v312 = vmul.f32 %v306, %v310
      %v313 = vmul.f32 %v308, %v311
      %v314 = vadd.f32 %v303, %v312
      %v315 = vadd.f32 %v304, %v313
      %316 = vrot.lane.b32.xlu0 %v293, 13
      %v317 = vpop.permute.xlu0 %316
      %318 = vrot.lane.b32.xlu0 %v294, 13
      %v319 = vpop.permute.xlu0 %318
      %s320 = scalar_lea.vmem %s1, 32
      %v321 = vld [vmem:[%s320] sm:$0xff]
      %v322 = vld [vmem:[%s320 + $0x8] sm:$0xff]
      %v323 = vmul.f32 %v317, %v321
      %v324 = vmul.f32 %v319, %v322
      %v325 = vadd.f32 %v314, %v323
      %v326 = vadd.f32 %v315, %v324
      %327 = vrot.lane.b32.xlu0 %v293, 12
      %v328 = vpop.permute.xlu0 %327
      %329 = vrot.lane.b32.xlu0 %v294, 12
      %v330 = vpop.permute.xlu0 %329
      %s331 = scalar_lea.vmem %s1, 48
      %v332 = vld [vmem:[%s331] sm:$0xff]
      %v333 = vld [vmem:[%s331 + $0x8] sm:$0xff]
      %v334 = vmul.f32 %v328, %v332
      %v335 = vmul.f32 %v330, %v333
      %v336 = vadd.f32 %v325, %v334
      %v337 = vadd.f32 %v326, %v335
      %338 = vrot.lane.b32.xlu0 %v293, 11
      %v339 = vpop.permute.xlu0 %338
      %340 = vrot.lane.b32.xlu0 %v294, 11
      %v341 = vpop.permute.xlu0 %340
      %s342 = scalar_lea.vmem %s1, 64
      %v343 = vld [vmem:[%s342] sm:$0xff]
      %v344 = vld [vmem:[%s342 + $0x8] sm:$0xff]
      %v345 = vmul.f32 %v339, %v343
      %v346 = vmul.f32 %v341, %v344
      %v347 = vadd.f32 %v336, %v345
      %v348 = vadd.f32 %v337, %v346
      %349 = vrot.lane.b32.xlu0 %v293, 10
      %v350 = vpop.permute.xlu0 %349
      %351 = vrot.lane.b32.xlu0 %v294, 10
      %v352 = vpop.permute.xlu0 %351
      %s353 = scalar_lea.vmem %s1, 80
      %v354 = vld [vmem:[%s353] sm:$0xff]
      %v355 = vld [vmem:[%s353 + $0x8] sm:$0xff]
      %v356 = vmul.f32 %v350, %v354
      %v357 = vmul.f32 %v352, %v355
      %v358 = vadd.f32 %v347, %v356
      %v359 = vadd.f32 %v348, %v357
      %360 = vrot.lane.b32.xlu0 %v293, 9
      %v361 = vpop.permute.xlu0 %360
      %362 = vrot.lane.b32.xlu0 %v294, 9
      %v363 = vpop.permute.xlu0 %362
      %s364 = scalar_lea.vmem %s1, 96
      %v365 = vld [vmem:[%s364] sm:$0xff]
      %v366 = vld [vmem:[%s364 + $0x8] sm:$0xff]
      %v367 = vmul.f32 %v361, %v365
      %v368 = vmul.f32 %v363, %v366
      %v369 = vadd.f32 %v358, %v367
      %v370 = vadd.f32 %v359, %v368
      %371 = vrot.lane.b32.xlu0 %v293, 8
      %v372 = vpop.permute.xlu0 %371
      %373 = vrot.lane.b32.xlu0 %v294, 8
      %v374 = vpop.permute.xlu0 %373
      %s375 = scalar_lea.vmem %s1, 112
      %v376 = vld [vmem:[%s375] sm:$0xff]
      %v377 = vld [vmem:[%s375 + $0x8] sm:$0xff]
      %v378 = vmul.f32 %v372, %v376
      %v379 = vmul.f32 %v374, %v377
      %v380 = vadd.f32 %v369, %v378
      %v381 = vadd.f32 %v370, %v379
      %382 = vrot.lane.b32.xlu0 %v293, 7
      %v383 = vpop.permute.xlu0 %382
      %384 = vrot.lane.b32.xlu0 %v294, 7
      %v385 = vpop.permute.xlu0 %384
      %s386 = scalar_lea.vmem %s1, 128
      %v387 = vld [vmem:[%s386] sm:$0xff]
      %v388 = vld [vmem:[%s386 + $0x8] sm:$0xff]
      %v389 = vmul.f32 %v383, %v387
      %v390 = vmul.f32 %v385, %v388
      %v391 = vadd.f32 %v380, %v389
      %v392 = vadd.f32 %v381, %v390
      %393 = vrot.lane.b32.xlu0 %v293, 6
      %v394 = vpop.permute.xlu0 %393
      %395 = vrot.lane.b32.xlu0 %v294, 6
      %v396 = vpop.permute.xlu0 %395
      %s397 = scalar_lea.vmem %s1, 144
      %v398 = vld [vmem:[%s397] sm:$0xff]
      %v399 = vld [vmem:[%s397 + $0x8] sm:$0xff]
      %v400 = vmul.f32 %v394, %v398
      %v401 = vmul.f32 %v396, %v399
      %v402 = vadd.f32 %v391, %v400
      %v403 = vadd.f32 %v392, %v401
      %404 = vrot.lane.b32.xlu0 %v293, 5
      %v405 = vpop.permute.xlu0 %404
      %406 = vrot.lane.b32.xlu0 %v294, 5
      %v407 = vpop.permute.xlu0 %406
      %s408 = scalar_lea.vmem %s1, 160
      %v409 = vld [vmem:[%s408] sm:$0xff]
      %v410 = vld [vmem:[%s408 + $0x8] sm:$0xff]
      %v411 = vmul.f32 %v405, %v409
      %v412 = vmul.f32 %v407, %v410
      %v413 = vadd.f32 %v402, %v411
      %v414 = vadd.f32 %v403, %v412
      %415 = vrot.lane.b32.xlu0 %v293, 4
      %v416 = vpop.permute.xlu0 %415
      %417 = vrot.lane.b32.xlu0 %v294, 4
      %v418 = vpop.permute.xlu0 %417
      %s419 = scalar_lea.vmem %s1, 176
      %v420 = vld [vmem:[%s419] sm:$0xff]
      %v421 = vld [vmem:[%s419 + $0x8] sm:$0xff]
      %v422 = vmul.f32 %v416, %v420
      %v423 = vmul.f32 %v418, %v421
      %v424 = vadd.f32 %v413, %v422
      %v425 = vadd.f32 %v414, %v423
      %426 = vrot.lane.b32.xlu0 %v293, 3
      %v427 = vpop.permute.xlu0 %426
      %428 = vrot.lane.b32.xlu0 %v294, 3
      %v429 = vpop.permute.xlu0 %428
      %s430 = scalar_lea.vmem %s1, 192
      %v431 = vld [vmem:[%s430] sm:$0xff]
      %v432 = vld [vmem:[%s430 + $0x8] sm:$0xff]
      %v433 = vmul.f32 %v427, %v431
      %v434 = vmul.f32 %v429, %v432
      %v435 = vadd.f32 %v424, %v433
      %v436 = vadd.f32 %v425, %v434
      %437 = vrot.lane.b32.xlu0 %v293, 2
      %v438 = vpop.permute.xlu0 %437
      %439 = vrot.lane.b32.xlu0 %v294, 2
      %v440 = vpop.permute.xlu0 %439
      %s441 = scalar_lea.vmem %s1, 208
      %v442 = vld [vmem:[%s441] sm:$0xff]
      %v443 = vld [vmem:[%s441 + $0x8] sm:$0xff]
      %v444 = vmul.f32 %v438, %v442
      %v445 = vmul.f32 %v440, %v443
      %v446 = vadd.f32 %v435, %v444
      %v447 = vadd.f32 %v436, %v445
      %448 = vrot.lane.b32.xlu0 %v293, 1
      %v449 = vpop.permute.xlu0 %448
      %450 = vrot.lane.b32.xlu0 %v294, 1
      %v451 = vpop.permute.xlu0 %450
      %s452 = scalar_lea.vmem %s1, 224
      %v453 = vld [vmem:[%s452] sm:$0xff]
      %v454 = vld [vmem:[%s452 + $0x8] sm:$0xff]
      %v455 = vmul.f32 %v449, %v453
      %v456 = vmul.f32 %v451, %v454
      %v457 = vadd.f32 %v446, %v455
      %v458 = vadd.f32 %v447, %v456
      %s459 = scalar_lea.vmem %s1, 240
      %v460 = vld [vmem:[%s459] sm:$0xff]
      %v461 = vld [vmem:[%s459 + $0x8] sm:$0xff]
      %v462 = vmul.f32 %v293, %v460
      %v463 = vmul.f32 %v294, %v461
      %v464 = vadd.f32 %v457, %v462
      %v465 = vadd.f32 %v458, %v463
      %466 = vrot.lane.b32.xlu0 %v293, 127
      %v467 = vpop.permute.xlu0 %466
      %468 = vrot.lane.b32.xlu0 %v294, 127
      %v469 = vpop.permute.xlu0 %468
      %s470 = scalar_lea.vmem %s1, 256
      %v471 = vld [vmem:[%s470] sm:$0xff]
      %v472 = vld [vmem:[%s470 + $0x8] sm:$0xff]
      %v473 = vmul.f32 %v467, %v471
      %v474 = vmul.f32 %v469, %v472
      %v475 = vadd.f32 %v464, %v473
      %v476 = vadd.f32 %v465, %v474
      %477 = vrot.lane.b32.xlu0 %v293, 126
      %v478 = vpop.permute.xlu0 %477
      %479 = vrot.lane.b32.xlu0 %v294, 126
      %v480 = vpop.permute.xlu0 %479
      %s481 = scalar_lea.vmem %s1, 272
      %v482 = vld [vmem:[%s481] sm:$0xff]
      %v483 = vld [vmem:[%s481 + $0x8] sm:$0xff]
      %v484 = vmul.f32 %v478, %v482
      %v485 = vmul.f32 %v480, %v483
      %v486 = vadd.f32 %v475, %v484
      %v487 = vadd.f32 %v476, %v485
      %488 = vrot.lane.b32.xlu0 %v293, 125
      %v489 = vpop.permute.xlu0 %488
      %490 = vrot.lane.b32.xlu0 %v294, 125
      %v491 = vpop.permute.xlu0 %490
      %s492 = scalar_lea.vmem %s1, 288
      %v493 = vld [vmem:[%s492] sm:$0xff]
      %v494 = vld [vmem:[%s492 + $0x8] sm:$0xff]
      %v495 = vmul.f32 %v489, %v493
      %v496 = vmul.f32 %v491, %v494
      %v497 = vadd.f32 %v486, %v495
      %v498 = vadd.f32 %v487, %v496
      %499 = vrot.lane.b32.xlu0 %v293, 124
      %v500 = vpop.permute.xlu0 %499
      %501 = vrot.lane.b32.xlu0 %v294, 124
      %v502 = vpop.permute.xlu0 %501
      %s503 = scalar_lea.vmem %s1, 304
      %v504 = vld [vmem:[%s503] sm:$0xff]
      %v505 = vld [vmem:[%s503 + $0x8] sm:$0xff]
      %v506 = vmul.f32 %v500, %v504
      %v507 = vmul.f32 %v502, %v505
      %v508 = vadd.f32 %v497, %v506
      %v509 = vadd.f32 %v498, %v507
      %510 = vrot.lane.b32.xlu0 %v293, 123
      %v511 = vpop.permute.xlu0 %510
      %512 = vrot.lane.b32.xlu0 %v294, 123
      %v513 = vpop.permute.xlu0 %512
      %s514 = scalar_lea.vmem %s1, 320
      %v515 = vld [vmem:[%s514] sm:$0xff]
      %v516 = vld [vmem:[%s514 + $0x8] sm:$0xff]
      %v517 = vmul.f32 %v511, %v515
      %v518 = vmul.f32 %v513, %v516
      %v519 = vadd.f32 %v508, %v517
      %v520 = vadd.f32 %v509, %v518
      %521 = vrot.lane.b32.xlu0 %v293, 122
      %v522 = vpop.permute.xlu0 %521
      %523 = vrot.lane.b32.xlu0 %v294, 122
      %v524 = vpop.permute.xlu0 %523
      %s525 = scalar_lea.vmem %s1, 336
      %v526 = vld [vmem:[%s525] sm:$0xff]
      %v527 = vld [vmem:[%s525 + $0x8] sm:$0xff]
      %v528 = vmul.f32 %v522, %v526
      %v529 = vmul.f32 %v524, %v527
      %v530 = vadd.f32 %v519, %v528
      %v531 = vadd.f32 %v520, %v529
      %532 = vrot.lane.b32.xlu0 %v293, 121
      %v533 = vpop.permute.xlu0 %532
      %534 = vrot.lane.b32.xlu0 %v294, 121
      %v535 = vpop.permute.xlu0 %534
      %s536 = scalar_lea.vmem %s1, 352
      %v537 = vld [vmem:[%s536] sm:$0xff]
      %v538 = vld [vmem:[%s536 + $0x8] sm:$0xff]
      %v539 = vmul.f32 %v533, %v537
      %v540 = vmul.f32 %v535, %v538
      %v541 = vadd.f32 %v530, %v539
      %v542 = vadd.f32 %v531, %v540
      %543 = vrot.lane.b32.xlu0 %v293, 120
      %v544 = vpop.permute.xlu0 %543
      %545 = vrot.lane.b32.xlu0 %v294, 120
      %v546 = vpop.permute.xlu0 %545
      %s547 = scalar_lea.vmem %s1, 368
      %v548 = vld [vmem:[%s547] sm:$0xff]
      %v549 = vld [vmem:[%s547 + $0x8] sm:$0xff]
      %v550 = vmul.f32 %v544, %v548
      %v551 = vmul.f32 %v546, %v549
      %v552 = vadd.f32 %v541, %v550
      %v553 = vadd.f32 %v542, %v551
      %554 = vrot.lane.b32.xlu0 %v293, 119
      %v555 = vpop.permute.xlu0 %554
      %556 = vrot.lane.b32.xlu0 %v294, 119
      %v557 = vpop.permute.xlu0 %556
      %s558 = scalar_lea.vmem %s1, 384
      %v559 = vld [vmem:[%s558] sm:$0xff]
      %v560 = vld [vmem:[%s558 + $0x8] sm:$0xff]
      %v561 = vmul.f32 %v555, %v559
      %v562 = vmul.f32 %v557, %v560
      %v563 = vadd.f32 %v552, %v561
      %v564 = vadd.f32 %v553, %v562
      %565 = vrot.lane.b32.xlu0 %v293, 118
      %v566 = vpop.permute.xlu0 %565
      %567 = vrot.lane.b32.xlu0 %v294, 118
      %v568 = vpop.permute.xlu0 %567
      %s569 = scalar_lea.vmem %s1, 400
      %v570 = vld [vmem:[%s569] sm:$0xff]
      %v571 = vld [vmem:[%s569 + $0x8] sm:$0xff]
      %v572 = vmul.f32 %v566, %v570
      %v573 = vmul.f32 %v568, %v571
      %v574 = vadd.f32 %v563, %v572
      %v575 = vadd.f32 %v564, %v573
      %576 = vrot.lane.b32.xlu0 %v293, 117
      %v577 = vpop.permute.xlu0 %576
      %578 = vrot.lane.b32.xlu0 %v294, 117
      %v579 = vpop.permute.xlu0 %578
      %s580 = scalar_lea.vmem %s1, 416
      %v581 = vld [vmem:[%s580] sm:$0xff]
      %v582 = vld [vmem:[%s580 + $0x8] sm:$0xff]
      %v583 = vmul.f32 %v577, %v581
      %v584 = vmul.f32 %v579, %v582
      %v585 = vadd.f32 %v574, %v583
      %v586 = vadd.f32 %v575, %v584
      %587 = vrot.lane.b32.xlu0 %v293, 116
      %v588 = vpop.permute.xlu0 %587
      %589 = vrot.lane.b32.xlu0 %v294, 116
      %v590 = vpop.permute.xlu0 %589
      %s591 = scalar_lea.vmem %s1, 432
      %v592 = vld [vmem:[%s591] sm:$0xff]
      %v593 = vld [vmem:[%s591 + $0x8] sm:$0xff]
      %v594 = vmul.f32 %v588, %v592
      %v595 = vmul.f32 %v590, %v593
      %v596 = vadd.f32 %v585, %v594
      %v597 = vadd.f32 %v586, %v595
      %598 = vrot.lane.b32.xlu0 %v293, 115
      %v599 = vpop.permute.xlu0 %598
      %600 = vrot.lane.b32.xlu0 %v294, 115
      %v601 = vpop.permute.xlu0 %600
      %s602 = scalar_lea.vmem %s1, 448
      %v603 = vld [vmem:[%s602] sm:$0xff]
      %v604 = vld [vmem:[%s602 + $0x8] sm:$0xff]
      %v605 = vmul.f32 %v599, %v603
      %v606 = vmul.f32 %v601, %v604
      %v607 = vadd.f32 %v596, %v605
      %v608 = vadd.f32 %v597, %v606
      %609 = vrot.lane.b32.xlu0 %v293, 114
      %v610 = vpop.permute.xlu0 %609
      %611 = vrot.lane.b32.xlu0 %v294, 114
      %v612 = vpop.permute.xlu0 %611
      %s613 = scalar_lea.vmem %s1, 464
      %v614 = vld [vmem:[%s613] sm:$0xff]
      %v615 = vld [vmem:[%s613 + $0x8] sm:$0xff]
      %v616 = vmul.f32 %v610, %v614
      %v617 = vmul.f32 %v612, %v615
      %v618 = vadd.f32 %v607, %v616
      %v619 = vadd.f32 %v608, %v617
      %620 = vrot.lane.b32.xlu0 %v293, 113
      %v621 = vpop.permute.xlu0 %620
      %622 = vrot.lane.b32.xlu0 %v294, 113
      %v623 = vpop.permute.xlu0 %622
      %s624 = scalar_lea.vmem %s1, 480
      %v625 = vld [vmem:[%s624] sm:$0xff]
      %v626 = vld [vmem:[%s624 + $0x8] sm:$0xff]
      %v627 = vmul.f32 %v621, %v625
      %v628 = vmul.f32 %v623, %v626
      %v629 = vadd.f32 %v618, %v627
      %v630 = vadd.f32 %v619, %v628
      %v631 = vld [vmem:[#allocation2 + $0x1] sm:$0xff]
      %v632 = vld [vmem:[#allocation2 + $0x9] sm:$0xff]
      %633 = vrot.lane.b32.xlu0 %v631, 15
      %v634 = vpop.permute.xlu0 %633
      %635 = vrot.lane.b32.xlu0 %v632, 15
      %v636 = vpop.permute.xlu0 %635
      %s637 = scalar_lea.vmem %s1, 496
      %v638 = vld [vmem:[%s637] sm:$0xff]
      %v639 = vld [vmem:[%s637 + $0x8] sm:$0xff]
      %v640 = vmul.f32 %v634, %v638
      %v641 = vmul.f32 %v636, %v639
      %v642 = vadd.f32 %v629, %v640
      %v643 = vadd.f32 %v630, %v641
      %644 = vrot.lane.b32.xlu0 %v631, 14
      %v645 = vpop.permute.xlu0 %644
      %646 = vrot.lane.b32.xlu0 %v632, 14
      %v647 = vpop.permute.xlu0 %646
      %s648 = scalar_lea.vmem %s1, 512
      %v649 = vld [vmem:[%s648] sm:$0xff]
      %v650 = vld [vmem:[%s648 + $0x8] sm:$0xff]
      %v651 = vmul.f32 %v645, %v649
      %v652 = vmul.f32 %v647, %v650
      %v653 = vadd.f32 %v642, %v651
      %v654 = vadd.f32 %v643, %v652
      %655 = vrot.lane.b32.xlu0 %v631, 13
      %v656 = vpop.permute.xlu0 %655
      %657 = vrot.lane.b32.xlu0 %v632, 13
      %v658 = vpop.permute.xlu0 %657
      %s659 = scalar_lea.vmem %s1, 528
      %v660 = vld [vmem:[%s659] sm:$0xff]
      %v661 = vld [vmem:[%s659 + $0x8] sm:$0xff]
      %v662 = vmul.f32 %v656, %v660
      %v663 = vmul.f32 %v658, %v661
      %v664 = vadd.f32 %v653, %v662
      %v665 = vadd.f32 %v654, %v663
      %666 = vrot.lane.b32.xlu0 %v631, 12
      %v667 = vpop.permute.xlu0 %666
      %668 = vrot.lane.b32.xlu0 %v632, 12
      %v669 = vpop.permute.xlu0 %668
      %s670 = scalar_lea.vmem %s1, 544
      %v671 = vld [vmem:[%s670] sm:$0xff]
      %v672 = vld [vmem:[%s670 + $0x8] sm:$0xff]
      %v673 = vmul.f32 %v667, %v671
      %v674 = vmul.f32 %v669, %v672
      %v675 = vadd.f32 %v664, %v673
      %v676 = vadd.f32 %v665, %v674
      %677 = vrot.lane.b32.xlu0 %v631, 11
      %v678 = vpop.permute.xlu0 %677
      %679 = vrot.lane.b32.xlu0 %v632, 11
      %v680 = vpop.permute.xlu0 %679
      %s681 = scalar_lea.vmem %s1, 560
      %v682 = vld [vmem:[%s681] sm:$0xff]
      %v683 = vld [vmem:[%s681 + $0x8] sm:$0xff]
      %v684 = vmul.f32 %v678, %v682
      %v685 = vmul.f32 %v680, %v683
      %v686 = vadd.f32 %v675, %v684
      %v687 = vadd.f32 %v676, %v685
      %688 = vrot.lane.b32.xlu0 %v631, 10
      %v689 = vpop.permute.xlu0 %688
      %690 = vrot.lane.b32.xlu0 %v632, 10
      %v691 = vpop.permute.xlu0 %690
      %s692 = scalar_lea.vmem %s1, 576
      %v693 = vld [vmem:[%s692] sm:$0xff]
      %v694 = vld [vmem:[%s692 + $0x8] sm:$0xff]
      %v695 = vmul.f32 %v689, %v693
      %v696 = vmul.f32 %v691, %v694
      %v697 = vadd.f32 %v686, %v695
      %v698 = vadd.f32 %v687, %v696
      %699 = vrot.lane.b32.xlu0 %v631, 9
      %v700 = vpop.permute.xlu0 %699
      %701 = vrot.lane.b32.xlu0 %v632, 9
      %v702 = vpop.permute.xlu0 %701
      %s703 = scalar_lea.vmem %s1, 592
      %v704 = vld [vmem:[%s703] sm:$0xff]
      %v705 = vld [vmem:[%s703 + $0x8] sm:$0xff]
      %v706 = vmul.f32 %v700, %v704
      %v707 = vmul.f32 %v702, %v705
      %v708 = vadd.f32 %v697, %v706
      %v709 = vadd.f32 %v698, %v707
      %710 = vrot.lane.b32.xlu0 %v631, 8
      %v711 = vpop.permute.xlu0 %710
      %712 = vrot.lane.b32.xlu0 %v632, 8
      %v713 = vpop.permute.xlu0 %712
      %s714 = scalar_lea.vmem %s1, 608
      %v715 = vld [vmem:[%s714] sm:$0xff]
      %v716 = vld [vmem:[%s714 + $0x8] sm:$0xff]
      %v717 = vmul.f32 %v711, %v715
      %v718 = vmul.f32 %v713, %v716
      %v719 = vadd.f32 %v708, %v717
      %v720 = vadd.f32 %v709, %v718
      %721 = vrot.lane.b32.xlu0 %v631, 7
      %v722 = vpop.permute.xlu0 %721
      %723 = vrot.lane.b32.xlu0 %v632, 7
      %v724 = vpop.permute.xlu0 %723
      %s725 = scalar_lea.vmem %s1, 624
      %v726 = vld [vmem:[%s725] sm:$0xff]
      %v727 = vld [vmem:[%s725 + $0x8] sm:$0xff]
      %v728 = vmul.f32 %v722, %v726
      %v729 = vmul.f32 %v724, %v727
      %v730 = vadd.f32 %v719, %v728
      %v731 = vadd.f32 %v720, %v729
      %732 = vrot.lane.b32.xlu0 %v631, 6
      %v733 = vpop.permute.xlu0 %732
      %734 = vrot.lane.b32.xlu0 %v632, 6
      %v735 = vpop.permute.xlu0 %734
      %s736 = scalar_lea.vmem %s1, 640
      %v737 = vld [vmem:[%s736] sm:$0xff]
      %v738 = vld [vmem:[%s736 + $0x8] sm:$0xff]
      %v739 = vmul.f32 %v733, %v737
      %v740 = vmul.f32 %v735, %v738
      %v741 = vadd.f32 %v730, %v739
      %v742 = vadd.f32 %v731, %v740
      %743 = vrot.lane.b32.xlu0 %v631, 5
      %v744 = vpop.permute.xlu0 %743
      %745 = vrot.lane.b32.xlu0 %v632, 5
      %v746 = vpop.permute.xlu0 %745
      %s747 = scalar_lea.vmem %s1, 656
      %v748 = vld [vmem:[%s747] sm:$0xff]
      %v749 = vld [vmem:[%s747 + $0x8] sm:$0xff]
      %v750 = vmul.f32 %v744, %v748
      %v751 = vmul.f32 %v746, %v749
      %v752 = vadd.f32 %v741, %v750
      %v753 = vadd.f32 %v742, %v751
      %754 = vrot.lane.b32.xlu0 %v631, 4
      %v755 = vpop.permute.xlu0 %754
      %756 = vrot.lane.b32.xlu0 %v632, 4
      %v757 = vpop.permute.xlu0 %756
      %s758 = scalar_lea.vmem %s1, 672
      %v759 = vld [vmem:[%s758] sm:$0xff]
      %v760 = vld [vmem:[%s758 + $0x8] sm:$0xff]
      %v761 = vmul.f32 %v755, %v759
      %v762 = vmul.f32 %v757, %v760
      %v763 = vadd.f32 %v752, %v761
      %v764 = vadd.f32 %v753, %v762
      %765 = vrot.lane.b32.xlu0 %v631, 3
      %v766 = vpop.permute.xlu0 %765
      %767 = vrot.lane.b32.xlu0 %v632, 3
      %v768 = vpop.permute.xlu0 %767
      %s769 = scalar_lea.vmem %s1, 688
      %v770 = vld [vmem:[%s769] sm:$0xff]
      %v771 = vld [vmem:[%s769 + $0x8] sm:$0xff]
      %v772 = vmul.f32 %v766, %v770
      %v773 = vmul.f32 %v768, %v771
      %v774 = vadd.f32 %v763, %v772
      %v775 = vadd.f32 %v764, %v773
      %776 = vrot.lane.b32.xlu0 %v631, 2
      %v777 = vpop.permute.xlu0 %776
      %778 = vrot.lane.b32.xlu0 %v632, 2
      %v779 = vpop.permute.xlu0 %778
      %s780 = scalar_lea.vmem %s1, 704
      %v781 = vld [vmem:[%s780] sm:$0xff]
      %v782 = vld [vmem:[%s780 + $0x8] sm:$0xff]
      %v783 = vmul.f32 %v777, %v781
      %v784 = vmul.f32 %v779, %v782
      %v785 = vadd.f32 %v774, %v783
      %v786 = vadd.f32 %v775, %v784
      %787 = vrot.lane.b32.xlu0 %v631, 1
      %v788 = vpop.permute.xlu0 %787
      %789 = vrot.lane.b32.xlu0 %v632, 1
      %v790 = vpop.permute.xlu0 %789
      %s791 = scalar_lea.vmem %s1, 720
      %v792 = vld [vmem:[%s791] sm:$0xff]
      %v793 = vld [vmem:[%s791 + $0x8] sm:$0xff]
      %v794 = vmul.f32 %v788, %v792
      %v795 = vmul.f32 %v790, %v793
      %v796 = vadd.f32 %v785, %v794
      %v797 = vadd.f32 %v786, %v795
      %s798 = scalar_lea.vmem %s1, 736
      %v799 = vld [vmem:[%s798] sm:$0xff]
      %v800 = vld [vmem:[%s798 + $0x8] sm:$0xff]
      %v801 = vmul.f32 %v631, %v799
      %v802 = vmul.f32 %v632, %v800
      %v803 = vadd.f32 %v796, %v801
      %v804 = vadd.f32 %v797, %v802
      %805 = vrot.lane.b32.xlu0 %v631, 127
      %v806 = vpop.permute.xlu0 %805
      %807 = vrot.lane.b32.xlu0 %v632, 127
      %v808 = vpop.permute.xlu0 %807
      %s809 = scalar_lea.vmem %s1, 752
      %v810 = vld [vmem:[%s809] sm:$0xff]
      %v811 = vld [vmem:[%s809 + $0x8] sm:$0xff]
      %v812 = vmul.f32 %v806, %v810
      %v813 = vmul.f32 %v808, %v811
      %v814 = vadd.f32 %v803, %v812
      %v815 = vadd.f32 %v804, %v813
      %816 = vrot.lane.b32.xlu0 %v631, 126
      %v817 = vpop.permute.xlu0 %816
      %818 = vrot.lane.b32.xlu0 %v632, 126
      %v819 = vpop.permute.xlu0 %818
      %s820 = scalar_lea.vmem %s1, 768
      %v821 = vld [vmem:[%s820] sm:$0xff]
      %v822 = vld [vmem:[%s820 + $0x8] sm:$0xff]
      %v823 = vmul.f32 %v817, %v821
      %v824 = vmul.f32 %v819, %v822
      %v825 = vadd.f32 %v814, %v823
      %v826 = vadd.f32 %v815, %v824
      %827 = vrot.lane.b32.xlu0 %v631, 125
      %v828 = vpop.permute.xlu0 %827
      %829 = vrot.lane.b32.xlu0 %v632, 125
      %v830 = vpop.permute.xlu0 %829
      %s831 = scalar_lea.vmem %s1, 784
      %v832 = vld [vmem:[%s831] sm:$0xff]
      %v833 = vld [vmem:[%s831 + $0x8] sm:$0xff]
      %v834 = vmul.f32 %v828, %v832
      %v835 = vmul.f32 %v830, %v833
      %v836 = vadd.f32 %v825, %v834
      %v837 = vadd.f32 %v826, %v835
      %838 = vrot.lane.b32.xlu0 %v631, 124
      %v839 = vpop.permute.xlu0 %838
      %840 = vrot.lane.b32.xlu0 %v632, 124
      %v841 = vpop.permute.xlu0 %840
      %s842 = scalar_lea.vmem %s1, 800
      %v843 = vld [vmem:[%s842] sm:$0xff]
      %v844 = vld [vmem:[%s842 + $0x8] sm:$0xff]
      %v845 = vmul.f32 %v839, %v843
      %v846 = vmul.f32 %v841, %v844
      %v847 = vadd.f32 %v836, %v845
      %v848 = vadd.f32 %v837, %v846
      %849 = vrot.lane.b32.xlu0 %v631, 123
      %v850 = vpop.permute.xlu0 %849
      %851 = vrot.lane.b32.xlu0 %v632, 123
      %v852 = vpop.permute.xlu0 %851
      %s853 = scalar_lea.vmem %s1, 816
      %v854 = vld [vmem:[%s853] sm:$0xff]
      %v855 = vld [vmem:[%s853 + $0x8] sm:$0xff]
      %v856 = vmul.f32 %v850, %v854
      %v857 = vmul.f32 %v852, %v855
      %v858 = vadd.f32 %v847, %v856
      %v859 = vadd.f32 %v848, %v857
      %860 = vrot.lane.b32.xlu0 %v631, 122
      %v861 = vpop.permute.xlu0 %860
      %862 = vrot.lane.b32.xlu0 %v632, 122
      %v863 = vpop.permute.xlu0 %862
      %s864 = scalar_lea.vmem %s1, 832
      %v865 = vld [vmem:[%s864] sm:$0xff]
      %v866 = vld [vmem:[%s864 + $0x8] sm:$0xff]
      %v867 = vmul.f32 %v861, %v865
      %v868 = vmul.f32 %v863, %v866
      %v869 = vadd.f32 %v858, %v867
      %v870 = vadd.f32 %v859, %v868
      %871 = vrot.lane.b32.xlu0 %v631, 121
      %v872 = vpop.permute.xlu0 %871
      %873 = vrot.lane.b32.xlu0 %v632, 121
      %v874 = vpop.permute.xlu0 %873
      %s875 = scalar_lea.vmem %s1, 848
      %v876 = vld [vmem:[%s875] sm:$0xff]
      %v877 = vld [vmem:[%s875 + $0x8] sm:$0xff]
      %v878 = vmul.f32 %v872, %v876
      %v879 = vmul.f32 %v874, %v877
      %v880 = vadd.f32 %v869, %v878
      %v881 = vadd.f32 %v870, %v879
      %882 = vrot.lane.b32.xlu0 %v631, 120
      %v883 = vpop.permute.xlu0 %882
      %884 = vrot.lane.b32.xlu0 %v632, 120
      %v885 = vpop.permute.xlu0 %884
      %s886 = scalar_lea.vmem %s1, 864
      %v887 = vld [vmem:[%s886] sm:$0xff]
      %v888 = vld [vmem:[%s886 + $0x8] sm:$0xff]
      %v889 = vmul.f32 %v883, %v887
      %v890 = vmul.f32 %v885, %v888
      %v891 = vadd.f32 %v880, %v889
      %v892 = vadd.f32 %v881, %v890
      %893 = vrot.lane.b32.xlu0 %v631, 119
      %v894 = vpop.permute.xlu0 %893
      %895 = vrot.lane.b32.xlu0 %v632, 119
      %v896 = vpop.permute.xlu0 %895
      %s897 = scalar_lea.vmem %s1, 880
      %v898 = vld [vmem:[%s897] sm:$0xff]
      %v899 = vld [vmem:[%s897 + $0x8] sm:$0xff]
      %v900 = vmul.f32 %v894, %v898
      %v901 = vmul.f32 %v896, %v899
      %v902 = vadd.f32 %v891, %v900
      %v903 = vadd.f32 %v892, %v901
      %904 = vrot.lane.b32.xlu0 %v631, 118
      %v905 = vpop.permute.xlu0 %904
      %906 = vrot.lane.b32.xlu0 %v632, 118
      %v907 = vpop.permute.xlu0 %906
      %s908 = scalar_lea.vmem %s1, 896
      %v909 = vld [vmem:[%s908] sm:$0xff]
      %v910 = vld [vmem:[%s908 + $0x8] sm:$0xff]
      %v911 = vmul.f32 %v905, %v909
      %v912 = vmul.f32 %v907, %v910
      %v913 = vadd.f32 %v902, %v911
      %v914 = vadd.f32 %v903, %v912
      %915 = vrot.lane.b32.xlu0 %v631, 117
      %v916 = vpop.permute.xlu0 %915
      %917 = vrot.lane.b32.xlu0 %v632, 117
      %v918 = vpop.permute.xlu0 %917
      %s919 = scalar_lea.vmem %s1, 912
      %v920 = vld [vmem:[%s919] sm:$0xff]
      %v921 = vld [vmem:[%s919 + $0x8] sm:$0xff]
      %v922 = vmul.f32 %v916, %v920
      %v923 = vmul.f32 %v918, %v921
      %v924 = vadd.f32 %v913, %v922
      %v925 = vadd.f32 %v914, %v923
      %926 = vrot.lane.b32.xlu0 %v631, 116
      %v927 = vpop.permute.xlu0 %926
      %928 = vrot.lane.b32.xlu0 %v632, 116
      %v929 = vpop.permute.xlu0 %928
      %s930 = scalar_lea.vmem %s1, 928
      %v931 = vld [vmem:[%s930] sm:$0xff]
      %v932 = vld [vmem:[%s930 + $0x8] sm:$0xff]
      %v933 = vmul.f32 %v927, %v931
      %v934 = vmul.f32 %v929, %v932
      %v935 = vadd.f32 %v924, %v933
      %v936 = vadd.f32 %v925, %v934
      %937 = vrot.lane.b32.xlu0 %v631, 115
      %v938 = vpop.permute.xlu0 %937
      %939 = vrot.lane.b32.xlu0 %v632, 115
      %v940 = vpop.permute.xlu0 %939
      %s941 = scalar_lea.vmem %s1, 944
      %v942 = vld [vmem:[%s941] sm:$0xff]
      %v943 = vld [vmem:[%s941 + $0x8] sm:$0xff]
      %v944 = vmul.f32 %v938, %v942
      %v945 = vmul.f32 %v940, %v943
      %v946 = vadd.f32 %v935, %v944
      %v947 = vadd.f32 %v936, %v945
      %948 = vrot.lane.b32.xlu0 %v631, 114
      %v949 = vpop.permute.xlu0 %948
      %950 = vrot.lane.b32.xlu0 %v632, 114
      %v951 = vpop.permute.xlu0 %950
      %s952 = scalar_lea.vmem %s1, 960
      %v953 = vld [vmem:[%s952] sm:$0xff]
      %v954 = vld [vmem:[%s952 + $0x8] sm:$0xff]
      %v955 = vmul.f32 %v949, %v953
      %v956 = vmul.f32 %v951, %v954
      %v957 = vadd.f32 %v946, %v955
      %v958 = vadd.f32 %v947, %v956
      %959 = vrot.lane.b32.xlu0 %v631, 113
      %v960 = vpop.permute.xlu0 %959
      %961 = vrot.lane.b32.xlu0 %v632, 113
      %v962 = vpop.permute.xlu0 %961
      %s963 = scalar_lea.vmem %s1, 976
      %v964 = vld [vmem:[%s963] sm:$0xff]
      %v965 = vld [vmem:[%s963 + $0x8] sm:$0xff]
      %v966 = vmul.f32 %v960, %v964
      %v967 = vmul.f32 %v962, %v965
      %v968 = vadd.f32 %v957, %v966
      %v969 = vadd.f32 %v958, %v967
      %v970 = vld [vmem:[#allocation2 + $0x2] sm:$0xff]
      %v971 = vld [vmem:[#allocation2 + $0xa] sm:$0xff]
      %972 = vrot.lane.b32.xlu0 %v970, 15
      %v973 = vpop.permute.xlu0 %972
      %974 = vrot.lane.b32.xlu0 %v971, 15
      %v975 = vpop.permute.xlu0 %974
      %s976 = scalar_lea.vmem %s1, 992
      %v977 = vld [vmem:[%s976] sm:$0xff]
      %v978 = vld [vmem:[%s976 + $0x8] sm:$0xff]
      %v979 = vmul.f32 %v973, %v977
      %v980 = vmul.f32 %v975, %v978
      %v981 = vadd.f32 %v968, %v979
      %v982 = vadd.f32 %v969, %v980
      %983 = vrot.lane.b32.xlu0 %v970, 14
      %v984 = vpop.permute.xlu0 %983
      %985 = vrot.lane.b32.xlu0 %v971, 14
      %v986 = vpop.permute.xlu0 %985
      %s987 = scalar_lea.vmem %s1, 1008
      %v988 = vld [vmem:[%s987] sm:$0xff]
      %v989 = vld [vmem:[%s987 + $0x8] sm:$0xff]
      %v990 = vmul.f32 %v984, %v988
      %v991 = vmul.f32 %v986, %v989
      %v992 = vadd.f32 %v981, %v990
      %v993 = vadd.f32 %v982, %v991
      %994 = vrot.lane.b32.xlu0 %v970, 13
      %v995 = vpop.permute.xlu0 %994
      %996 = vrot.lane.b32.xlu0 %v971, 13
      %v997 = vpop.permute.xlu0 %996
      %s998 = scalar_lea.vmem %s1, 1024
      %v999 = vld [vmem:[%s998] sm:$0xff]
      %v1000 = vld [vmem:[%s998 + $0x8] sm:$0xff]
      %v1001 = vmul.f32 %v995, %v999
      %v1002 = vmul.f32 %v997, %v1000
      %v1003 = vadd.f32 %v992, %v1001
      %v1004 = vadd.f32 %v993, %v1002
      %1005 = vrot.lane.b32.xlu0 %v970, 12
      %v1006 = vpop.permute.xlu0 %1005
      %1007 = vrot.lane.b32.xlu0 %v971, 12
      %v1008 = vpop.permute.xlu0 %1007
      %s1009 = scalar_lea.vmem %s1, 1040
      %v1010 = vld [vmem:[%s1009] sm:$0xff]
      %v1011 = vld [vmem:[%s1009 + $0x8] sm:$0xff]
      %v1012 = vmul.f32 %v1006, %v1010
      %v1013 = vmul.f32 %v1008, %v1011
      %v1014 = vadd.f32 %v1003, %v1012
      %v1015 = vadd.f32 %v1004, %v1013
      %1016 = vrot.lane.b32.xlu0 %v970, 11
      %v1017 = vpop.permute.xlu0 %1016
      %1018 = vrot.lane.b32.xlu0 %v971, 11
      %v1019 = vpop.permute.xlu0 %1018
      %s1020 = scalar_lea.vmem %s1, 1056
      %v1021 = vld [vmem:[%s1020] sm:$0xff]
      %v1022 = vld [vmem:[%s1020 + $0x8] sm:$0xff]
      %v1023 = vmul.f32 %v1017, %v1021
      %v1024 = vmul.f32 %v1019, %v1022
      %v1025 = vadd.f32 %v1014, %v1023
      %v1026 = vadd.f32 %v1015, %v1024
      %1027 = vrot.lane.b32.xlu0 %v970, 10
      %v1028 = vpop.permute.xlu0 %1027
      %1029 = vrot.lane.b32.xlu0 %v971, 10
      %v1030 = vpop.permute.xlu0 %1029
      %s1031 = scalar_lea.vmem %s1, 1072
      %v1032 = vld [vmem:[%s1031] sm:$0xff]
      %v1033 = vld [vmem:[%s1031 + $0x8] sm:$0xff]
      %v1034 = vmul.f32 %v1028, %v1032
      %v1035 = vmul.f32 %v1030, %v1033
      %v1036 = vadd.f32 %v1025, %v1034
      %v1037 = vadd.f32 %v1026, %v1035
      %1038 = vrot.lane.b32.xlu0 %v970, 9
      %v1039 = vpop.permute.xlu0 %1038
      %1040 = vrot.lane.b32.xlu0 %v971, 9
      %v1041 = vpop.permute.xlu0 %1040
      %s1042 = scalar_lea.vmem %s1, 1088
      %v1043 = vld [vmem:[%s1042] sm:$0xff]
      %v1044 = vld [vmem:[%s1042 + $0x8] sm:$0xff]
      %v1045 = vmul.f32 %v1039, %v1043
      %v1046 = vmul.f32 %v1041, %v1044
      %v1047 = vadd.f32 %v1036, %v1045
      %v1048 = vadd.f32 %v1037, %v1046
      %1049 = vrot.lane.b32.xlu0 %v970, 8
      %v1050 = vpop.permute.xlu0 %1049
      %1051 = vrot.lane.b32.xlu0 %v971, 8
      %v1052 = vpop.permute.xlu0 %1051
      %s1053 = scalar_lea.vmem %s1, 1104
      %v1054 = vld [vmem:[%s1053] sm:$0xff]
      %v1055 = vld [vmem:[%s1053 + $0x8] sm:$0xff]
      %v1056 = vmul.f32 %v1050, %v1054
      %v1057 = vmul.f32 %v1052, %v1055
      %v1058 = vadd.f32 %v1047, %v1056
      %v1059 = vadd.f32 %v1048, %v1057
      %1060 = vrot.lane.b32.xlu0 %v970, 7
      %v1061 = vpop.permute.xlu0 %1060
      %1062 = vrot.lane.b32.xlu0 %v971, 7
      %v1063 = vpop.permute.xlu0 %1062
      %s1064 = scalar_lea.vmem %s1, 1120
      %v1065 = vld [vmem:[%s1064] sm:$0xff]
      %v1066 = vld [vmem:[%s1064 + $0x8] sm:$0xff]
      %v1067 = vmul.f32 %v1061, %v1065
      %v1068 = vmul.f32 %v1063, %v1066
      %v1069 = vadd.f32 %v1058, %v1067
      %v1070 = vadd.f32 %v1059, %v1068
      %1071 = vrot.lane.b32.xlu0 %v970, 6
      %v1072 = vpop.permute.xlu0 %1071
      %1073 = vrot.lane.b32.xlu0 %v971, 6
      %v1074 = vpop.permute.xlu0 %1073
      %s1075 = scalar_lea.vmem %s1, 1136
      %v1076 = vld [vmem:[%s1075] sm:$0xff]
      %v1077 = vld [vmem:[%s1075 + $0x8] sm:$0xff]
      %v1078 = vmul.f32 %v1072, %v1076
      %v1079 = vmul.f32 %v1074, %v1077
      %v1080 = vadd.f32 %v1069, %v1078
      %v1081 = vadd.f32 %v1070, %v1079
      %1082 = vrot.lane.b32.xlu0 %v970, 5
      %v1083 = vpop.permute.xlu0 %1082
      %1084 = vrot.lane.b32.xlu0 %v971, 5
      %v1085 = vpop.permute.xlu0 %1084
      %s1086 = scalar_lea.vmem %s1, 1152
      %v1087 = vld [vmem:[%s1086] sm:$0xff]
      %v1088 = vld [vmem:[%s1086 + $0x8] sm:$0xff]
      %v1089 = vmul.f32 %v1083, %v1087
      %v1090 = vmul.f32 %v1085, %v1088
      %v1091 = vadd.f32 %v1080, %v1089
      %v1092 = vadd.f32 %v1081, %v1090
      %1093 = vrot.lane.b32.xlu0 %v970, 4
      %v1094 = vpop.permute.xlu0 %1093
      %1095 = vrot.lane.b32.xlu0 %v971, 4
      %v1096 = vpop.permute.xlu0 %1095
      %s1097 = scalar_lea.vmem %s1, 1168
      %v1098 = vld [vmem:[%s1097] sm:$0xff]
      %v1099 = vld [vmem:[%s1097 + $0x8] sm:$0xff]
      %v1100 = vmul.f32 %v1094, %v1098
      %v1101 = vmul.f32 %v1096, %v1099
      %v1102 = vadd.f32 %v1091, %v1100
      %v1103 = vadd.f32 %v1092, %v1101
      %1104 = vrot.lane.b32.xlu0 %v970, 3
      %v1105 = vpop.permute.xlu0 %1104
      %1106 = vrot.lane.b32.xlu0 %v971, 3
      %v1107 = vpop.permute.xlu0 %1106
      %s1108 = scalar_lea.vmem %s1, 1184
      %v1109 = vld [vmem:[%s1108] sm:$0xff]
      %v1110 = vld [vmem:[%s1108 + $0x8] sm:$0xff]
      %v1111 = vmul.f32 %v1105, %v1109
      %v1112 = vmul.f32 %v1107, %v1110
      %v1113 = vadd.f32 %v1102, %v1111
      %v1114 = vadd.f32 %v1103, %v1112
      %1115 = vrot.lane.b32.xlu0 %v970, 2
      %v1116 = vpop.permute.xlu0 %1115
      %1117 = vrot.lane.b32.xlu0 %v971, 2
      %v1118 = vpop.permute.xlu0 %1117
      %s1119 = scalar_lea.vmem %s1, 1200
      %v1120 = vld [vmem:[%s1119] sm:$0xff]
      %v1121 = vld [vmem:[%s1119 + $0x8] sm:$0xff]
      %v1122 = vmul.f32 %v1116, %v1120
      %v1123 = vmul.f32 %v1118, %v1121
      %v1124 = vadd.f32 %v1113, %v1122
      %v1125 = vadd.f32 %v1114, %v1123
      %1126 = vrot.lane.b32.xlu0 %v970, 1
      %v1127 = vpop.permute.xlu0 %1126
      %1128 = vrot.lane.b32.xlu0 %v971, 1
      %v1129 = vpop.permute.xlu0 %1128
      %s1130 = scalar_lea.vmem %s1, 1216
      %v1131 = vld [vmem:[%s1130] sm:$0xff]
      %v1132 = vld [vmem:[%s1130 + $0x8] sm:$0xff]
      %v1133 = vmul.f32 %v1127, %v1131
      %v1134 = vmul.f32 %v1129, %v1132
      %v1135 = vadd.f32 %v1124, %v1133
      %v1136 = vadd.f32 %v1125, %v1134
      %s1137 = scalar_lea.vmem %s1, 1232
      %v1138 = vld [vmem:[%s1137] sm:$0xff]
      %v1139 = vld [vmem:[%s1137 + $0x8] sm:$0xff]
      %v1140 = vmul.f32 %v970, %v1138
      %v1141 = vmul.f32 %v971, %v1139
      %v1142 = vadd.f32 %v1135, %v1140
      %v1143 = vadd.f32 %v1136, %v1141
      %1144 = vrot.lane.b32.xlu0 %v970, 127
      %v1145 = vpop.permute.xlu0 %1144
      %1146 = vrot.lane.b32.xlu0 %v971, 127
      %v1147 = vpop.permute.xlu0 %1146
      %s1148 = scalar_lea.vmem %s1, 1248
      %v1149 = vld [vmem:[%s1148] sm:$0xff]
      %v1150 = vld [vmem:[%s1148 + $0x8] sm:$0xff]
      %v1151 = vmul.f32 %v1145, %v1149
      %v1152 = vmul.f32 %v1147, %v1150
      %v1153 = vadd.f32 %v1142, %v1151
      %v1154 = vadd.f32 %v1143, %v1152
      %1155 = vrot.lane.b32.xlu0 %v970, 126
      %v1156 = vpop.permute.xlu0 %1155
      %1157 = vrot.lane.b32.xlu0 %v971, 126
      %v1158 = vpop.permute.xlu0 %1157
      %s1159 = scalar_lea.vmem %s1, 1264
      %v1160 = vld [vmem:[%s1159] sm:$0xff]
      %v1161 = vld [vmem:[%s1159 + $0x8] sm:$0xff]
      %v1162 = vmul.f32 %v1156, %v1160
      %v1163 = vmul.f32 %v1158, %v1161
      %v1164 = vadd.f32 %v1153, %v1162
      %v1165 = vadd.f32 %v1154, %v1163
      %1166 = vrot.lane.b32.xlu0 %v970, 125
      %v1167 = vpop.permute.xlu0 %1166
      %1168 = vrot.lane.b32.xlu0 %v971, 125
      %v1169 = vpop.permute.xlu0 %1168
      %s1170 = scalar_lea.vmem %s1, 1280
      %v1171 = vld [vmem:[%s1170] sm:$0xff]
      %v1172 = vld [vmem:[%s1170 + $0x8] sm:$0xff]
      %v1173 = vmul.f32 %v1167, %v1171
      %v1174 = vmul.f32 %v1169, %v1172
      %v1175 = vadd.f32 %v1164, %v1173
      %v1176 = vadd.f32 %v1165, %v1174
      %1177 = vrot.lane.b32.xlu0 %v970, 124
      %v1178 = vpop.permute.xlu0 %1177
      %1179 = vrot.lane.b32.xlu0 %v971, 124
      %v1180 = vpop.permute.xlu0 %1179
      %s1181 = scalar_lea.vmem %s1, 1296
      %v1182 = vld [vmem:[%s1181] sm:$0xff]
      %v1183 = vld [vmem:[%s1181 + $0x8] sm:$0xff]
      %v1184 = vmul.f32 %v1178, %v1182
      %v1185 = vmul.f32 %v1180, %v1183
      %v1186 = vadd.f32 %v1175, %v1184
      %v1187 = vadd.f32 %v1176, %v1185
      %1188 = vrot.lane.b32.xlu0 %v970, 123
      %v1189 = vpop.permute.xlu0 %1188
      %1190 = vrot.lane.b32.xlu0 %v971, 123
      %v1191 = vpop.permute.xlu0 %1190
      %s1192 = scalar_lea.vmem %s1, 1312
      %v1193 = vld [vmem:[%s1192] sm:$0xff]
      %v1194 = vld [vmem:[%s1192 + $0x8] sm:$0xff]
      %v1195 = vmul.f32 %v1189, %v1193
      %v1196 = vmul.f32 %v1191, %v1194
      %v1197 = vadd.f32 %v1186, %v1195
      %v1198 = vadd.f32 %v1187, %v1196
      %1199 = vrot.lane.b32.xlu0 %v970, 122
      %v1200 = vpop.permute.xlu0 %1199
      %1201 = vrot.lane.b32.xlu0 %v971, 122
      %v1202 = vpop.permute.xlu0 %1201
      %s1203 = scalar_lea.vmem %s1, 1328
      %v1204 = vld [vmem:[%s1203] sm:$0xff]
      %v1205 = vld [vmem:[%s1203 + $0x8] sm:$0xff]
      %v1206 = vmul.f32 %v1200, %v1204
      %v1207 = vmul.f32 %v1202, %v1205
      %v1208 = vadd.f32 %v1197, %v1206
      %v1209 = vadd.f32 %v1198, %v1207
      %1210 = vrot.lane.b32.xlu0 %v970, 121
      %v1211 = vpop.permute.xlu0 %1210
      %1212 = vrot.lane.b32.xlu0 %v971, 121
      %v1213 = vpop.permute.xlu0 %1212
      %s1214 = scalar_lea.vmem %s1, 1344
      %v1215 = vld [vmem:[%s1214] sm:$0xff]
      %v1216 = vld [vmem:[%s1214 + $0x8] sm:$0xff]
      %v1217 = vmul.f32 %v1211, %v1215
      %v1218 = vmul.f32 %v1213, %v1216
      %v1219 = vadd.f32 %v1208, %v1217
      %v1220 = vadd.f32 %v1209, %v1218
      %1221 = vrot.lane.b32.xlu0 %v970, 120
      %v1222 = vpop.permute.xlu0 %1221
      %1223 = vrot.lane.b32.xlu0 %v971, 120
      %v1224 = vpop.permute.xlu0 %1223
      %s1225 = scalar_lea.vmem %s1, 1360
      %v1226 = vld [vmem:[%s1225] sm:$0xff]
      %v1227 = vld [vmem:[%s1225 + $0x8] sm:$0xff]
      %v1228 = vmul.f32 %v1222, %v1226
      %v1229 = vmul.f32 %v1224, %v1227
      %v1230 = vadd.f32 %v1219, %v1228
      %v1231 = vadd.f32 %v1220, %v1229
      %1232 = vrot.lane.b32.xlu0 %v970, 119
      %v1233 = vpop.permute.xlu0 %1232
      %1234 = vrot.lane.b32.xlu0 %v971, 119
      %v1235 = vpop.permute.xlu0 %1234
      %s1236 = scalar_lea.vmem %s1, 1376
      %v1237 = vld [vmem:[%s1236] sm:$0xff]
      %v1238 = vld [vmem:[%s1236 + $0x8] sm:$0xff]
      %v1239 = vmul.f32 %v1233, %v1237
      %v1240 = vmul.f32 %v1235, %v1238
      %v1241 = vadd.f32 %v1230, %v1239
      %v1242 = vadd.f32 %v1231, %v1240
      %1243 = vrot.lane.b32.xlu0 %v970, 118
      %v1244 = vpop.permute.xlu0 %1243
      %1245 = vrot.lane.b32.xlu0 %v971, 118
      %v1246 = vpop.permute.xlu0 %1245
      %s1247 = scalar_lea.vmem %s1, 1392
      %v1248 = vld [vmem:[%s1247] sm:$0xff]
      %v1249 = vld [vmem:[%s1247 + $0x8] sm:$0xff]
      %v1250 = vmul.f32 %v1244, %v1248
      %v1251 = vmul.f32 %v1246, %v1249
      %v1252 = vadd.f32 %v1241, %v1250
      %v1253 = vadd.f32 %v1242, %v1251
      %1254 = vrot.lane.b32.xlu0 %v970, 117
      %v1255 = vpop.permute.xlu0 %1254
      %1256 = vrot.lane.b32.xlu0 %v971, 117
      %v1257 = vpop.permute.xlu0 %1256
      %s1258 = scalar_lea.vmem %s1, 1408
      %v1259 = vld [vmem:[%s1258] sm:$0xff]
      %v1260 = vld [vmem:[%s1258 + $0x8] sm:$0xff]
      %v1261 = vmul.f32 %v1255, %v1259
      %v1262 = vmul.f32 %v1257, %v1260
      %v1263 = vadd.f32 %v1252, %v1261
      %v1264 = vadd.f32 %v1253, %v1262
      %1265 = vrot.lane.b32.xlu0 %v970, 116
      %v1266 = vpop.permute.xlu0 %1265
      %1267 = vrot.lane.b32.xlu0 %v971, 116
      %v1268 = vpop.permute.xlu0 %1267
      %s1269 = scalar_lea.vmem %s1, 1424
      %v1270 = vld [vmem:[%s1269] sm:$0xff]
      %v1271 = vld [vmem:[%s1269 + $0x8] sm:$0xff]
      %v1272 = vmul.f32 %v1266, %v1270
      %v1273 = vmul.f32 %v1268, %v1271
      %v1274 = vadd.f32 %v1263, %v1272
      %v1275 = vadd.f32 %v1264, %v1273
      %1276 = vrot.lane.b32.xlu0 %v970, 115
      %v1277 = vpop.permute.xlu0 %1276
      %1278 = vrot.lane.b32.xlu0 %v971, 115
      %v1279 = vpop.permute.xlu0 %1278
      %s1280 = scalar_lea.vmem %s1, 1440
      %v1281 = vld [vmem:[%s1280] sm:$0xff]
      %v1282 = vld [vmem:[%s1280 + $0x8] sm:$0xff]
      %v1283 = vmul.f32 %v1277, %v1281
      %v1284 = vmul.f32 %v1279, %v1282
      %v1285 = vadd.f32 %v1274, %v1283
      %v1286 = vadd.f32 %v1275, %v1284
      %1287 = vrot.lane.b32.xlu0 %v970, 114
      %v1288 = vpop.permute.xlu0 %1287
      %1289 = vrot.lane.b32.xlu0 %v971, 114
      %v1290 = vpop.permute.xlu0 %1289
      %s1291 = scalar_lea.vmem %s1, 1456
      %v1292 = vld [vmem:[%s1291] sm:$0xff]
      %v1293 = vld [vmem:[%s1291 + $0x8] sm:$0xff]
      %v1294 = vmul.f32 %v1288, %v1292
      %v1295 = vmul.f32 %v1290, %v1293
      %v1296 = vadd.f32 %v1285, %v1294
      %v1297 = vadd.f32 %v1286, %v1295
      %1298 = vrot.lane.b32.xlu0 %v970, 113
      %v1299 = vpop.permute.xlu0 %1298
      %1300 = vrot.lane.b32.xlu0 %v971, 113
      %v1301 = vpop.permute.xlu0 %1300
      %s1302 = scalar_lea.vmem %s1, 1472
      %v1303 = vld [vmem:[%s1302] sm:$0xff]
      %v1304 = vld [vmem:[%s1302 + $0x8] sm:$0xff]
      %v1305 = vmul.f32 %v1299, %v1303
      %v1306 = vmul.f32 %v1301, %v1304
      %v1307 = vadd.f32 %v1296, %v1305
      %v1308 = vadd.f32 %v1297, %v1306
      %v1309 = vmul.f32 %v1307, %v281
      %v1310 = vmul.f32 %v1308, %v282
      %v1311 = vadd.f32 %v1309, %v283
      %v1312 = vadd.f32 %v1310, %v284
      %vm1313 = vcmp.gt.f32.partialorder %v1311, 0.0
      %vm1314 = vcmp.gt.f32.partialorder %v1312, 0.0
      %v1315 = vmul.f32 %v1311, 0.01
      %v1316 = vmul.f32 %v1312, 0.01
      %v1317 = vsel %vm1313, %v1311, %v1315
      %v1318 = vsel %vm1314, %v1312, %v1316
      %1319 = vst [vmem:[#allocation2 + $0x1] sm:$0xff] %v1317
      %1320 = vst [vmem:[#allocation2 + $0x9] sm:$0xff] %v1318
      %v1321 = vld [vmem:[#allocation2] sm:$0xff]
      %v1322 = vld [vmem:[#allocation2 + $0x8] sm:$0xff]
      %1323 = vrot.lane.b32.xlu0 %v1321, 15
      %v1324 = vpop.permute.xlu0 %1323
      %1325 = vrot.lane.b32.xlu0 %v1322, 15
      %v1326 = vpop.permute.xlu0 %1325
      %v1327 = vld [vmem:[%s4] sm:$0xff]
      %v1328 = vld [vmem:[%s4 + $0x8] sm:$0xff]
      %v1329 = vmul.f32 %v1324, %v1327
      %v1330 = vmul.f32 %v1326, %v1328
      %v1331 = vadd.f32 %v1329, 0.0
      %v1332 = vadd.f32 %v1330, 0.0
      %1333 = vrot.lane.b32.xlu0 %v1321, 14
      %v1334 = vpop.permute.xlu0 %1333
      %1335 = vrot.lane.b32.xlu0 %v1322, 14
      %v1336 = vpop.permute.xlu0 %1335
      %s1337 = scalar_lea.vmem %s4, 16
      %v1338 = vld [vmem:[%s1337] sm:$0xff]
      %v1339 = vld [vmem:[%s1337 + $0x8] sm:$0xff]
      %v1340 = vmul.f32 %v1334, %v1338
      %v1341 = vmul.f32 %v1336, %v1339
      %v1342 = vadd.f32 %v1331, %v1340
      %v1343 = vadd.f32 %v1332, %v1341
      %1344 = vrot.lane.b32.xlu0 %v1321, 13
      %v1345 = vpop.permute.xlu0 %1344
      %1346 = vrot.lane.b32.xlu0 %v1322, 13
      %v1347 = vpop.permute.xlu0 %1346
      %s1348 = scalar_lea.vmem %s4, 32
      %v1349 = vld [vmem:[%s1348] sm:$0xff]
      %v1350 = vld [vmem:[%s1348 + $0x8] sm:$0xff]
      %v1351 = vmul.f32 %v1345, %v1349
      %v1352 = vmul.f32 %v1347, %v1350
      %v1353 = vadd.f32 %v1342, %v1351
      %v1354 = vadd.f32 %v1343, %v1352
      %1355 = vrot.lane.b32.xlu0 %v1321, 12
      %v1356 = vpop.permute.xlu0 %1355
      %1357 = vrot.lane.b32.xlu0 %v1322, 12
      %v1358 = vpop.permute.xlu0 %1357
      %s1359 = scalar_lea.vmem %s4, 48
      %v1360 = vld [vmem:[%s1359] sm:$0xff]
      %v1361 = vld [vmem:[%s1359 + $0x8] sm:$0xff]
      %v1362 = vmul.f32 %v1356, %v1360
      %v1363 = vmul.f32 %v1358, %v1361
      %v1364 = vadd.f32 %v1353, %v1362
      %v1365 = vadd.f32 %v1354, %v1363
      %1366 = vrot.lane.b32.xlu0 %v1321, 11
      %v1367 = vpop.permute.xlu0 %1366
      %1368 = vrot.lane.b32.xlu0 %v1322, 11
      %v1369 = vpop.permute.xlu0 %1368
      %s1370 = scalar_lea.vmem %s4, 64
      %v1371 = vld [vmem:[%s1370] sm:$0xff]
      %v1372 = vld [vmem:[%s1370 + $0x8] sm:$0xff]
      %v1373 = vmul.f32 %v1367, %v1371
      %v1374 = vmul.f32 %v1369, %v1372
      %v1375 = vadd.f32 %v1364, %v1373
      %v1376 = vadd.f32 %v1365, %v1374
      %1377 = vrot.lane.b32.xlu0 %v1321, 10
      %v1378 = vpop.permute.xlu0 %1377
      %1379 = vrot.lane.b32.xlu0 %v1322, 10
      %v1380 = vpop.permute.xlu0 %1379
      %s1381 = scalar_lea.vmem %s4, 80
      %v1382 = vld [vmem:[%s1381] sm:$0xff]
      %v1383 = vld [vmem:[%s1381 + $0x8] sm:$0xff]
      %v1384 = vmul.f32 %v1378, %v1382
      %v1385 = vmul.f32 %v1380, %v1383
      %v1386 = vadd.f32 %v1375, %v1384
      %v1387 = vadd.f32 %v1376, %v1385
      %1388 = vrot.lane.b32.xlu0 %v1321, 9
      %v1389 = vpop.permute.xlu0 %1388
      %1390 = vrot.lane.b32.xlu0 %v1322, 9
      %v1391 = vpop.permute.xlu0 %1390
      %s1392 = scalar_lea.vmem %s4, 96
      %v1393 = vld [vmem:[%s1392] sm:$0xff]
      %v1394 = vld [vmem:[%s1392 + $0x8] sm:$0xff]
      %v1395 = vmul.f32 %v1389, %v1393
      %v1396 = vmul.f32 %v1391, %v1394
      %v1397 = vadd.f32 %v1386, %v1395
      %v1398 = vadd.f32 %v1387, %v1396
      %1399 = vrot.lane.b32.xlu0 %v1321, 8
      %v1400 = vpop.permute.xlu0 %1399
      %1401 = vrot.lane.b32.xlu0 %v1322, 8
      %v1402 = vpop.permute.xlu0 %1401
      %s1403 = scalar_lea.vmem %s4, 112
      %v1404 = vld [vmem:[%s1403] sm:$0xff]
      %v1405 = vld [vmem:[%s1403 + $0x8] sm:$0xff]
      %v1406 = vmul.f32 %v1400, %v1404
      %v1407 = vmul.f32 %v1402, %v1405
      %v1408 = vadd.f32 %v1397, %v1406
      %v1409 = vadd.f32 %v1398, %v1407
      %1410 = vrot.lane.b32.xlu0 %v1321, 7
      %v1411 = vpop.permute.xlu0 %1410
      %1412 = vrot.lane.b32.xlu0 %v1322, 7
      %v1413 = vpop.permute.xlu0 %1412
      %s1414 = scalar_lea.vmem %s4, 128
      %v1415 = vld [vmem:[%s1414] sm:$0xff]
      %v1416 = vld [vmem:[%s1414 + $0x8] sm:$0xff]
      %v1417 = vmul.f32 %v1411, %v1415
      %v1418 = vmul.f32 %v1413, %v1416
      %v1419 = vadd.f32 %v1408, %v1417
      %v1420 = vadd.f32 %v1409, %v1418
      %1421 = vrot.lane.b32.xlu0 %v1321, 6
      %v1422 = vpop.permute.xlu0 %1421
      %1423 = vrot.lane.b32.xlu0 %v1322, 6
      %v1424 = vpop.permute.xlu0 %1423
      %s1425 = scalar_lea.vmem %s4, 144
      %v1426 = vld [vmem:[%s1425] sm:$0xff]
      %v1427 = vld [vmem:[%s1425 + $0x8] sm:$0xff]
      %v1428 = vmul.f32 %v1422, %v1426
      %v1429 = vmul.f32 %v1424, %v1427
      %v1430 = vadd.f32 %v1419, %v1428
      %v1431 = vadd.f32 %v1420, %v1429
      %1432 = vrot.lane.b32.xlu0 %v1321, 5
      %v1433 = vpop.permute.xlu0 %1432
      %1434 = vrot.lane.b32.xlu0 %v1322, 5
      %v1435 = vpop.permute.xlu0 %1434
      %s1436 = scalar_lea.vmem %s4, 160
      %v1437 = vld [vmem:[%s1436] sm:$0xff]
      %v1438 = vld [vmem:[%s1436 + $0x8] sm:$0xff]
      %v1439 = vmul.f32 %v1433, %v1437
      %v1440 = vmul.f32 %v1435, %v1438
      %v1441 = vadd.f32 %v1430, %v1439
      %v1442 = vadd.f32 %v1431, %v1440
      %1443 = vrot.lane.b32.xlu0 %v1321, 4
      %v1444 = vpop.permute.xlu0 %1443
      %1445 = vrot.lane.b32.xlu0 %v1322, 4
      %v1446 = vpop.permute.xlu0 %1445
      %s1447 = scalar_lea.vmem %s4, 176
      %v1448 = vld [vmem:[%s1447] sm:$0xff]
      %v1449 = vld [vmem:[%s1447 + $0x8] sm:$0xff]
      %v1450 = vmul.f32 %v1444, %v1448
      %v1451 = vmul.f32 %v1446, %v1449
      %v1452 = vadd.f32 %v1441, %v1450
      %v1453 = vadd.f32 %v1442, %v1451
      %1454 = vrot.lane.b32.xlu0 %v1321, 3
      %v1455 = vpop.permute.xlu0 %1454
      %1456 = vrot.lane.b32.xlu0 %v1322, 3
      %v1457 = vpop.permute.xlu0 %1456
      %s1458 = scalar_lea.vmem %s4, 192
      %v1459 = vld [vmem:[%s1458] sm:$0xff]
      %v1460 = vld [vmem:[%s1458 + $0x8] sm:$0xff]
      %v1461 = vmul.f32 %v1455, %v1459
      %v1462 = vmul.f32 %v1457, %v1460
      %v1463 = vadd.f32 %v1452, %v1461
      %v1464 = vadd.f32 %v1453, %v1462
      %1465 = vrot.lane.b32.xlu0 %v1321, 2
      %v1466 = vpop.permute.xlu0 %1465
      %1467 = vrot.lane.b32.xlu0 %v1322, 2
      %v1468 = vpop.permute.xlu0 %1467
      %s1469 = scalar_lea.vmem %s4, 208
      %v1470 = vld [vmem:[%s1469] sm:$0xff]
      %v1471 = vld [vmem:[%s1469 + $0x8] sm:$0xff]
      %v1472 = vmul.f32 %v1466, %v1470
      %v1473 = vmul.f32 %v1468, %v1471
      %v1474 = vadd.f32 %v1463, %v1472
      %v1475 = vadd.f32 %v1464, %v1473
      %1476 = vrot.lane.b32.xlu0 %v1321, 1
      %v1477 = vpop.permute.xlu0 %1476
      %1478 = vrot.lane.b32.xlu0 %v1322, 1
      %v1479 = vpop.permute.xlu0 %1478
      %s1480 = scalar_lea.vmem %s4, 224
      %v1481 = vld [vmem:[%s1480] sm:$0xff]
      %v1482 = vld [vmem:[%s1480 + $0x8] sm:$0xff]
      %v1483 = vmul.f32 %v1477, %v1481
      %v1484 = vmul.f32 %v1479, %v1482
      %v1485 = vadd.f32 %v1474, %v1483
      %v1486 = vadd.f32 %v1475, %v1484
      %s1487 = scalar_lea.vmem %s4, 240
      %v1488 = vld [vmem:[%s1487] sm:$0xff]
      %v1489 = vld [vmem:[%s1487 + $0x8] sm:$0xff]
      %v1490 = vmul.f32 %v1321, %v1488
      %v1491 = vmul.f32 %v1322, %v1489
      %v1492 = vadd.f32 %v1485, %v1490
      %v1493 = vadd.f32 %v1486, %v1491
      %1494 = vrot.lane.b32.xlu0 %v1321, 127
      %v1495 = vpop.permute.xlu0 %1494
      %1496 = vrot.lane.b32.xlu0 %v1322, 127
      %v1497 = vpop.permute.xlu0 %1496
      %s1498 = scalar_lea.vmem %s4, 256
      %v1499 = vld [vmem:[%s1498] sm:$0xff]
      %v1500 = vld [vmem:[%s1498 + $0x8] sm:$0xff]
      %v1501 = vmul.f32 %v1495, %v1499
      %v1502 = vmul.f32 %v1497, %v1500
      %v1503 = vadd.f32 %v1492, %v1501
      %v1504 = vadd.f32 %v1493, %v1502
      %1505 = vrot.lane.b32.xlu0 %v1321, 126
      %v1506 = vpop.permute.xlu0 %1505
      %1507 = vrot.lane.b32.xlu0 %v1322, 126
      %v1508 = vpop.permute.xlu0 %1507
      %s1509 = scalar_lea.vmem %s4, 272
      %v1510 = vld [vmem:[%s1509] sm:$0xff]
      %v1511 = vld [vmem:[%s1509 + $0x8] sm:$0xff]
      %v1512 = vmul.f32 %v1506, %v1510
      %v1513 = vmul.f32 %v1508, %v1511
      %v1514 = vadd.f32 %v1503, %v1512
      %v1515 = vadd.f32 %v1504, %v1513
      %1516 = vrot.lane.b32.xlu0 %v1321, 125
      %v1517 = vpop.permute.xlu0 %1516
      %1518 = vrot.lane.b32.xlu0 %v1322, 125
      %v1519 = vpop.permute.xlu0 %1518
      %s1520 = scalar_lea.vmem %s4, 288
      %v1521 = vld [vmem:[%s1520] sm:$0xff]
      %v1522 = vld [vmem:[%s1520 + $0x8] sm:$0xff]
      %v1523 = vmul.f32 %v1517, %v1521
      %v1524 = vmul.f32 %v1519, %v1522
      %v1525 = vadd.f32 %v1514, %v1523
      %v1526 = vadd.f32 %v1515, %v1524
      %1527 = vrot.lane.b32.xlu0 %v1321, 124
      %v1528 = vpop.permute.xlu0 %1527
      %1529 = vrot.lane.b32.xlu0 %v1322, 124
      %v1530 = vpop.permute.xlu0 %1529
      %s1531 = scalar_lea.vmem %s4, 304
      %v1532 = vld [vmem:[%s1531] sm:$0xff]
      %v1533 = vld [vmem:[%s1531 + $0x8] sm:$0xff]
      %v1534 = vmul.f32 %v1528, %v1532
      %v1535 = vmul.f32 %v1530, %v1533
      %v1536 = vadd.f32 %v1525, %v1534
      %v1537 = vadd.f32 %v1526, %v1535
      %1538 = vrot.lane.b32.xlu0 %v1321, 123
      %v1539 = vpop.permute.xlu0 %1538
      %1540 = vrot.lane.b32.xlu0 %v1322, 123
      %v1541 = vpop.permute.xlu0 %1540
      %s1542 = scalar_lea.vmem %s4, 320
      %v1543 = vld [vmem:[%s1542] sm:$0xff]
      %v1544 = vld [vmem:[%s1542 + $0x8] sm:$0xff]
      %v1545 = vmul.f32 %v1539, %v1543
      %v1546 = vmul.f32 %v1541, %v1544
      %v1547 = vadd.f32 %v1536, %v1545
      %v1548 = vadd.f32 %v1537, %v1546
      %1549 = vrot.lane.b32.xlu0 %v1321, 122
      %v1550 = vpop.permute.xlu0 %1549
      %1551 = vrot.lane.b32.xlu0 %v1322, 122
      %v1552 = vpop.permute.xlu0 %1551
      %s1553 = scalar_lea.vmem %s4, 336
      %v1554 = vld [vmem:[%s1553] sm:$0xff]
      %v1555 = vld [vmem:[%s1553 + $0x8] sm:$0xff]
      %v1556 = vmul.f32 %v1550, %v1554
      %v1557 = vmul.f32 %v1552, %v1555
      %v1558 = vadd.f32 %v1547, %v1556
      %v1559 = vadd.f32 %v1548, %v1557
      %1560 = vrot.lane.b32.xlu0 %v1321, 121
      %v1561 = vpop.permute.xlu0 %1560
      %1562 = vrot.lane.b32.xlu0 %v1322, 121
      %v1563 = vpop.permute.xlu0 %1562
      %s1564 = scalar_lea.vmem %s4, 352
      %v1565 = vld [vmem:[%s1564] sm:$0xff]
      %v1566 = vld [vmem:[%s1564 + $0x8] sm:$0xff]
      %v1567 = vmul.f32 %v1561, %v1565
      %v1568 = vmul.f32 %v1563, %v1566
      %v1569 = vadd.f32 %v1558, %v1567
      %v1570 = vadd.f32 %v1559, %v1568
      %1571 = vrot.lane.b32.xlu0 %v1321, 120
      %v1572 = vpop.permute.xlu0 %1571
      %1573 = vrot.lane.b32.xlu0 %v1322, 120
      %v1574 = vpop.permute.xlu0 %1573
      %s1575 = scalar_lea.vmem %s4, 368
      %v1576 = vld [vmem:[%s1575] sm:$0xff]
      %v1577 = vld [vmem:[%s1575 + $0x8] sm:$0xff]
      %v1578 = vmul.f32 %v1572, %v1576
      %v1579 = vmul.f32 %v1574, %v1577
      %v1580 = vadd.f32 %v1569, %v1578
      %v1581 = vadd.f32 %v1570, %v1579
      %1582 = vrot.lane.b32.xlu0 %v1321, 119
      %v1583 = vpop.permute.xlu0 %1582
      %1584 = vrot.lane.b32.xlu0 %v1322, 119
      %v1585 = vpop.permute.xlu0 %1584
      %s1586 = scalar_lea.vmem %s4, 384
      %v1587 = vld [vmem:[%s1586] sm:$0xff]
      %v1588 = vld [vmem:[%s1586 + $0x8] sm:$0xff]
      %v1589 = vmul.f32 %v1583, %v1587
      %v1590 = vmul.f32 %v1585, %v1588
      %v1591 = vadd.f32 %v1580, %v1589
      %v1592 = vadd.f32 %v1581, %v1590
      %1593 = vrot.lane.b32.xlu0 %v1321, 118
      %v1594 = vpop.permute.xlu0 %1593
      %1595 = vrot.lane.b32.xlu0 %v1322, 118
      %v1596 = vpop.permute.xlu0 %1595
      %s1597 = scalar_lea.vmem %s4, 400
      %v1598 = vld [vmem:[%s1597] sm:$0xff]
      %v1599 = vld [vmem:[%s1597 + $0x8] sm:$0xff]
      %v1600 = vmul.f32 %v1594, %v1598
      %v1601 = vmul.f32 %v1596, %v1599
      %v1602 = vadd.f32 %v1591, %v1600
      %v1603 = vadd.f32 %v1592, %v1601
      %1604 = vrot.lane.b32.xlu0 %v1321, 117
      %v1605 = vpop.permute.xlu0 %1604
      %1606 = vrot.lane.b32.xlu0 %v1322, 117
      %v1607 = vpop.permute.xlu0 %1606
      %s1608 = scalar_lea.vmem %s4, 416
      %v1609 = vld [vmem:[%s1608] sm:$0xff]
      %v1610 = vld [vmem:[%s1608 + $0x8] sm:$0xff]
      %v1611 = vmul.f32 %v1605, %v1609
      %v1612 = vmul.f32 %v1607, %v1610
      %v1613 = vadd.f32 %v1602, %v1611
      %v1614 = vadd.f32 %v1603, %v1612
      %1615 = vrot.lane.b32.xlu0 %v1321, 116
      %v1616 = vpop.permute.xlu0 %1615
      %1617 = vrot.lane.b32.xlu0 %v1322, 116
      %v1618 = vpop.permute.xlu0 %1617
      %s1619 = scalar_lea.vmem %s4, 432
      %v1620 = vld [vmem:[%s1619] sm:$0xff]
      %v1621 = vld [vmem:[%s1619 + $0x8] sm:$0xff]
      %v1622 = vmul.f32 %v1616, %v1620
      %v1623 = vmul.f32 %v1618, %v1621
      %v1624 = vadd.f32 %v1613, %v1622
      %v1625 = vadd.f32 %v1614, %v1623
      %1626 = vrot.lane.b32.xlu0 %v1321, 115
      %v1627 = vpop.permute.xlu0 %1626
      %1628 = vrot.lane.b32.xlu0 %v1322, 115
      %v1629 = vpop.permute.xlu0 %1628
      %s1630 = scalar_lea.vmem %s4, 448
      %v1631 = vld [vmem:[%s1630] sm:$0xff]
      %v1632 = vld [vmem:[%s1630 + $0x8] sm:$0xff]
      %v1633 = vmul.f32 %v1627, %v1631
      %v1634 = vmul.f32 %v1629, %v1632
      %v1635 = vadd.f32 %v1624, %v1633
      %v1636 = vadd.f32 %v1625, %v1634
      %1637 = vrot.lane.b32.xlu0 %v1321, 114
      %v1638 = vpop.permute.xlu0 %1637
      %1639 = vrot.lane.b32.xlu0 %v1322, 114
      %v1640 = vpop.permute.xlu0 %1639
      %s1641 = scalar_lea.vmem %s4, 464
      %v1642 = vld [vmem:[%s1641] sm:$0xff]
      %v1643 = vld [vmem:[%s1641 + $0x8] sm:$0xff]
      %v1644 = vmul.f32 %v1638, %v1642
      %v1645 = vmul.f32 %v1640, %v1643
      %v1646 = vadd.f32 %v1635, %v1644
      %v1647 = vadd.f32 %v1636, %v1645
      %1648 = vrot.lane.b32.xlu0 %v1321, 113
      %v1649 = vpop.permute.xlu0 %1648
      %1650 = vrot.lane.b32.xlu0 %v1322, 113
      %v1651 = vpop.permute.xlu0 %1650
      %s1652 = scalar_lea.vmem %s4, 480
      %v1653 = vld [vmem:[%s1652] sm:$0xff]
      %v1654 = vld [vmem:[%s1652 + $0x8] sm:$0xff]
      %v1655 = vmul.f32 %v1649, %v1653
      %v1656 = vmul.f32 %v1651, %v1654
      %v1657 = vadd.f32 %v1646, %v1655
      %v1658 = vadd.f32 %v1647, %v1656
      %v1659 = vld [vmem:[#allocation2 + $0x1] sm:$0xff]
      %v1660 = vld [vmem:[#allocation2 + $0x9] sm:$0xff]
      %1661 = vrot.lane.b32.xlu0 %v1659, 15
      %v1662 = vpop.permute.xlu0 %1661
      %1663 = vrot.lane.b32.xlu0 %v1660, 15
      %v1664 = vpop.permute.xlu0 %1663
      %s1665 = scalar_lea.vmem %s4, 496
      %v1666 = vld [vmem:[%s1665] sm:$0xff]
      %v1667 = vld [vmem:[%s1665 + $0x8] sm:$0xff]
      %v1668 = vmul.f32 %v1662, %v1666
      %v1669 = vmul.f32 %v1664, %v1667
      %v1670 = vadd.f32 %v1657, %v1668
      %v1671 = vadd.f32 %v1658, %v1669
      %1672 = vrot.lane.b32.xlu0 %v1659, 14
      %v1673 = vpop.permute.xlu0 %1672
      %1674 = vrot.lane.b32.xlu0 %v1660, 14
      %v1675 = vpop.permute.xlu0 %1674
      %s1676 = scalar_lea.vmem %s4, 512
      %v1677 = vld [vmem:[%s1676] sm:$0xff]
      %v1678 = vld [vmem:[%s1676 + $0x8] sm:$0xff]
      %v1679 = vmul.f32 %v1673, %v1677
      %v1680 = vmul.f32 %v1675, %v1678
      %v1681 = vadd.f32 %v1670, %v1679
      %v1682 = vadd.f32 %v1671, %v1680
      %1683 = vrot.lane.b32.xlu0 %v1659, 13
      %v1684 = vpop.permute.xlu0 %1683
      %1685 = vrot.lane.b32.xlu0 %v1660, 13
      %v1686 = vpop.permute.xlu0 %1685
      %s1687 = scalar_lea.vmem %s4, 528
      %v1688 = vld [vmem:[%s1687] sm:$0xff]
      %v1689 = vld [vmem:[%s1687 + $0x8] sm:$0xff]
      %v1690 = vmul.f32 %v1684, %v1688
      %v1691 = vmul.f32 %v1686, %v1689
      %v1692 = vadd.f32 %v1681, %v1690
      %v1693 = vadd.f32 %v1682, %v1691
      %1694 = vrot.lane.b32.xlu0 %v1659, 12
      %v1695 = vpop.permute.xlu0 %1694
      %1696 = vrot.lane.b32.xlu0 %v1660, 12
      %v1697 = vpop.permute.xlu0 %1696
      %s1698 = scalar_lea.vmem %s4, 544
      %v1699 = vld [vmem:[%s1698] sm:$0xff]
      %v1700 = vld [vmem:[%s1698 + $0x8] sm:$0xff]
      %v1701 = vmul.f32 %v1695, %v1699
      %v1702 = vmul.f32 %v1697, %v1700
      %v1703 = vadd.f32 %v1692, %v1701
      %v1704 = vadd.f32 %v1693, %v1702
      %1705 = vrot.lane.b32.xlu0 %v1659, 11
      %v1706 = vpop.permute.xlu0 %1705
      %1707 = vrot.lane.b32.xlu0 %v1660, 11
      %v1708 = vpop.permute.xlu0 %1707
      %s1709 = scalar_lea.vmem %s4, 560
      %v1710 = vld [vmem:[%s1709] sm:$0xff]
      %v1711 = vld [vmem:[%s1709 + $0x8] sm:$0xff]
      %v1712 = vmul.f32 %v1706, %v1710
      %v1713 = vmul.f32 %v1708, %v1711
      %v1714 = vadd.f32 %v1703, %v1712
      %v1715 = vadd.f32 %v1704, %v1713
      %1716 = vrot.lane.b32.xlu0 %v1659, 10
      %v1717 = vpop.permute.xlu0 %1716
      %1718 = vrot.lane.b32.xlu0 %v1660, 10
      %v1719 = vpop.permute.xlu0 %1718
      %s1720 = scalar_lea.vmem %s4, 576
      %v1721 = vld [vmem:[%s1720] sm:$0xff]
      %v1722 = vld [vmem:[%s1720 + $0x8] sm:$0xff]
      %v1723 = vmul.f32 %v1717, %v1721
      %v1724 = vmul.f32 %v1719, %v1722
      %v1725 = vadd.f32 %v1714, %v1723
      %v1726 = vadd.f32 %v1715, %v1724
      %1727 = vrot.lane.b32.xlu0 %v1659, 9
      %v1728 = vpop.permute.xlu0 %1727
      %1729 = vrot.lane.b32.xlu0 %v1660, 9
      %v1730 = vpop.permute.xlu0 %1729
      %s1731 = scalar_lea.vmem %s4, 592
      %v1732 = vld [vmem:[%s1731] sm:$0xff]
      %v1733 = vld [vmem:[%s1731 + $0x8] sm:$0xff]
      %v1734 = vmul.f32 %v1728, %v1732
      %v1735 = vmul.f32 %v1730, %v1733
      %v1736 = vadd.f32 %v1725, %v1734
      %v1737 = vadd.f32 %v1726, %v1735
      %1738 = vrot.lane.b32.xlu0 %v1659, 8
      %v1739 = vpop.permute.xlu0 %1738
      %1740 = vrot.lane.b32.xlu0 %v1660, 8
      %v1741 = vpop.permute.xlu0 %1740
      %s1742 = scalar_lea.vmem %s4, 608
      %v1743 = vld [vmem:[%s1742] sm:$0xff]
      %v1744 = vld [vmem:[%s1742 + $0x8] sm:$0xff]
      %v1745 = vmul.f32 %v1739, %v1743
      %v1746 = vmul.f32 %v1741, %v1744
      %v1747 = vadd.f32 %v1736, %v1745
      %v1748 = vadd.f32 %v1737, %v1746
      %1749 = vrot.lane.b32.xlu0 %v1659, 7
      %v1750 = vpop.permute.xlu0 %1749
      %1751 = vrot.lane.b32.xlu0 %v1660, 7
      %v1752 = vpop.permute.xlu0 %1751
      %s1753 = scalar_lea.vmem %s4, 624
      %v1754 = vld [vmem:[%s1753] sm:$0xff]
      %v1755 = vld [vmem:[%s1753 + $0x8] sm:$0xff]
      %v1756 = vmul.f32 %v1750, %v1754
      %v1757 = vmul.f32 %v1752, %v1755
      %v1758 = vadd.f32 %v1747, %v1756
      %v1759 = vadd.f32 %v1748, %v1757
      %1760 = vrot.lane.b32.xlu0 %v1659, 6
      %v1761 = vpop.permute.xlu0 %1760
      %1762 = vrot.lane.b32.xlu0 %v1660, 6
      %v1763 = vpop.permute.xlu0 %1762
      %s1764 = scalar_lea.vmem %s4, 640
      %v1765 = vld [vmem:[%s1764] sm:$0xff]
      %v1766 = vld [vmem:[%s1764 + $0x8] sm:$0xff]
      %v1767 = vmul.f32 %v1761, %v1765
      %v1768 = vmul.f32 %v1763, %v1766
      %v1769 = vadd.f32 %v1758, %v1767
      %v1770 = vadd.f32 %v1759, %v1768
      %1771 = vrot.lane.b32.xlu0 %v1659, 5
      %v1772 = vpop.permute.xlu0 %1771
      %1773 = vrot.lane.b32.xlu0 %v1660, 5
      %v1774 = vpop.permute.xlu0 %1773
      %s1775 = scalar_lea.vmem %s4, 656
      %v1776 = vld [vmem:[%s1775] sm:$0xff]
      %v1777 = vld [vmem:[%s1775 + $0x8] sm:$0xff]
      %v1778 = vmul.f32 %v1772, %v1776
      %v1779 = vmul.f32 %v1774, %v1777
      %v1780 = vadd.f32 %v1769, %v1778
      %v1781 = vadd.f32 %v1770, %v1779
      %1782 = vrot.lane.b32.xlu0 %v1659, 4
      %v1783 = vpop.permute.xlu0 %1782
      %1784 = vrot.lane.b32.xlu0 %v1660, 4
      %v1785 = vpop.permute.xlu0 %1784
      %s1786 = scalar_lea.vmem %s4, 672
      %v1787 = vld [vmem:[%s1786] sm:$0xff]
      %v1788 = vld [vmem:[%s1786 + $0x8] sm:$0xff]
      %v1789 = vmul.f32 %v1783, %v1787
      %v1790 = vmul.f32 %v1785, %v1788
      %v1791 = vadd.f32 %v1780, %v1789
      %v1792 = vadd.f32 %v1781, %v1790
      %1793 = vrot.lane.b32.xlu0 %v1659, 3
      %v1794 = vpop.permute.xlu0 %1793
      %1795 = vrot.lane.b32.xlu0 %v1660, 3
      %v1796 = vpop.permute.xlu0 %1795
      %s1797 = scalar_lea.vmem %s4, 688
      %v1798 = vld [vmem:[%s1797] sm:$0xff]
      %v1799 = vld [vmem:[%s1797 + $0x8] sm:$0xff]
      %v1800 = vmul.f32 %v1794, %v1798
      %v1801 = vmul.f32 %v1796, %v1799
      %v1802 = vadd.f32 %v1791, %v1800
      %v1803 = vadd.f32 %v1792, %v1801
      %1804 = vrot.lane.b32.xlu0 %v1659, 2
      %v1805 = vpop.permute.xlu0 %1804
      %1806 = vrot.lane.b32.xlu0 %v1660, 2
      %v1807 = vpop.permute.xlu0 %1806
      %s1808 = scalar_lea.vmem %s4, 704
      %v1809 = vld [vmem:[%s1808] sm:$0xff]
      %v1810 = vld [vmem:[%s1808 + $0x8] sm:$0xff]
      %v1811 = vmul.f32 %v1805, %v1809
      %v1812 = vmul.f32 %v1807, %v1810
      %v1813 = vadd.f32 %v1802, %v1811
      %v1814 = vadd.f32 %v1803, %v1812
      %1815 = vrot.lane.b32.xlu0 %v1659, 1
      %v1816 = vpop.permute.xlu0 %1815
      %1817 = vrot.lane.b32.xlu0 %v1660, 1
      %v1818 = vpop.permute.xlu0 %1817
      %s1819 = scalar_lea.vmem %s4, 720
      %v1820 = vld [vmem:[%s1819] sm:$0xff]
      %v1821 = vld [vmem:[%s1819 + $0x8] sm:$0xff]
      %v1822 = vmul.f32 %v1816, %v1820
      %v1823 = vmul.f32 %v1818, %v1821
      %v1824 = vadd.f32 %v1813, %v1822
      %v1825 = vadd.f32 %v1814, %v1823
      %s1826 = scalar_lea.vmem %s4, 736
      %v1827 = vld [vmem:[%s1826] sm:$0xff]
      %v1828 = vld [vmem:[%s1826 + $0x8] sm:$0xff]
      %v1829 = vmul.f32 %v1659, %v1827
      %v1830 = vmul.f32 %v1660, %v1828
      %v1831 = vadd.f32 %v1824, %v1829
      %v1832 = vadd.f32 %v1825, %v1830
      %1833 = vrot.lane.b32.xlu0 %v1659, 127
      %v1834 = vpop.permute.xlu0 %1833
      %1835 = vrot.lane.b32.xlu0 %v1660, 127
      %v1836 = vpop.permute.xlu0 %1835
      %s1837 = scalar_lea.vmem %s4, 752
      %v1838 = vld [vmem:[%s1837] sm:$0xff]
      %v1839 = vld [vmem:[%s1837 + $0x8] sm:$0xff]
      %v1840 = vmul.f32 %v1834, %v1838
      %v1841 = vmul.f32 %v1836, %v1839
      %v1842 = vadd.f32 %v1831, %v1840
      %v1843 = vadd.f32 %v1832, %v1841
      %1844 = vrot.lane.b32.xlu0 %v1659, 126
      %v1845 = vpop.permute.xlu0 %1844
      %1846 = vrot.lane.b32.xlu0 %v1660, 126
      %v1847 = vpop.permute.xlu0 %1846
      %s1848 = scalar_lea.vmem %s4, 768
      %v1849 = vld [vmem:[%s1848] sm:$0xff]
      %v1850 = vld [vmem:[%s1848 + $0x8] sm:$0xff]
      %v1851 = vmul.f32 %v1845, %v1849
      %v1852 = vmul.f32 %v1847, %v1850
      %v1853 = vadd.f32 %v1842, %v1851
      %v1854 = vadd.f32 %v1843, %v1852
      %1855 = vrot.lane.b32.xlu0 %v1659, 125
      %v1856 = vpop.permute.xlu0 %1855
      %1857 = vrot.lane.b32.xlu0 %v1660, 125
      %v1858 = vpop.permute.xlu0 %1857
      %s1859 = scalar_lea.vmem %s4, 784
      %v1860 = vld [vmem:[%s1859] sm:$0xff]
      %v1861 = vld [vmem:[%s1859 + $0x8] sm:$0xff]
      %v1862 = vmul.f32 %v1856, %v1860
      %v1863 = vmul.f32 %v1858, %v1861
      %v1864 = vadd.f32 %v1853, %v1862
      %v1865 = vadd.f32 %v1854, %v1863
      %1866 = vrot.lane.b32.xlu0 %v1659, 124
      %v1867 = vpop.permute.xlu0 %1866
      %1868 = vrot.lane.b32.xlu0 %v1660, 124
      %v1869 = vpop.permute.xlu0 %1868
      %s1870 = scalar_lea.vmem %s4, 800
      %v1871 = vld [vmem:[%s1870] sm:$0xff]
      %v1872 = vld [vmem:[%s1870 + $0x8] sm:$0xff]
      %v1873 = vmul.f32 %v1867, %v1871
      %v1874 = vmul.f32 %v1869, %v1872
      %v1875 = vadd.f32 %v1864, %v1873
      %v1876 = vadd.f32 %v1865, %v1874
      %1877 = vrot.lane.b32.xlu0 %v1659, 123
      %v1878 = vpop.permute.xlu0 %1877
      %1879 = vrot.lane.b32.xlu0 %v1660, 123
      %v1880 = vpop.permute.xlu0 %1879
      %s1881 = scalar_lea.vmem %s4, 816
      %v1882 = vld [vmem:[%s1881] sm:$0xff]
      %v1883 = vld [vmem:[%s1881 + $0x8] sm:$0xff]
      %v1884 = vmul.f32 %v1878, %v1882
      %v1885 = vmul.f32 %v1880, %v1883
      %v1886 = vadd.f32 %v1875, %v1884
      %v1887 = vadd.f32 %v1876, %v1885
      %1888 = vrot.lane.b32.xlu0 %v1659, 122
      %v1889 = vpop.permute.xlu0 %1888
      %1890 = vrot.lane.b32.xlu0 %v1660, 122
      %v1891 = vpop.permute.xlu0 %1890
      %s1892 = scalar_lea.vmem %s4, 832
      %v1893 = vld [vmem:[%s1892] sm:$0xff]
      %v1894 = vld [vmem:[%s1892 + $0x8] sm:$0xff]
      %v1895 = vmul.f32 %v1889, %v1893
      %v1896 = vmul.f32 %v1891, %v1894
      %v1897 = vadd.f32 %v1886, %v1895
      %v1898 = vadd.f32 %v1887, %v1896
      %1899 = vrot.lane.b32.xlu0 %v1659, 121
      %v1900 = vpop.permute.xlu0 %1899
      %1901 = vrot.lane.b32.xlu0 %v1660, 121
      %v1902 = vpop.permute.xlu0 %1901
      %s1903 = scalar_lea.vmem %s4, 848
      %v1904 = vld [vmem:[%s1903] sm:$0xff]
      %v1905 = vld [vmem:[%s1903 + $0x8] sm:$0xff]
      %v1906 = vmul.f32 %v1900, %v1904
      %v1907 = vmul.f32 %v1902, %v1905
      %v1908 = vadd.f32 %v1897, %v1906
      %v1909 = vadd.f32 %v1898, %v1907
      %1910 = vrot.lane.b32.xlu0 %v1659, 120
      %v1911 = vpop.permute.xlu0 %1910
      %1912 = vrot.lane.b32.xlu0 %v1660, 120
      %v1913 = vpop.permute.xlu0 %1912
      %s1914 = scalar_lea.vmem %s4, 864
      %v1915 = vld [vmem:[%s1914] sm:$0xff]
      %v1916 = vld [vmem:[%s1914 + $0x8] sm:$0xff]
      %v1917 = vmul.f32 %v1911, %v1915
      %v1918 = vmul.f32 %v1913, %v1916
      %v1919 = vadd.f32 %v1908, %v1917
      %v1920 = vadd.f32 %v1909, %v1918
      %1921 = vrot.lane.b32.xlu0 %v1659, 119
      %v1922 = vpop.permute.xlu0 %1921
      %1923 = vrot.lane.b32.xlu0 %v1660, 119
      %v1924 = vpop.permute.xlu0 %1923
      %s1925 = scalar_lea.vmem %s4, 880
      %v1926 = vld [vmem:[%s1925] sm:$0xff]
      %v1927 = vld [vmem:[%s1925 + $0x8] sm:$0xff]
      %v1928 = vmul.f32 %v1922, %v1926
      %v1929 = vmul.f32 %v1924, %v1927
      %v1930 = vadd.f32 %v1919, %v1928
      %v1931 = vadd.f32 %v1920, %v1929
      %1932 = vrot.lane.b32.xlu0 %v1659, 118
      %v1933 = vpop.permute.xlu0 %1932
      %1934 = vrot.lane.b32.xlu0 %v1660, 118
      %v1935 = vpop.permute.xlu0 %1934
      %s1936 = scalar_lea.vmem %s4, 896
      %v1937 = vld [vmem:[%s1936] sm:$0xff]
      %v1938 = vld [vmem:[%s1936 + $0x8] sm:$0xff]
      %v1939 = vmul.f32 %v1933, %v1937
      %v1940 = vmul.f32 %v1935, %v1938
      %v1941 = vadd.f32 %v1930, %v1939
      %v1942 = vadd.f32 %v1931, %v1940
      %1943 = vrot.lane.b32.xlu0 %v1659, 117
      %v1944 = vpop.permute.xlu0 %1943
      %1945 = vrot.lane.b32.xlu0 %v1660, 117
      %v1946 = vpop.permute.xlu0 %1945
      %s1947 = scalar_lea.vmem %s4, 912
      %v1948 = vld [vmem:[%s1947] sm:$0xff]
      %v1949 = vld [vmem:[%s1947 + $0x8] sm:$0xff]
      %v1950 = vmul.f32 %v1944, %v1948
      %v1951 = vmul.f32 %v1946, %v1949
      %v1952 = vadd.f32 %v1941, %v1950
      %v1953 = vadd.f32 %v1942, %v1951
      %1954 = vrot.lane.b32.xlu0 %v1659, 116
      %v1955 = vpop.permute.xlu0 %1954
      %1956 = vrot.lane.b32.xlu0 %v1660, 116
      %v1957 = vpop.permute.xlu0 %1956
      %s1958 = scalar_lea.vmem %s4, 928
      %v1959 = vld [vmem:[%s1958] sm:$0xff]
      %v1960 = vld [vmem:[%s1958 + $0x8] sm:$0xff]
      %v1961 = vmul.f32 %v1955, %v1959
      %v1962 = vmul.f32 %v1957, %v1960
      %v1963 = vadd.f32 %v1952, %v1961
      %v1964 = vadd.f32 %v1953, %v1962
      %1965 = vrot.lane.b32.xlu0 %v1659, 115
      %v1966 = vpop.permute.xlu0 %1965
      %1967 = vrot.lane.b32.xlu0 %v1660, 115
      %v1968 = vpop.permute.xlu0 %1967
      %s1969 = scalar_lea.vmem %s4, 944
      %v1970 = vld [vmem:[%s1969] sm:$0xff]
      %v1971 = vld [vmem:[%s1969 + $0x8] sm:$0xff]
      %v1972 = vmul.f32 %v1966, %v1970
      %v1973 = vmul.f32 %v1968, %v1971
      %v1974 = vadd.f32 %v1963, %v1972
      %v1975 = vadd.f32 %v1964, %v1973
      %1976 = vrot.lane.b32.xlu0 %v1659, 114
      %v1977 = vpop.permute.xlu0 %1976
      %1978 = vrot.lane.b32.xlu0 %v1660, 114
      %v1979 = vpop.permute.xlu0 %1978
      %s1980 = scalar_lea.vmem %s4, 960
      %v1981 = vld [vmem:[%s1980] sm:$0xff]
      %v1982 = vld [vmem:[%s1980 + $0x8] sm:$0xff]
      %v1983 = vmul.f32 %v1977, %v1981
      %v1984 = vmul.f32 %v1979, %v1982
      %v1985 = vadd.f32 %v1974, %v1983
      %v1986 = vadd.f32 %v1975, %v1984
      %1987 = vrot.lane.b32.xlu0 %v1659, 113
      %v1988 = vpop.permute.xlu0 %1987
      %1989 = vrot.lane.b32.xlu0 %v1660, 113
      %v1990 = vpop.permute.xlu0 %1989
      %s1991 = scalar_lea.vmem %s4, 976
      %v1992 = vld [vmem:[%s1991] sm:$0xff]
      %v1993 = vld [vmem:[%s1991 + $0x8] sm:$0xff]
      %v1994 = vmul.f32 %v1988, %v1992
      %v1995 = vmul.f32 %v1990, %v1993
      %v1996 = vadd.f32 %v1985, %v1994
      %v1997 = vadd.f32 %v1986, %v1995
      %v1998 = vld [vmem:[#allocation2 + $0x2] sm:$0xff]
      %v1999 = vld [vmem:[#allocation2 + $0xa] sm:$0xff]
      %2000 = vrot.lane.b32.xlu0 %v1998, 15
      %v2001 = vpop.permute.xlu0 %2000
      %2002 = vrot.lane.b32.xlu0 %v1999, 15
      %v2003 = vpop.permute.xlu0 %2002
      %s2004 = scalar_lea.vmem %s4, 992
      %v2005 = vld [vmem:[%s2004] sm:$0xff]
      %v2006 = vld [vmem:[%s2004 + $0x8] sm:$0xff]
      %v2007 = vmul.f32 %v2001, %v2005
      %v2008 = vmul.f32 %v2003, %v2006
      %v2009 = vadd.f32 %v1996, %v2007
      %v2010 = vadd.f32 %v1997, %v2008
      %2011 = vrot.lane.b32.xlu0 %v1998, 14
      %v2012 = vpop.permute.xlu0 %2011
      %2013 = vrot.lane.b32.xlu0 %v1999, 14
      %v2014 = vpop.permute.xlu0 %2013
      %s2015 = scalar_lea.vmem %s4, 1008
      %v2016 = vld [vmem:[%s2015] sm:$0xff]
      %v2017 = vld [vmem:[%s2015 + $0x8] sm:$0xff]
      %v2018 = vmul.f32 %v2012, %v2016
      %v2019 = vmul.f32 %v2014, %v2017
      %v2020 = vadd.f32 %v2009, %v2018
      %v2021 = vadd.f32 %v2010, %v2019
      %2022 = vrot.lane.b32.xlu0 %v1998, 13
      %v2023 = vpop.permute.xlu0 %2022
      %2024 = vrot.lane.b32.xlu0 %v1999, 13
      %v2025 = vpop.permute.xlu0 %2024
      %s2026 = scalar_lea.vmem %s4, 1024
      %v2027 = vld [vmem:[%s2026] sm:$0xff]
      %v2028 = vld [vmem:[%s2026 + $0x8] sm:$0xff]
      %v2029 = vmul.f32 %v2023, %v2027
      %v2030 = vmul.f32 %v2025, %v2028
      %v2031 = vadd.f32 %v2020, %v2029
      %v2032 = vadd.f32 %v2021, %v2030
      %2033 = vrot.lane.b32.xlu0 %v1998, 12
      %v2034 = vpop.permute.xlu0 %2033
      %2035 = vrot.lane.b32.xlu0 %v1999, 12
      %v2036 = vpop.permute.xlu0 %2035
      %s2037 = scalar_lea.vmem %s4, 1040
      %v2038 = vld [vmem:[%s2037] sm:$0xff]
      %v2039 = vld [vmem:[%s2037 + $0x8] sm:$0xff]
      %v2040 = vmul.f32 %v2034, %v2038
      %v2041 = vmul.f32 %v2036, %v2039
      %v2042 = vadd.f32 %v2031, %v2040
      %v2043 = vadd.f32 %v2032, %v2041
      %2044 = vrot.lane.b32.xlu0 %v1998, 11
      %v2045 = vpop.permute.xlu0 %2044
      %2046 = vrot.lane.b32.xlu0 %v1999, 11
      %v2047 = vpop.permute.xlu0 %2046
      %s2048 = scalar_lea.vmem %s4, 1056
      %v2049 = vld [vmem:[%s2048] sm:$0xff]
      %v2050 = vld [vmem:[%s2048 + $0x8] sm:$0xff]
      %v2051 = vmul.f32 %v2045, %v2049
      %v2052 = vmul.f32 %v2047, %v2050
      %v2053 = vadd.f32 %v2042, %v2051
      %v2054 = vadd.f32 %v2043, %v2052
      %2055 = vrot.lane.b32.xlu0 %v1998, 10
      %v2056 = vpop.permute.xlu0 %2055
      %2057 = vrot.lane.b32.xlu0 %v1999, 10
      %v2058 = vpop.permute.xlu0 %2057
      %s2059 = scalar_lea.vmem %s4, 1072
      %v2060 = vld [vmem:[%s2059] sm:$0xff]
      %v2061 = vld [vmem:[%s2059 + $0x8] sm:$0xff]
      %v2062 = vmul.f32 %v2056, %v2060
      %v2063 = vmul.f32 %v2058, %v2061
      %v2064 = vadd.f32 %v2053, %v2062
      %v2065 = vadd.f32 %v2054, %v2063
      %2066 = vrot.lane.b32.xlu0 %v1998, 9
      %v2067 = vpop.permute.xlu0 %2066
      %2068 = vrot.lane.b32.xlu0 %v1999, 9
      %v2069 = vpop.permute.xlu0 %2068
      %s2070 = scalar_lea.vmem %s4, 1088
      %v2071 = vld [vmem:[%s2070] sm:$0xff]
      %v2072 = vld [vmem:[%s2070 + $0x8] sm:$0xff]
      %v2073 = vmul.f32 %v2067, %v2071
      %v2074 = vmul.f32 %v2069, %v2072
      %v2075 = vadd.f32 %v2064, %v2073
      %v2076 = vadd.f32 %v2065, %v2074
      %2077 = vrot.lane.b32.xlu0 %v1998, 8
      %v2078 = vpop.permute.xlu0 %2077
      %2079 = vrot.lane.b32.xlu0 %v1999, 8
      %v2080 = vpop.permute.xlu0 %2079
      %s2081 = scalar_lea.vmem %s4, 1104
      %v2082 = vld [vmem:[%s2081] sm:$0xff]
      %v2083 = vld [vmem:[%s2081 + $0x8] sm:$0xff]
      %v2084 = vmul.f32 %v2078, %v2082
      %v2085 = vmul.f32 %v2080, %v2083
      %v2086 = vadd.f32 %v2075, %v2084
      %v2087 = vadd.f32 %v2076, %v2085
      %2088 = vrot.lane.b32.xlu0 %v1998, 7
      %v2089 = vpop.permute.xlu0 %2088
      %2090 = vrot.lane.b32.xlu0 %v1999, 7
      %v2091 = vpop.permute.xlu0 %2090
      %s2092 = scalar_lea.vmem %s4, 1120
      %v2093 = vld [vmem:[%s2092] sm:$0xff]
      %v2094 = vld [vmem:[%s2092 + $0x8] sm:$0xff]
      %v2095 = vmul.f32 %v2089, %v2093
      %v2096 = vmul.f32 %v2091, %v2094
      %v2097 = vadd.f32 %v2086, %v2095
      %v2098 = vadd.f32 %v2087, %v2096
      %2099 = vrot.lane.b32.xlu0 %v1998, 6
      %v2100 = vpop.permute.xlu0 %2099
      %2101 = vrot.lane.b32.xlu0 %v1999, 6
      %v2102 = vpop.permute.xlu0 %2101
      %s2103 = scalar_lea.vmem %s4, 1136
      %v2104 = vld [vmem:[%s2103] sm:$0xff]
      %v2105 = vld [vmem:[%s2103 + $0x8] sm:$0xff]
      %v2106 = vmul.f32 %v2100, %v2104
      %v2107 = vmul.f32 %v2102, %v2105
      %v2108 = vadd.f32 %v2097, %v2106
      %v2109 = vadd.f32 %v2098, %v2107
      %2110 = vrot.lane.b32.xlu0 %v1998, 5
      %v2111 = vpop.permute.xlu0 %2110
      %2112 = vrot.lane.b32.xlu0 %v1999, 5
      %v2113 = vpop.permute.xlu0 %2112
      %s2114 = scalar_lea.vmem %s4, 1152
      %v2115 = vld [vmem:[%s2114] sm:$0xff]
      %v2116 = vld [vmem:[%s2114 + $0x8] sm:$0xff]
      %v2117 = vmul.f32 %v2111, %v2115
      %v2118 = vmul.f32 %v2113, %v2116
      %v2119 = vadd.f32 %v2108, %v2117
      %v2120 = vadd.f32 %v2109, %v2118
      %2121 = vrot.lane.b32.xlu0 %v1998, 4
      %v2122 = vpop.permute.xlu0 %2121
      %2123 = vrot.lane.b32.xlu0 %v1999, 4
      %v2124 = vpop.permute.xlu0 %2123
      %s2125 = scalar_lea.vmem %s4, 1168
      %v2126 = vld [vmem:[%s2125] sm:$0xff]
      %v2127 = vld [vmem:[%s2125 + $0x8] sm:$0xff]
      %v2128 = vmul.f32 %v2122, %v2126
      %v2129 = vmul.f32 %v2124, %v2127
      %v2130 = vadd.f32 %v2119, %v2128
      %v2131 = vadd.f32 %v2120, %v2129
      %2132 = vrot.lane.b32.xlu0 %v1998, 3
      %v2133 = vpop.permute.xlu0 %2132
      %2134 = vrot.lane.b32.xlu0 %v1999, 3
      %v2135 = vpop.permute.xlu0 %2134
      %s2136 = scalar_lea.vmem %s4, 1184
      %v2137 = vld [vmem:[%s2136] sm:$0xff]
      %v2138 = vld [vmem:[%s2136 + $0x8] sm:$0xff]
      %v2139 = vmul.f32 %v2133, %v2137
      %v2140 = vmul.f32 %v2135, %v2138
      %v2141 = vadd.f32 %v2130, %v2139
      %v2142 = vadd.f32 %v2131, %v2140
      %2143 = vrot.lane.b32.xlu0 %v1998, 2
      %v2144 = vpop.permute.xlu0 %2143
      %2145 = vrot.lane.b32.xlu0 %v1999, 2
      %v2146 = vpop.permute.xlu0 %2145
      %s2147 = scalar_lea.vmem %s4, 1200
      %v2148 = vld [vmem:[%s2147] sm:$0xff]
      %v2149 = vld [vmem:[%s2147 + $0x8] sm:$0xff]
      %v2150 = vmul.f32 %v2144, %v2148
      %v2151 = vmul.f32 %v2146, %v2149
      %v2152 = vadd.f32 %v2141, %v2150
      %v2153 = vadd.f32 %v2142, %v2151
      %2154 = vrot.lane.b32.xlu0 %v1998, 1
      %v2155 = vpop.permute.xlu0 %2154
      %2156 = vrot.lane.b32.xlu0 %v1999, 1
      %v2157 = vpop.permute.xlu0 %2156
      %s2158 = scalar_lea.vmem %s4, 1216
      %v2159 = vld [vmem:[%s2158] sm:$0xff]
      %v2160 = vld [vmem:[%s2158 + $0x8] sm:$0xff]
      %v2161 = vmul.f32 %v2155, %v2159
      %v2162 = vmul.f32 %v2157, %v2160
      %v2163 = vadd.f32 %v2152, %v2161
      %v2164 = vadd.f32 %v2153, %v2162
      %s2165 = scalar_lea.vmem %s4, 1232
      %v2166 = vld [vmem:[%s2165] sm:$0xff]
      %v2167 = vld [vmem:[%s2165 + $0x8] sm:$0xff]
      %v2168 = vmul.f32 %v1998, %v2166
      %v2169 = vmul.f32 %v1999, %v2167
      %v2170 = vadd.f32 %v2163, %v2168
      %v2171 = vadd.f32 %v2164, %v2169
      %2172 = vrot.lane.b32.xlu0 %v1998, 127
      %v2173 = vpop.permute.xlu0 %2172
      %2174 = vrot.lane.b32.xlu0 %v1999, 127
      %v2175 = vpop.permute.xlu0 %2174
      %s2176 = scalar_lea.vmem %s4, 1248
      %v2177 = vld [vmem:[%s2176] sm:$0xff]
      %v2178 = vld [vmem:[%s2176 + $0x8] sm:$0xff]
      %v2179 = vmul.f32 %v2173, %v2177
      %v2180 = vmul.f32 %v2175, %v2178
      %v2181 = vadd.f32 %v2170, %v2179
      %v2182 = vadd.f32 %v2171, %v2180
      %2183 = vrot.lane.b32.xlu0 %v1998, 126
      %v2184 = vpop.permute.xlu0 %2183
      %2185 = vrot.lane.b32.xlu0 %v1999, 126
      %v2186 = vpop.permute.xlu0 %2185
      %s2187 = scalar_lea.vmem %s4, 1264
      %v2188 = vld [vmem:[%s2187] sm:$0xff]
      %v2189 = vld [vmem:[%s2187 + $0x8] sm:$0xff]
      %v2190 = vmul.f32 %v2184, %v2188
      %v2191 = vmul.f32 %v2186, %v2189
      %v2192 = vadd.f32 %v2181, %v2190
      %v2193 = vadd.f32 %v2182, %v2191
      %2194 = vrot.lane.b32.xlu0 %v1998, 125
      %v2195 = vpop.permute.xlu0 %2194
      %2196 = vrot.lane.b32.xlu0 %v1999, 125
      %v2197 = vpop.permute.xlu0 %2196
      %s2198 = scalar_lea.vmem %s4, 1280
      %v2199 = vld [vmem:[%s2198] sm:$0xff]
      %v2200 = vld [vmem:[%s2198 + $0x8] sm:$0xff]
      %v2201 = vmul.f32 %v2195, %v2199
      %v2202 = vmul.f32 %v2197, %v2200
      %v2203 = vadd.f32 %v2192, %v2201
      %v2204 = vadd.f32 %v2193, %v2202
      %2205 = vrot.lane.b32.xlu0 %v1998, 124
      %v2206 = vpop.permute.xlu0 %2205
      %2207 = vrot.lane.b32.xlu0 %v1999, 124
      %v2208 = vpop.permute.xlu0 %2207
      %s2209 = scalar_lea.vmem %s4, 1296
      %v2210 = vld [vmem:[%s2209] sm:$0xff]
      %v2211 = vld [vmem:[%s2209 + $0x8] sm:$0xff]
      %v2212 = vmul.f32 %v2206, %v2210
      %v2213 = vmul.f32 %v2208, %v2211
      %v2214 = vadd.f32 %v2203, %v2212
      %v2215 = vadd.f32 %v2204, %v2213
      %2216 = vrot.lane.b32.xlu0 %v1998, 123
      %v2217 = vpop.permute.xlu0 %2216
      %2218 = vrot.lane.b32.xlu0 %v1999, 123
      %v2219 = vpop.permute.xlu0 %2218
      %s2220 = scalar_lea.vmem %s4, 1312
      %v2221 = vld [vmem:[%s2220] sm:$0xff]
      %v2222 = vld [vmem:[%s2220 + $0x8] sm:$0xff]
      %v2223 = vmul.f32 %v2217, %v2221
      %v2224 = vmul.f32 %v2219, %v2222
      %v2225 = vadd.f32 %v2214, %v2223
      %v2226 = vadd.f32 %v2215, %v2224
      %2227 = vrot.lane.b32.xlu0 %v1998, 122
      %v2228 = vpop.permute.xlu0 %2227
      %2229 = vrot.lane.b32.xlu0 %v1999, 122
      %v2230 = vpop.permute.xlu0 %2229
      %s2231 = scalar_lea.vmem %s4, 1328
      %v2232 = vld [vmem:[%s2231] sm:$0xff]
      %v2233 = vld [vmem:[%s2231 + $0x8] sm:$0xff]
      %v2234 = vmul.f32 %v2228, %v2232
      %v2235 = vmul.f32 %v2230, %v2233
      %v2236 = vadd.f32 %v2225, %v2234
      %v2237 = vadd.f32 %v2226, %v2235
      %2238 = vrot.lane.b32.xlu0 %v1998, 121
      %v2239 = vpop.permute.xlu0 %2238
      %2240 = vrot.lane.b32.xlu0 %v1999, 121
      %v2241 = vpop.permute.xlu0 %2240
      %s2242 = scalar_lea.vmem %s4, 1344
      %v2243 = vld [vmem:[%s2242] sm:$0xff]
      %v2244 = vld [vmem:[%s2242 + $0x8] sm:$0xff]
      %v2245 = vmul.f32 %v2239, %v2243
      %v2246 = vmul.f32 %v2241, %v2244
      %v2247 = vadd.f32 %v2236, %v2245
      %v2248 = vadd.f32 %v2237, %v2246
      %2249 = vrot.lane.b32.xlu0 %v1998, 120
      %v2250 = vpop.permute.xlu0 %2249
      %2251 = vrot.lane.b32.xlu0 %v1999, 120
      %v2252 = vpop.permute.xlu0 %2251
      %s2253 = scalar_lea.vmem %s4, 1360
      %v2254 = vld [vmem:[%s2253] sm:$0xff]
      %v2255 = vld [vmem:[%s2253 + $0x8] sm:$0xff]
      %v2256 = vmul.f32 %v2250, %v2254
      %v2257 = vmul.f32 %v2252, %v2255
      %v2258 = vadd.f32 %v2247, %v2256
      %v2259 = vadd.f32 %v2248, %v2257
      %2260 = vrot.lane.b32.xlu0 %v1998, 119
      %v2261 = vpop.permute.xlu0 %2260
      %2262 = vrot.lane.b32.xlu0 %v1999, 119
      %v2263 = vpop.permute.xlu0 %2262
      %s2264 = scalar_lea.vmem %s4, 1376
      %v2265 = vld [vmem:[%s2264] sm:$0xff]
      %v2266 = vld [vmem:[%s2264 + $0x8] sm:$0xff]
      %v2267 = vmul.f32 %v2261, %v2265
      %v2268 = vmul.f32 %v2263, %v2266
      %v2269 = vadd.f32 %v2258, %v2267
      %v2270 = vadd.f32 %v2259, %v2268
      %2271 = vrot.lane.b32.xlu0 %v1998, 118
      %v2272 = vpop.permute.xlu0 %2271
      %2273 = vrot.lane.b32.xlu0 %v1999, 118
      %v2274 = vpop.permute.xlu0 %2273
      %s2275 = scalar_lea.vmem %s4, 1392
      %v2276 = vld [vmem:[%s2275] sm:$0xff]
      %v2277 = vld [vmem:[%s2275 + $0x8] sm:$0xff]
      %v2278 = vmul.f32 %v2272, %v2276
      %v2279 = vmul.f32 %v2274, %v2277
      %v2280 = vadd.f32 %v2269, %v2278
      %v2281 = vadd.f32 %v2270, %v2279
      %2282 = vrot.lane.b32.xlu0 %v1998, 117
      %v2283 = vpop.permute.xlu0 %2282
      %2284 = vrot.lane.b32.xlu0 %v1999, 117
      %v2285 = vpop.permute.xlu0 %2284
      %s2286 = scalar_lea.vmem %s4, 1408
      %v2287 = vld [vmem:[%s2286] sm:$0xff]
      %v2288 = vld [vmem:[%s2286 + $0x8] sm:$0xff]
      %v2289 = vmul.f32 %v2283, %v2287
      %v2290 = vmul.f32 %v2285, %v2288
      %v2291 = vadd.f32 %v2280, %v2289
      %v2292 = vadd.f32 %v2281, %v2290
      %2293 = vrot.lane.b32.xlu0 %v1998, 116
      %v2294 = vpop.permute.xlu0 %2293
      %2295 = vrot.lane.b32.xlu0 %v1999, 116
      %v2296 = vpop.permute.xlu0 %2295
      %s2297 = scalar_lea.vmem %s4, 1424
      %v2298 = vld [vmem:[%s2297] sm:$0xff]
      %v2299 = vld [vmem:[%s2297 + $0x8] sm:$0xff]
      %v2300 = vmul.f32 %v2294, %v2298
      %v2301 = vmul.f32 %v2296, %v2299
      %v2302 = vadd.f32 %v2291, %v2300
      %v2303 = vadd.f32 %v2292, %v2301
      %2304 = vrot.lane.b32.xlu0 %v1998, 115
      %v2305 = vpop.permute.xlu0 %2304
      %2306 = vrot.lane.b32.xlu0 %v1999, 115
      %v2307 = vpop.permute.xlu0 %2306
      %s2308 = scalar_lea.vmem %s4, 1440
      %v2309 = vld [vmem:[%s2308] sm:$0xff]
      %v2310 = vld [vmem:[%s2308 + $0x8] sm:$0xff]
      %v2311 = vmul.f32 %v2305, %v2309
      %v2312 = vmul.f32 %v2307, %v2310
      %v2313 = vadd.f32 %v2302, %v2311
      %v2314 = vadd.f32 %v2303, %v2312
      %2315 = vrot.lane.b32.xlu0 %v1998, 114
      %v2316 = vpop.permute.xlu0 %2315
      %2317 = vrot.lane.b32.xlu0 %v1999, 114
      %v2318 = vpop.permute.xlu0 %2317
      %s2319 = scalar_lea.vmem %s4, 1456
      %v2320 = vld [vmem:[%s2319] sm:$0xff]
      %v2321 = vld [vmem:[%s2319 + $0x8] sm:$0xff]
      %v2322 = vmul.f32 %v2316, %v2320
      %v2323 = vmul.f32 %v2318, %v2321
      %v2324 = vadd.f32 %v2313, %v2322
      %v2325 = vadd.f32 %v2314, %v2323
      %2326 = vrot.lane.b32.xlu0 %v1998, 113
      %v2327 = vpop.permute.xlu0 %2326
      %2328 = vrot.lane.b32.xlu0 %v1999, 113
      %v2329 = vpop.permute.xlu0 %2328
      %s2330 = scalar_lea.vmem %s4, 1472
      %v2331 = vld [vmem:[%s2330] sm:$0xff]
      %v2332 = vld [vmem:[%s2330 + $0x8] sm:$0xff]
      %v2333 = vmul.f32 %v2327, %v2331
      %v2334 = vmul.f32 %v2329, %v2332
      %v2335 = vadd.f32 %v2324, %v2333
      %v2336 = vadd.f32 %v2325, %v2334
      %v2337 = vmul.f32 %v2335, %v285
      %v2338 = vmul.f32 %v2336, %v286
      %v2339 = vadd.f32 %v2337, %v287
      %v2340 = vadd.f32 %v2338, %v288
      %v2341 = vadd.f32 %v2339, %v289
      %v2342 = vadd.f32 %v2340, %v290
      %2343 = vst [vmem:[%s278] sm:$0xff] %v2341
      %2344 = vst [vmem:[%s278 + $0x8] sm:$0xff] %v2342
      %p2345 = scmp.lt.s32.totalorder %s18, 1
      %s2346 = scalar_select %p2345, %s18, 1
      %s2347 = smul.addr %s2346, 2
      %s2348 = smul.addr %s2347, 8
      %s2349 = scalar_lea.vmem %s7, %s2348
      // Predicated region
      $region49: #{layer2_forward.1} parent=47 // pred_check
        %p2350 = pneg %p188
      $region50: #{layer2_forward.1} parent=47 // pred_check_branch
        %2352 = sbr.rel (%p2350) target = $region52
      $region51: #{layer2_forward.1} parent=47 // pred_region
        _
      $region52: #{layer2_forward.1} parent=47 // pred_fallthru
        _
    $region48: #{layer2_forward.1} parent=5 // pred_fallthru
      _
    %p2353 = scmp.le.s32.totalorder 2, %s13
    // Predicated region
    $region53: #{layer2_forward.1} parent=5 // pred_check
      %p2354 = pneg %p2353
    $region54: #{layer2_forward.1} parent=5 // pred_check_branch
      %2356 = sbr.rel (%p2354) target = $region56
    $region55: #{layer2_forward.1} parent=5 // pred_region
      %s2357 = ssub.s32 %s13, 2
      // Predicated region
      $region57: #{layer2_forward.1} parent=55 // pred_check
        %p2358 = pneg %p194
      $region58: #{layer2_forward.1} parent=55 // pred_check_branch
        %2360 = sbr.rel (%p2358) target = $region60
      $region59: #{layer2_forward.1} parent=55 // pred_region
        %p2361 = scmp.lt.s32.totalorder %s19, 1
        %s2362 = scalar_select %p2361, %s19, 1
        %s2363 = smul.addr %s2362, 2
        %s2364 = smul.addr %s2363, 8
        %s2365 = scalar_lea.vmem %s7, %s2364
      $region60: #{layer2_forward.1} parent=55 // pred_fallthru
        _
    $region56: #{layer2_forward.1} parent=5 // pred_fallthru
      _
  $region6: #{layer2_forward.1} parent=0 // loop_footer
    %s17 = sadd.s32 1, %s13
  $region7: #{layer2_forward.1} parent=0 // loop_footer_branch
    %12 = sbr.rel target = $region3
  $region8: #{layer2_forward.1} parent=0 // loop_exit
    _

</llo_original>
